<compile_context>
chip_gen: v6e
topology: v6e:2x2x1
jax: 0.10.0
libtpu: 0.0.40
codegen_flags: <defaults>
</compile_context>

<pallas_src>
import functools

import jax
import jax.numpy as jnp
from jax.experimental import pallas as pl
from jax.experimental.pallas import tpu as pltpu


# ----------------------------------------------------------------------------
# Fused Pallas kernel: embedding gather + all GRU layers + output Linear.
# ----------------------------------------------------------------------------
def _fused_gru_kernel(*refs, n_layers, P, T, B):
    """refs = (tokens[SMEM], embed,
               [W_ih_pad, W_hh_pad, b_fold_pad, b_hn_pad] * n_layers,
               W_out_pad, b_out, logits_out)."""
    tokens_ref = refs[0]
    embed_ref = refs[1]
    layer_refs = refs[2:2 + 4 * n_layers]
    wout_ref = refs[2 + 4 * n_layers]
    bout_ref = refs[3 + 4 * n_layers]
    logits_ref = refs[4 + 4 * n_layers]

    # ---- In-kernel embedding gather (time-major: row index = t*B + b). ----
    rows = []
    for t in range(T):
        for b in range(B):
            tok = tokens_ref[b, t]                       # scalar from SMEM
            rows.append(embed_ref[pl.ds(tok, 1), :])     # (1, E) dynamic row
    src = jnp.concatenate(rows, axis=0)                  # (T*B, E) f32

    h = None
    for layer in range(n_layers):
        wih_ref, whh_ref, bif_ref, bhn_ref = layer_refs[4 * layer: 4 * layer + 4]
        last = layer == n_layers - 1

        # Hoisted input projection for ALL timesteps (one big MXU matmul).
        # b_fold already contains b_ih plus (b_hr, b_hz) for the r/z gates.
        gi_all = (jnp.dot(src, wih_ref[...], preferred_element_type=jnp.float32)
                  + bif_ref[...]).reshape(T, B, 3 * P)   # (T, B, 3P)

        whh = whh_ref[...]                               # (P, 3P), loaded once
        bhn = jnp.broadcast_to(bhn_ref[...], (B, P))     # hoisted broadcast

        h = jnp.zeros((B, P), jnp.float32)               # h_0 = 0 (padded lanes 0)
        hs = []
        for t in range(T):                               # fully unrolled (T static)
            gi = gi_all[t]                               # (B, 3P), leading-axis index
            gh = jnp.dot(h, whh, preferred_element_type=jnp.float32)

            # Lane-aligned gate blocks (each gate owns a 128-lane slab).
            r = jax.nn.sigmoid(gi[:, 0:P] + gh[:, 0:P])
            z = jax.nn.sigmoid(gi[:, P:2 * P] + gh[:, P:2 * P])
            n = jnp.tanh(gi[:, 2 * P:3 * P] + r * (gh[:, 2 * P:3 * P] + bhn))
            h = (1.0 - z) * n + z * h

            if not last:                                 # keep in vregs, no VMEM scratch
                hs.append(h)

        if not last:
            src = jnp.stack(hs, axis=0).reshape(T * B, P)   # next layer's input

    # Fused output Linear on the last timestep of the last layer.
    # (Dropout in the PyTorch forward discards its result -> no-op.)
    logits_ref[...] = (jnp.dot(h, wout_ref[...], preferred_element_type=jnp.float32)
                       + bout_ref[...]).astype(logits_ref.dtype)


# ----------------------------------------------------------------------------
# Wrapper
# ----------------------------------------------------------------------------
def gru_forward(tokens, packed):
    """tokens: (B, T) int32 token ids -> logits (B, n_classes)."""
    B, T = tokens.shape
    layers = packed["layers"]
    n_layers = len(layers)
    P = layers[0][1].shape[0]                # W_hh_pad: (P, 3P)
    C = packed["w_out_pad"].shape[1]

    flat_inputs = [tokens.astype(jnp.int32), packed["embed"]]
    for l in layers:
        flat_inputs += list(l)
    flat_inputs += [packed["w_out_pad"], packed["b_out"]]

    kernel = functools.partial(_fused_gru_kernel, n_layers=n_layers, P=P, T=T, B=B)
    smem_spec = pl.BlockSpec(memory_space=pltpu.MemorySpace.SMEM)
    vmem_spec = pl.BlockSpec(memory_space=pltpu.MemorySpace.VMEM)

    return pl.pallas_call(
        kernel,
        out_shape=jax.ShapeDtypeStruct((B, C), jnp.float32),
        in_specs=[smem_spec] + [vmem_spec] * (len(flat_inputs) - 1),
        out_specs=vmem_spec,
    )(*flat_inputs)


# ----------------------------------------------------------------------------
# Pack canonical (PyTorch-layout) params into the lane-aligned kernel layout.
# Each gate's H columns are placed at the start of its own 128-lane block.
# ----------------------------------------------------------------------------
def pack_params(params, lane=128):
    H = params["gru_layers"][0][1].shape[1]            # W_hh: (3H, H)
    P = ((H + lane - 1) // lane) * lane
    P = max(P, lane)

    def pad_gate_cols(m):                               # (..., 3H) -> (..., 3P)
        parts = []
        for g in range(3):
            blk = m[..., g * H:(g + 1) * H]
            pad = [(0, 0)] * (m.ndim - 1) + [(0, P - H)]
            parts.append(jnp.pad(blk, pad))
        return jnp.concatenate(parts, axis=-1)

    layers = []
    for li, (w_ih, w_hh, b_ih, b_hh) in enumerate(params["gru_layers"]):
        in_dim = w_ih.shape[1]
        in_pad = in_dim if li == 0 else P               # layer>0 input is padded h
        wih_pad = jnp.pad(pad_gate_cols(w_ih.T), ((0, in_pad - in_dim), (0, 0)))
        whh_pad = jnp.pad(pad_gate_cols(w_hh.T), ((0, P - H), (0, 0)))
        # Fold b_hh into the hoisted projection for r/z gates; keep b_hn separate
        # (it must stay inside r * (W_hn h + b_hn)).
        b_fold = b_ih + jnp.concatenate([b_hh[:2 * H],
                                         jnp.zeros((H,), b_hh.dtype)])
        bif_pad = pad_gate_cols(b_fold.reshape(1, 3 * H))        # (1, 3P)
        bhn_pad = jnp.pad(b_hh[2 * H:3 * H], [(0, P - H)]).reshape(1, P)
        layers.append((wih_pad, whh_pad, bif_pad, bhn_pad))

    w_out_pad = jnp.pad(params["w_out"].T, ((0, P - H), (0, 0)))  # (P, C)
    b_out = params["b_out"].reshape(1, -1)                        # (1, C)

    return {"embed": params["embed"], "layers": layers,
            "w_out_pad": w_out_pad, "b_out": b_out}


# ----------------------------------------------------------------------------
# Pure-JAX reference (exact PyTorch GRU math) for a sanity check
# ----------------------------------------------------------------------------
def gru_forward_ref(tokens, params):
    x = params["embed"][tokens]                       # (B, T, E)
    B, T, _ = x.shape
    for (w_ih, w_hh, b_ih, b_hh) in params["gru_layers"]:
        H = w_hh.shape[1]
        h = jnp.zeros((B, H), jnp.float32)
        outs = []
        for t in range(T):
            gi = x[:, t, :] @ w_ih.T + b_ih
            gh = h @ w_hh.T + b_hh
            r = jax.nn.sigmoid(gi[:, :H] + gh[:, :H])
            z = jax.nn.sigmoid(gi[:, H:2 * H] + gh[:, H:2 * H])
            n = jnp.tanh(gi[:, 2 * H:] + r * gh[:, 2 * H:])
            h = (1.0 - z) * n + z * h
            outs.append(h)
        x = jnp.stack(outs, axis=1)
    h_t = x[:, -1, :]
    return h_t @ params["w_out"].T + params["b_out"]


# ----------------------------------------------------------------------------
# Deterministic parameter init (shapes match nn.Embedding / nn.GRU / nn.Linear)
# ----------------------------------------------------------------------------
def init_params(key, n_layers, hidden_dim, n_vocab, embed_dim, n_classes):
    keys = jax.random.split(key, 3 + 4 * n_layers)
    ki = iter(range(len(keys)))

    scale = 0.1
    embed = scale * jax.random.normal(keys[next(ki)], (n_vocab, embed_dim),
                                      dtype=jnp.float32)

    gru_layers = []
    for layer in range(n_layers):
        in_dim = embed_dim if layer == 0 else hidden_dim
        w_ih = scale * jax.random.normal(keys[next(ki)], (3 * hidden_dim, in_dim),
                                         dtype=jnp.float32)
        w_hh = scale * jax.random.normal(keys[next(ki)], (3 * hidden_dim, hidden_dim),
                                         dtype=jnp.float32)
        b_ih = scale * jax.random.normal(keys[next(ki)], (3 * hidden_dim,),
                                         dtype=jnp.float32)
        b_hh = scale * jax.random.normal(keys[next(ki)], (3 * hidden_dim,),
                                         dtype=jnp.float32)
        gru_layers.append((w_ih, w_hh, b_ih, b_hh))

    w_out = scale * jax.random.normal(keys[next(ki)], (n_classes, hidden_dim),
                                      dtype=jnp.float32)
    b_out = scale * jax.random.normal(keys[next(ki)], (n_classes,),
                                      dtype=jnp.float32)

    return {"embed": embed, "gru_layers": gru_layers, "w_out": w_out,
            "b_out": b_out}


# ----------------------------------------------------------------------------
# Main
# ----------------------------------------------------------------------------
if __name__ == "__main__":
    n_layers = 2
    hidden_dim = 32
    n_vocab = 100
    embed_dim = 32
    n_classes = 2
    batch = 2
    seq_len = 8

    key = jax.random.PRNGKey(0)
    k_param, k_tok = jax.random.split(key)

    params = init_params(k_param, n_layers, hidden_dim, n_vocab, embed_dim,
                         n_classes)
    packed = pack_params(params)                    # one-time repack, outside jit
    tokens = jax.random.randint(k_tok, (batch, seq_len), 0, n_vocab,
                                dtype=jnp.int32)

    logits = jax.jit(gru_forward)(tokens, packed)
    jax.block_until_ready(logits)

    assert logits.shape == (batch, n_classes)
    assert logits.dtype == jnp.float32

    ref = gru_forward_ref(tokens, params)
    assert jnp.allclose(logits, ref, atol=1e-3, rtol=1e-3), (logits, ref)

    print("KERNEL_OK")
</pallas_src>

<mosaic_0001>
module attributes {stable_mosaic.version = 11 : i64} {
  func.func @_fused_gru_kernel(%arg0: memref<2x8xi32, #tpu.memory_space<smem>>, %arg1: memref<100x32xf32, #tpu.memory_space<vmem>>, %arg2: memref<32x384xf32, #tpu.memory_space<vmem>>, %arg3: memref<128x384xf32, #tpu.memory_space<vmem>>, %arg4: memref<1x384xf32, #tpu.memory_space<vmem>>, %arg5: memref<1x128xf32, #tpu.memory_space<vmem>>, %arg6: memref<128x384xf32, #tpu.memory_space<vmem>>, %arg7: memref<128x384xf32, #tpu.memory_space<vmem>>, %arg8: memref<1x384xf32, #tpu.memory_space<vmem>>, %arg9: memref<1x128xf32, #tpu.memory_space<vmem>>, %arg10: memref<128x2xf32, #tpu.memory_space<vmem>>, %arg11: memref<1x2xf32, #tpu.memory_space<vmem>>, %arg12: memref<2x2xf32, #tpu.memory_space<vmem>>) attributes {dimension_semantics = [], scalar_prefetch = 0 : i64, scratch_operands = 0 : i64, tpu.core_type = #tpu.core_type<tc>} {
    %c0 = arith.constant 0 : index
    %c0_0 = arith.constant 0 : index
    %0 = memref.load %arg0[%c0, %c0_0] : memref<2x8xi32, #tpu.memory_space<smem>>
    %1 = arith.index_cast %0 : i32 to index
    %c0_1 = arith.constant 0 : index
    %2 = vector.load %arg1[%1, %c0_1] : memref<100x32xf32, #tpu.memory_space<vmem>>, vector<1x32xf32>
    %c1 = arith.constant 1 : index
    %c0_2 = arith.constant 0 : index
    %3 = memref.load %arg0[%c1, %c0_2] : memref<2x8xi32, #tpu.memory_space<smem>>
    %4 = arith.index_cast %3 : i32 to index
    %c0_3 = arith.constant 0 : index
    %5 = vector.load %arg1[%4, %c0_3] : memref<100x32xf32, #tpu.memory_space<vmem>>, vector<1x32xf32>
    %c0_4 = arith.constant 0 : index
    %c1_5 = arith.constant 1 : index
    %6 = memref.load %arg0[%c0_4, %c1_5] : memref<2x8xi32, #tpu.memory_space<smem>>
    %7 = arith.index_cast %6 : i32 to index
    %c0_6 = arith.constant 0 : index
    %8 = vector.load %arg1[%7, %c0_6] : memref<100x32xf32, #tpu.memory_space<vmem>>, vector<1x32xf32>
    %c1_7 = arith.constant 1 : index
    %c1_8 = arith.constant 1 : index
    %9 = memref.load %arg0[%c1_7, %c1_8] : memref<2x8xi32, #tpu.memory_space<smem>>
    %10 = arith.index_cast %9 : i32 to index
    %c0_9 = arith.constant 0 : index
    %11 = vector.load %arg1[%10, %c0_9] : memref<100x32xf32, #tpu.memory_space<vmem>>, vector<1x32xf32>
    %c0_10 = arith.constant 0 : index
    %c2 = arith.constant 2 : index
    %12 = memref.load %arg0[%c0_10, %c2] : memref<2x8xi32, #tpu.memory_space<smem>>
    %13 = arith.index_cast %12 : i32 to index
    %c0_11 = arith.constant 0 : index
    %14 = vector.load %arg1[%13, %c0_11] : memref<100x32xf32, #tpu.memory_space<vmem>>, vector<1x32xf32>
    %c1_12 = arith.constant 1 : index
    %c2_13 = arith.constant 2 : index
    %15 = memref.load %arg0[%c1_12, %c2_13] : memref<2x8xi32, #tpu.memory_space<smem>>
    %16 = arith.index_cast %15 : i32 to index
    %c0_14 = arith.constant 0 : index
    %17 = vector.load %arg1[%16, %c0_14] : memref<100x32xf32, #tpu.memory_space<vmem>>, vector<1x32xf32>
    %c0_15 = arith.constant 0 : index
    %c3 = arith.constant 3 : index
    %18 = memref.load %arg0[%c0_15, %c3] : memref<2x8xi32, #tpu.memory_space<smem>>
    %19 = arith.index_cast %18 : i32 to index
    %c0_16 = arith.constant 0 : index
    %20 = vector.load %arg1[%19, %c0_16] : memref<100x32xf32, #tpu.memory_space<vmem>>, vector<1x32xf32>
    %c1_17 = arith.constant 1 : index
    %c3_18 = arith.constant 3 : index
    %21 = memref.load %arg0[%c1_17, %c3_18] : memref<2x8xi32, #tpu.memory_space<smem>>
    %22 = arith.index_cast %21 : i32 to index
    %c0_19 = arith.constant 0 : index
    %23 = vector.load %arg1[%22, %c0_19] : memref<100x32xf32, #tpu.memory_space<vmem>>, vector<1x32xf32>
    %c0_20 = arith.constant 0 : index
    %c4 = arith.constant 4 : index
    %24 = memref.load %arg0[%c0_20, %c4] : memref<2x8xi32, #tpu.memory_space<smem>>
    %25 = arith.index_cast %24 : i32 to index
    %c0_21 = arith.constant 0 : index
    %26 = vector.load %arg1[%25, %c0_21] : memref<100x32xf32, #tpu.memory_space<vmem>>, vector<1x32xf32>
    %c1_22 = arith.constant 1 : index
    %c4_23 = arith.constant 4 : index
    %27 = memref.load %arg0[%c1_22, %c4_23] : memref<2x8xi32, #tpu.memory_space<smem>>
    %28 = arith.index_cast %27 : i32 to index
    %c0_24 = arith.constant 0 : index
    %29 = vector.load %arg1[%28, %c0_24] : memref<100x32xf32, #tpu.memory_space<vmem>>, vector<1x32xf32>
    %c0_25 = arith.constant 0 : index
    %c5 = arith.constant 5 : index
    %30 = memref.load %arg0[%c0_25, %c5] : memref<2x8xi32, #tpu.memory_space<smem>>
    %31 = arith.index_cast %30 : i32 to index
    %c0_26 = arith.constant 0 : index
    %32 = vector.load %arg1[%31, %c0_26] : memref<100x32xf32, #tpu.memory_space<vmem>>, vector<1x32xf32>
    %c1_27 = arith.constant 1 : index
    %c5_28 = arith.constant 5 : index
    %33 = memref.load %arg0[%c1_27, %c5_28] : memref<2x8xi32, #tpu.memory_space<smem>>
    %34 = arith.index_cast %33 : i32 to index
    %c0_29 = arith.constant 0 : index
    %35 = vector.load %arg1[%34, %c0_29] : memref<100x32xf32, #tpu.memory_space<vmem>>, vector<1x32xf32>
    %c0_30 = arith.constant 0 : index
    %c6 = arith.constant 6 : index
    %36 = memref.load %arg0[%c0_30, %c6] : memref<2x8xi32, #tpu.memory_space<smem>>
    %37 = arith.index_cast %36 : i32 to index
    %c0_31 = arith.constant 0 : index
    %38 = vector.load %arg1[%37, %c0_31] : memref<100x32xf32, #tpu.memory_space<vmem>>, vector<1x32xf32>
    %c1_32 = arith.constant 1 : index
    %c6_33 = arith.constant 6 : index
    %39 = memref.load %arg0[%c1_32, %c6_33] : memref<2x8xi32, #tpu.memory_space<smem>>
    %40 = arith.index_cast %39 : i32 to index
    %c0_34 = arith.constant 0 : index
    %41 = vector.load %arg1[%40, %c0_34] : memref<100x32xf32, #tpu.memory_space<vmem>>, vector<1x32xf32>
    %c0_35 = arith.constant 0 : index
    %c7 = arith.constant 7 : index
    %42 = memref.load %arg0[%c0_35, %c7] : memref<2x8xi32, #tpu.memory_space<smem>>
    %43 = arith.index_cast %42 : i32 to index
    %c0_36 = arith.constant 0 : index
    %44 = vector.load %arg1[%43, %c0_36] : memref<100x32xf32, #tpu.memory_space<vmem>>, vector<1x32xf32>
    %c1_37 = arith.constant 1 : index
    %c7_38 = arith.constant 7 : index
    %45 = memref.load %arg0[%c1_37, %c7_38] : memref<2x8xi32, #tpu.memory_space<smem>>
    %46 = arith.index_cast %45 : i32 to index
    %c0_39 = arith.constant 0 : index
    %47 = vector.load %arg1[%46, %c0_39] : memref<100x32xf32, #tpu.memory_space<vmem>>, vector<1x32xf32>
    %48 = tpu.concatenate %2, %5, %8, %11, %14, %17, %20, %23, %26, %29, %32, %35, %38, %41, %44, %47 in 0 : vector<1x32xf32>, vector<1x32xf32>, vector<1x32xf32>, vector<1x32xf32>, vector<1x32xf32>, vector<1x32xf32>, vector<1x32xf32>, vector<1x32xf32>, vector<1x32xf32>, vector<1x32xf32>, vector<1x32xf32>, vector<1x32xf32>, vector<1x32xf32>, vector<1x32xf32>, vector<1x32xf32>, vector<1x32xf32> -> vector<16x32xf32>
    %c0_40 = arith.constant 0 : index
    %c0_41 = arith.constant 0 : index
    %49 = vector.load %arg2[%c0_40, %c0_41] : memref<32x384xf32, #tpu.memory_space<vmem>>, vector<32x384xf32>
    %cst = arith.constant dense<0.000000e+00> : vector<16x384xf32>
    %50 = tpu.matmul %48, %49, %cst {dimension_numbers = #tpu.dot_dimension_numbers<[1], [0], [0], [1], [0, 0, 1, 1], [], []>} : vector<16x32xf32>, vector<32x384xf32>, vector<16x384xf32> -> vector<16x384xf32>
    %c0_42 = arith.constant 0 : index
    %c0_43 = arith.constant 0 : index
    %51 = vector.load %arg4[%c0_42, %c0_43] : memref<1x384xf32, #tpu.memory_space<vmem>>, vector<1x384xf32>
    %52 = vector.broadcast %51 : vector<1x384xf32> to vector<16x384xf32>
    %53 = arith.addf %50, %52 : vector<16x384xf32>
    %54 = vector.shape_cast %53 : vector<16x384xf32> to vector<8x2x384xf32>
    %c0_44 = arith.constant 0 : index
    %c0_45 = arith.constant 0 : index
    %55 = vector.load %arg3[%c0_44, %c0_45] : memref<128x384xf32, #tpu.memory_space<vmem>>, vector<128x384xf32>
    %c0_46 = arith.constant 0 : index
    %c0_47 = arith.constant 0 : index
    %56 = vector.load %arg5[%c0_46, %c0_47] : memref<1x128xf32, #tpu.memory_space<vmem>>, vector<1x128xf32>
    %57 = vector.shape_cast %56 : vector<1x128xf32> to vector<1x128xf32>
    %58 = vector.broadcast %57 : vector<1x128xf32> to vector<2x128xf32>
    %cst_48 = arith.constant 0.000000e+00 : f32
    %59 = vector.broadcast %cst_48 : f32 to vector<2x128xf32>
    %60 = vector.extract_strided_slice %54 {offsets = [0, 0, 0], sizes = [1, 2, 384], strides = [1, 1, 1]} : vector<8x2x384xf32> to vector<1x2x384xf32>
    %61 = vector.shape_cast %60 : vector<1x2x384xf32> to vector<2x384xf32>
    %cst_49 = arith.constant dense<0.000000e+00> : vector<2x384xf32>
    %62 = tpu.matmul %59, %55, %cst_49 {dimension_numbers = #tpu.dot_dimension_numbers<[1], [0], [0], [1], [0, 0, 1, 1], [], []>} : vector<2x128xf32>, vector<128x384xf32>, vector<2x384xf32> -> vector<2x384xf32>
    %63 = vector.extract_strided_slice %61 {offsets = [0, 0], sizes = [2, 128], strides = [1, 1]} : vector<2x384xf32> to vector<2x128xf32>
    %64 = vector.extract_strided_slice %62 {offsets = [0, 0], sizes = [2, 128], strides = [1, 1]} : vector<2x384xf32> to vector<2x128xf32>
    %65 = arith.addf %63, %64 : vector<2x128xf32>
    %66 = arith.negf %65 : vector<2x128xf32>
    %67 = math.exp %66 : vector<2x128xf32>
    %cst_50 = arith.constant 1.000000e+00 : f32
    %68 = vector.broadcast %cst_50 : f32 to vector<2x128xf32>
    %69 = arith.addf %68, %67 : vector<2x128xf32>
    %70 = arith.divf %68, %69 : vector<2x128xf32>
    %71 = vector.extract_strided_slice %61 {offsets = [0, 128], sizes = [2, 128], strides = [1, 1]} : vector<2x384xf32> to vector<2x128xf32>
    %72 = vector.extract_strided_slice %62 {offsets = [0, 128], sizes = [2, 128], strides = [1, 1]} : vector<2x384xf32> to vector<2x128xf32>
    %73 = arith.addf %71, %72 : vector<2x128xf32>
    %74 = arith.negf %73 : vector<2x128xf32>
    %75 = math.exp %74 : vector<2x128xf32>
    %cst_51 = arith.constant 1.000000e+00 : f32
    %76 = vector.broadcast %cst_51 : f32 to vector<2x128xf32>
    %77 = arith.addf %76, %75 : vector<2x128xf32>
    %78 = arith.divf %76, %77 : vector<2x128xf32>
    %79 = vector.extract_strided_slice %61 {offsets = [0, 256], sizes = [2, 128], strides = [1, 1]} : vector<2x384xf32> to vector<2x128xf32>
    %80 = vector.extract_strided_slice %62 {offsets = [0, 256], sizes = [2, 128], strides = [1, 1]} : vector<2x384xf32> to vector<2x128xf32>
    %81 = arith.addf %80, %58 : vector<2x128xf32>
    %82 = arith.mulf %70, %81 : vector<2x128xf32>
    %83 = arith.addf %79, %82 : vector<2x128xf32>
    %84 = math.tanh %83 : vector<2x128xf32>
    %cst_52 = arith.constant 1.000000e+00 : f32
    %85 = vector.broadcast %cst_52 : f32 to vector<2x128xf32>
    %86 = arith.subf %85, %78 : vector<2x128xf32>
    %87 = arith.mulf %86, %84 : vector<2x128xf32>
    %88 = arith.mulf %78, %59 : vector<2x128xf32>
    %89 = arith.addf %87, %88 : vector<2x128xf32>
    %90 = vector.extract_strided_slice %54 {offsets = [1, 0, 0], sizes = [1, 2, 384], strides = [1, 1, 1]} : vector<8x2x384xf32> to vector<1x2x384xf32>
    %91 = vector.shape_cast %90 : vector<1x2x384xf32> to vector<2x384xf32>
    %cst_53 = arith.constant dense<0.000000e+00> : vector<2x384xf32>
    %92 = tpu.matmul %89, %55, %cst_53 {dimension_numbers = #tpu.dot_dimension_numbers<[1], [0], [0], [1], [0, 0, 1, 1], [], []>} : vector<2x128xf32>, vector<128x384xf32>, vector<2x384xf32> -> vector<2x384xf32>
    %93 = vector.extract_strided_slice %91 {offsets = [0, 0], sizes = [2, 128], strides = [1, 1]} : vector<2x384xf32> to vector<2x128xf32>
    %94 = vector.extract_strided_slice %92 {offsets = [0, 0], sizes = [2, 128], strides = [1, 1]} : vector<2x384xf32> to vector<2x128xf32>
    %95 = arith.addf %93, %94 : vector<2x128xf32>
    %96 = arith.negf %95 : vector<2x128xf32>
    %97 = math.exp %96 : vector<2x128xf32>
    %cst_54 = arith.constant 1.000000e+00 : f32
    %98 = vector.broadcast %cst_54 : f32 to vector<2x128xf32>
    %99 = arith.addf %98, %97 : vector<2x128xf32>
    %100 = arith.divf %98, %99 : vector<2x128xf32>
    %101 = vector.extract_strided_slice %91 {offsets = [0, 128], sizes = [2, 128], strides = [1, 1]} : vector<2x384xf32> to vector<2x128xf32>
    %102 = vector.extract_strided_slice %92 {offsets = [0, 128], sizes = [2, 128], strides = [1, 1]} : vector<2x384xf32> to vector<2x128xf32>
    %103 = arith.addf %101, %102 : vector<2x128xf32>
    %104 = arith.negf %103 : vector<2x128xf32>
    %105 = math.exp %104 : vector<2x128xf32>
    %cst_55 = arith.constant 1.000000e+00 : f32
    %106 = vector.broadcast %cst_55 : f32 to vector<2x128xf32>
    %107 = arith.addf %106, %105 : vector<2x128xf32>
    %108 = arith.divf %106, %107 : vector<2x128xf32>
    %109 = vector.extract_strided_slice %91 {offsets = [0, 256], sizes = [2, 128], strides = [1, 1]} : vector<2x384xf32> to vector<2x128xf32>
    %110 = vector.extract_strided_slice %92 {offsets = [0, 256], sizes = [2, 128], strides = [1, 1]} : vector<2x384xf32> to vector<2x128xf32>
    %111 = arith.addf %110, %58 : vector<2x128xf32>
    %112 = arith.mulf %100, %111 : vector<2x128xf32>
    %113 = arith.addf %109, %112 : vector<2x128xf32>
    %114 = math.tanh %113 : vector<2x128xf32>
    %cst_56 = arith.constant 1.000000e+00 : f32
    %115 = vector.broadcast %cst_56 : f32 to vector<2x128xf32>
    %116 = arith.subf %115, %108 : vector<2x128xf32>
    %117 = arith.mulf %116, %114 : vector<2x128xf32>
    %118 = arith.mulf %108, %89 : vector<2x128xf32>
    %119 = arith.addf %117, %118 : vector<2x128xf32>
    %120 = vector.extract_strided_slice %54 {offsets = [2, 0, 0], sizes = [1, 2, 384], strides = [1, 1, 1]} : vector<8x2x384xf32> to vector<1x2x384xf32>
    %121 = vector.shape_cast %120 : vector<1x2x384xf32> to vector<2x384xf32>
    %cst_57 = arith.constant dense<0.000000e+00> : vector<2x384xf32>
    %122 = tpu.matmul %119, %55, %cst_57 {dimension_numbers = #tpu.dot_dimension_numbers<[1], [0], [0], [1], [0, 0, 1, 1], [], []>} : vector<2x128xf32>, vector<128x384xf32>, vector<2x384xf32> -> vector<2x384xf32>
    %123 = vector.extract_strided_slice %121 {offsets = [0, 0], sizes = [2, 128], strides = [1, 1]} : vector<2x384xf32> to vector<2x128xf32>
    %124 = vector.extract_strided_slice %122 {offsets = [0, 0], sizes = [2, 128], strides = [1, 1]} : vector<2x384xf32> to vector<2x128xf32>
    %125 = arith.addf %123, %124 : vector<2x128xf32>
    %126 = arith.negf %125 : vector<2x128xf32>
    %127 = math.exp %126 : vector<2x128xf32>
    %cst_58 = arith.constant 1.000000e+00 : f32
    %128 = vector.broadcast %cst_58 : f32 to vector<2x128xf32>
    %129 = arith.addf %128, %127 : vector<2x128xf32>
    %130 = arith.divf %128, %129 : vector<2x128xf32>
    %131 = vector.extract_strided_slice %121 {offsets = [0, 128], sizes = [2, 128], strides = [1, 1]} : vector<2x384xf32> to vector<2x128xf32>
    %132 = vector.extract_strided_slice %122 {offsets = [0, 128], sizes = [2, 128], strides = [1, 1]} : vector<2x384xf32> to vector<2x128xf32>
    %133 = arith.addf %131, %132 : vector<2x128xf32>
    %134 = arith.negf %133 : vector<2x128xf32>
    %135 = math.exp %134 : vector<2x128xf32>
    %cst_59 = arith.constant 1.000000e+00 : f32
    %136 = vector.broadcast %cst_59 : f32 to vector<2x128xf32>
    %137 = arith.addf %136, %135 : vector<2x128xf32>
    %138 = arith.divf %136, %137 : vector<2x128xf32>
    %139 = vector.extract_strided_slice %121 {offsets = [0, 256], sizes = [2, 128], strides = [1, 1]} : vector<2x384xf32> to vector<2x128xf32>
    %140 = vector.extract_strided_slice %122 {offsets = [0, 256], sizes = [2, 128], strides = [1, 1]} : vector<2x384xf32> to vector<2x128xf32>
    %141 = arith.addf %140, %58 : vector<2x128xf32>
    %142 = arith.mulf %130, %141 : vector<2x128xf32>
    %143 = arith.addf %139, %142 : vector<2x128xf32>
    %144 = math.tanh %143 : vector<2x128xf32>
    %cst_60 = arith.constant 1.000000e+00 : f32
    %145 = vector.broadcast %cst_60 : f32 to vector<2x128xf32>
    %146 = arith.subf %145, %138 : vector<2x128xf32>
    %147 = arith.mulf %146, %144 : vector<2x128xf32>
    %148 = arith.mulf %138, %119 : vector<2x128xf32>
    %149 = arith.addf %147, %148 : vector<2x128xf32>
    %150 = vector.extract_strided_slice %54 {offsets = [3, 0, 0], sizes = [1, 2, 384], strides = [1, 1, 1]} : vector<8x2x384xf32> to vector<1x2x384xf32>
    %151 = vector.shape_cast %150 : vector<1x2x384xf32> to vector<2x384xf32>
    %cst_61 = arith.constant dense<0.000000e+00> : vector<2x384xf32>
    %152 = tpu.matmul %149, %55, %cst_61 {dimension_numbers = #tpu.dot_dimension_numbers<[1], [0], [0], [1], [0, 0, 1, 1], [], []>} : vector<2x128xf32>, vector<128x384xf32>, vector<2x384xf32> -> vector<2x384xf32>
    %153 = vector.extract_strided_slice %151 {offsets = [0, 0], sizes = [2, 128], strides = [1, 1]} : vector<2x384xf32> to vector<2x128xf32>
    %154 = vector.extract_strided_slice %152 {offsets = [0, 0], sizes = [2, 128], strides = [1, 1]} : vector<2x384xf32> to vector<2x128xf32>
    %155 = arith.addf %153, %154 : vector<2x128xf32>
    %156 = arith.negf %155 : vector<2x128xf32>
    %157 = math.exp %156 : vector<2x128xf32>
    %cst_62 = arith.constant 1.000000e+00 : f32
    %158 = vector.broadcast %cst_62 : f32 to vector<2x128xf32>
    %159 = arith.addf %158, %157 : vector<2x128xf32>
    %160 = arith.divf %158, %159 : vector<2x128xf32>
    %161 = vector.extract_strided_slice %151 {offsets = [0, 128], sizes = [2, 128], strides = [1, 1]} : vector<2x384xf32> to vector<2x128xf32>
    %162 = vector.extract_strided_slice %152 {offsets = [0, 128], sizes = [2, 128], strides = [1, 1]} : vector<2x384xf32> to vector<2x128xf32>
    %163 = arith.addf %161, %162 : vector<2x128xf32>
    %164 = arith.negf %163 : vector<2x128xf32>
    %165 = math.exp %164 : vector<2x128xf32>
    %cst_63 = arith.constant 1.000000e+00 : f32
    %166 = vector.broadcast %cst_63 : f32 to vector<2x128xf32>
    %167 = arith.addf %166, %165 : vector<2x128xf32>
    %168 = arith.divf %166, %167 : vector<2x128xf32>
    %169 = vector.extract_strided_slice %151 {offsets = [0, 256], sizes = [2, 128], strides = [1, 1]} : vector<2x384xf32> to vector<2x128xf32>
    %170 = vector.extract_strided_slice %152 {offsets = [0, 256], sizes = [2, 128], strides = [1, 1]} : vector<2x384xf32> to vector<2x128xf32>
    %171 = arith.addf %170, %58 : vector<2x128xf32>
    %172 = arith.mulf %160, %171 : vector<2x128xf32>
    %173 = arith.addf %169, %172 : vector<2x128xf32>
    %174 = math.tanh %173 : vector<2x128xf32>
    %cst_64 = arith.constant 1.000000e+00 : f32
    %175 = vector.broadcast %cst_64 : f32 to vector<2x128xf32>
    %176 = arith.subf %175, %168 : vector<2x128xf32>
    %177 = arith.mulf %176, %174 : vector<2x128xf32>
    %178 = arith.mulf %168, %149 : vector<2x128xf32>
    %179 = arith.addf %177, %178 : vector<2x128xf32>
    %180 = vector.extract_strided_slice %54 {offsets = [4, 0, 0], sizes = [1, 2, 384], strides = [1, 1, 1]} : vector<8x2x384xf32> to vector<1x2x384xf32>
    %181 = vector.shape_cast %180 : vector<1x2x384xf32> to vector<2x384xf32>
    %cst_65 = arith.constant dense<0.000000e+00> : vector<2x384xf32>
    %182 = tpu.matmul %179, %55, %cst_65 {dimension_numbers = #tpu.dot_dimension_numbers<[1], [0], [0], [1], [0, 0, 1, 1], [], []>} : vector<2x128xf32>, vector<128x384xf32>, vector<2x384xf32> -> vector<2x384xf32>
    %183 = vector.extract_strided_slice %181 {offsets = [0, 0], sizes = [2, 128], strides = [1, 1]} : vector<2x384xf32> to vector<2x128xf32>
    %184 = vector.extract_strided_slice %182 {offsets = [0, 0], sizes = [2, 128], strides = [1, 1]} : vector<2x384xf32> to vector<2x128xf32>
    %185 = arith.addf %183, %184 : vector<2x128xf32>
    %186 = arith.negf %185 : vector<2x128xf32>
    %187 = math.exp %186 : vector<2x128xf32>
    %cst_66 = arith.constant 1.000000e+00 : f32
    %188 = vector.broadcast %cst_66 : f32 to vector<2x128xf32>
    %189 = arith.addf %188, %187 : vector<2x128xf32>
    %190 = arith.divf %188, %189 : vector<2x128xf32>
    %191 = vector.extract_strided_slice %181 {offsets = [0, 128], sizes = [2, 128], strides = [1, 1]} : vector<2x384xf32> to vector<2x128xf32>
    %192 = vector.extract_strided_slice %182 {offsets = [0, 128], sizes = [2, 128], strides = [1, 1]} : vector<2x384xf32> to vector<2x128xf32>
    %193 = arith.addf %191, %192 : vector<2x128xf32>
    %194 = arith.negf %193 : vector<2x128xf32>
    %195 = math.exp %194 : vector<2x128xf32>
    %cst_67 = arith.constant 1.000000e+00 : f32
    %196 = vector.broadcast %cst_67 : f32 to vector<2x128xf32>
    %197 = arith.addf %196, %195 : vector<2x128xf32>
    %198 = arith.divf %196, %197 : vector<2x128xf32>
    %199 = vector.extract_strided_slice %181 {offsets = [0, 256], sizes = [2, 128], strides = [1, 1]} : vector<2x384xf32> to vector<2x128xf32>
    %200 = vector.extract_strided_slice %182 {offsets = [0, 256], sizes = [2, 128], strides = [1, 1]} : vector<2x384xf32> to vector<2x128xf32>
    %201 = arith.addf %200, %58 : vector<2x128xf32>
    %202 = arith.mulf %190, %201 : vector<2x128xf32>
    %203 = arith.addf %199, %202 : vector<2x128xf32>
    %204 = math.tanh %203 : vector<2x128xf32>
    %cst_68 = arith.constant 1.000000e+00 : f32
    %205 = vector.broadcast %cst_68 : f32 to vector<2x128xf32>
    %206 = arith.subf %205, %198 : vector<2x128xf32>
    %207 = arith.mulf %206, %204 : vector<2x128xf32>
    %208 = arith.mulf %198, %179 : vector<2x128xf32>
    %209 = arith.addf %207, %208 : vector<2x128xf32>
    %210 = vector.extract_strided_slice %54 {offsets = [5, 0, 0], sizes = [1, 2, 384], strides = [1, 1, 1]} : vector<8x2x384xf32> to vector<1x2x384xf32>
    %211 = vector.shape_cast %210 : vector<1x2x384xf32> to vector<2x384xf32>
    %cst_69 = arith.constant dense<0.000000e+00> : vector<2x384xf32>
    %212 = tpu.matmul %209, %55, %cst_69 {dimension_numbers = #tpu.dot_dimension_numbers<[1], [0], [0], [1], [0, 0, 1, 1], [], []>} : vector<2x128xf32>, vector<128x384xf32>, vector<2x384xf32> -> vector<2x384xf32>
    %213 = vector.extract_strided_slice %211 {offsets = [0, 0], sizes = [2, 128], strides = [1, 1]} : vector<2x384xf32> to vector<2x128xf32>
    %214 = vector.extract_strided_slice %212 {offsets = [0, 0], sizes = [2, 128], strides = [1, 1]} : vector<2x384xf32> to vector<2x128xf32>
    %215 = arith.addf %213, %214 : vector<2x128xf32>
    %216 = arith.negf %215 : vector<2x128xf32>
    %217 = math.exp %216 : vector<2x128xf32>
    %cst_70 = arith.constant 1.000000e+00 : f32
    %218 = vector.broadcast %cst_70 : f32 to vector<2x128xf32>
    %219 = arith.addf %218, %217 : vector<2x128xf32>
    %220 = arith.divf %218, %219 : vector<2x128xf32>
    %221 = vector.extract_strided_slice %211 {offsets = [0, 128], sizes = [2, 128], strides = [1, 1]} : vector<2x384xf32> to vector<2x128xf32>
    %222 = vector.extract_strided_slice %212 {offsets = [0, 128], sizes = [2, 128], strides = [1, 1]} : vector<2x384xf32> to vector<2x128xf32>
    %223 = arith.addf %221, %222 : vector<2x128xf32>
    %224 = arith.negf %223 : vector<2x128xf32>
    %225 = math.exp %224 : vector<2x128xf32>
    %cst_71 = arith.constant 1.000000e+00 : f32
    %226 = vector.broadcast %cst_71 : f32 to vector<2x128xf32>
    %227 = arith.addf %226, %225 : vector<2x128xf32>
    %228 = arith.divf %226, %227 : vector<2x128xf32>
    %229 = vector.extract_strided_slice %211 {offsets = [0, 256], sizes = [2, 128], strides = [1, 1]} : vector<2x384xf32> to vector<2x128xf32>
    %230 = vector.extract_strided_slice %212 {offsets = [0, 256], sizes = [2, 128], strides = [1, 1]} : vector<2x384xf32> to vector<2x128xf32>
    %231 = arith.addf %230, %58 : vector<2x128xf32>
    %232 = arith.mulf %220, %231 : vector<2x128xf32>
    %233 = arith.addf %229, %232 : vector<2x128xf32>
    %234 = math.tanh %233 : vector<2x128xf32>
    %cst_72 = arith.constant 1.000000e+00 : f32
    %235 = vector.broadcast %cst_72 : f32 to vector<2x128xf32>
    %236 = arith.subf %235, %228 : vector<2x128xf32>
    %237 = arith.mulf %236, %234 : vector<2x128xf32>
    %238 = arith.mulf %228, %209 : vector<2x128xf32>
    %239 = arith.addf %237, %238 : vector<2x128xf32>
    %240 = vector.extract_strided_slice %54 {offsets = [6, 0, 0], sizes = [1, 2, 384], strides = [1, 1, 1]} : vector<8x2x384xf32> to vector<1x2x384xf32>
    %241 = vector.shape_cast %240 : vector<1x2x384xf32> to vector<2x384xf32>
    %cst_73 = arith.constant dense<0.000000e+00> : vector<2x384xf32>
    %242 = tpu.matmul %239, %55, %cst_73 {dimension_numbers = #tpu.dot_dimension_numbers<[1], [0], [0], [1], [0, 0, 1, 1], [], []>} : vector<2x128xf32>, vector<128x384xf32>, vector<2x384xf32> -> vector<2x384xf32>
    %243 = vector.extract_strided_slice %241 {offsets = [0, 0], sizes = [2, 128], strides = [1, 1]} : vector<2x384xf32> to vector<2x128xf32>
    %244 = vector.extract_strided_slice %242 {offsets = [0, 0], sizes = [2, 128], strides = [1, 1]} : vector<2x384xf32> to vector<2x128xf32>
    %245 = arith.addf %243, %244 : vector<2x128xf32>
    %246 = arith.negf %245 : vector<2x128xf32>
    %247 = math.exp %246 : vector<2x128xf32>
    %cst_74 = arith.constant 1.000000e+00 : f32
    %248 = vector.broadcast %cst_74 : f32 to vector<2x128xf32>
    %249 = arith.addf %248, %247 : vector<2x128xf32>
    %250 = arith.divf %248, %249 : vector<2x128xf32>
    %251 = vector.extract_strided_slice %241 {offsets = [0, 128], sizes = [2, 128], strides = [1, 1]} : vector<2x384xf32> to vector<2x128xf32>
    %252 = vector.extract_strided_slice %242 {offsets = [0, 128], sizes = [2, 128], strides = [1, 1]} : vector<2x384xf32> to vector<2x128xf32>
    %253 = arith.addf %251, %252 : vector<2x128xf32>
    %254 = arith.negf %253 : vector<2x128xf32>
    %255 = math.exp %254 : vector<2x128xf32>
    %cst_75 = arith.constant 1.000000e+00 : f32
    %256 = vector.broadcast %cst_75 : f32 to vector<2x128xf32>
    %257 = arith.addf %256, %255 : vector<2x128xf32>
    %258 = arith.divf %256, %257 : vector<2x128xf32>
    %259 = vector.extract_strided_slice %241 {offsets = [0, 256], sizes = [2, 128], strides = [1, 1]} : vector<2x384xf32> to vector<2x128xf32>
    %260 = vector.extract_strided_slice %242 {offsets = [0, 256], sizes = [2, 128], strides = [1, 1]} : vector<2x384xf32> to vector<2x128xf32>
    %261 = arith.addf %260, %58 : vector<2x128xf32>
    %262 = arith.mulf %250, %261 : vector<2x128xf32>
    %263 = arith.addf %259, %262 : vector<2x128xf32>
    %264 = math.tanh %263 : vector<2x128xf32>
    %cst_76 = arith.constant 1.000000e+00 : f32
    %265 = vector.broadcast %cst_76 : f32 to vector<2x128xf32>
    %266 = arith.subf %265, %258 : vector<2x128xf32>
    %267 = arith.mulf %266, %264 : vector<2x128xf32>
    %268 = arith.mulf %258, %239 : vector<2x128xf32>
    %269 = arith.addf %267, %268 : vector<2x128xf32>
    %270 = vector.extract_strided_slice %54 {offsets = [7, 0, 0], sizes = [1, 2, 384], strides = [1, 1, 1]} : vector<8x2x384xf32> to vector<1x2x384xf32>
    %271 = vector.shape_cast %270 : vector<1x2x384xf32> to vector<2x384xf32>
    %cst_77 = arith.constant dense<0.000000e+00> : vector<2x384xf32>
    %272 = tpu.matmul %269, %55, %cst_77 {dimension_numbers = #tpu.dot_dimension_numbers<[1], [0], [0], [1], [0, 0, 1, 1], [], []>} : vector<2x128xf32>, vector<128x384xf32>, vector<2x384xf32> -> vector<2x384xf32>
    %273 = vector.extract_strided_slice %271 {offsets = [0, 0], sizes = [2, 128], strides = [1, 1]} : vector<2x384xf32> to vector<2x128xf32>
    %274 = vector.extract_strided_slice %272 {offsets = [0, 0], sizes = [2, 128], strides = [1, 1]} : vector<2x384xf32> to vector<2x128xf32>
    %275 = arith.addf %273, %274 : vector<2x128xf32>
    %276 = arith.negf %275 : vector<2x128xf32>
    %277 = math.exp %276 : vector<2x128xf32>
    %cst_78 = arith.constant 1.000000e+00 : f32
    %278 = vector.broadcast %cst_78 : f32 to vector<2x128xf32>
    %279 = arith.addf %278, %277 : vector<2x128xf32>
    %280 = arith.divf %278, %279 : vector<2x128xf32>
    %281 = vector.extract_strided_slice %271 {offsets = [0, 128], sizes = [2, 128], strides = [1, 1]} : vector<2x384xf32> to vector<2x128xf32>
    %282 = vector.extract_strided_slice %272 {offsets = [0, 128], sizes = [2, 128], strides = [1, 1]} : vector<2x384xf32> to vector<2x128xf32>
    %283 = arith.addf %281, %282 : vector<2x128xf32>
    %284 = arith.negf %283 : vector<2x128xf32>
    %285 = math.exp %284 : vector<2x128xf32>
    %cst_79 = arith.constant 1.000000e+00 : f32
    %286 = vector.broadcast %cst_79 : f32 to vector<2x128xf32>
    %287 = arith.addf %286, %285 : vector<2x128xf32>
    %288 = arith.divf %286, %287 : vector<2x128xf32>
    %289 = vector.extract_strided_slice %271 {offsets = [0, 256], sizes = [2, 128], strides = [1, 1]} : vector<2x384xf32> to vector<2x128xf32>
    %290 = vector.extract_strided_slice %272 {offsets = [0, 256], sizes = [2, 128], strides = [1, 1]} : vector<2x384xf32> to vector<2x128xf32>
    %291 = arith.addf %290, %58 : vector<2x128xf32>
    %292 = arith.mulf %280, %291 : vector<2x128xf32>
    %293 = arith.addf %289, %292 : vector<2x128xf32>
    %294 = math.tanh %293 : vector<2x128xf32>
    %cst_80 = arith.constant 1.000000e+00 : f32
    %295 = vector.broadcast %cst_80 : f32 to vector<2x128xf32>
    %296 = arith.subf %295, %288 : vector<2x128xf32>
    %297 = arith.mulf %296, %294 : vector<2x128xf32>
    %298 = arith.mulf %288, %269 : vector<2x128xf32>
    %299 = arith.addf %297, %298 : vector<2x128xf32>
    %300 = vector.shape_cast %89 : vector<2x128xf32> to vector<1x2x128xf32>
    %301 = vector.shape_cast %119 : vector<2x128xf32> to vector<1x2x128xf32>
    %302 = vector.shape_cast %149 : vector<2x128xf32> to vector<1x2x128xf32>
    %303 = vector.shape_cast %179 : vector<2x128xf32> to vector<1x2x128xf32>
    %304 = vector.shape_cast %209 : vector<2x128xf32> to vector<1x2x128xf32>
    %305 = vector.shape_cast %239 : vector<2x128xf32> to vector<1x2x128xf32>
    %306 = vector.shape_cast %269 : vector<2x128xf32> to vector<1x2x128xf32>
    %307 = vector.shape_cast %299 : vector<2x128xf32> to vector<1x2x128xf32>
    %308 = tpu.concatenate %300, %301, %302, %303, %304, %305, %306, %307 in 0 : vector<1x2x128xf32>, vector<1x2x128xf32>, vector<1x2x128xf32>, vector<1x2x128xf32>, vector<1x2x128xf32>, vector<1x2x128xf32>, vector<1x2x128xf32>, vector<1x2x128xf32> -> vector<8x2x128xf32>
    %309 = vector.shape_cast %308 : vector<8x2x128xf32> to vector<16x128xf32>
    %c0_81 = arith.constant 0 : index
    %c0_82 = arith.constant 0 : index
    %310 = vector.load %arg6[%c0_81, %c0_82] : memref<128x384xf32, #tpu.memory_space<vmem>>, vector<128x384xf32>
    %cst_83 = arith.constant dense<0.000000e+00> : vector<16x384xf32>
    %311 = tpu.matmul %309, %310, %cst_83 {dimension_numbers = #tpu.dot_dimension_numbers<[1], [0], [0], [1], [0, 0, 1, 1], [], []>} : vector<16x128xf32>, vector<128x384xf32>, vector<16x384xf32> -> vector<16x384xf32>
    %c0_84 = arith.constant 0 : index
    %c0_85 = arith.constant 0 : index
    %312 = vector.load %arg8[%c0_84, %c0_85] : memref<1x384xf32, #tpu.memory_space<vmem>>, vector<1x384xf32>
    %313 = vector.broadcast %312 : vector<1x384xf32> to vector<16x384xf32>
    %314 = arith.addf %311, %313 : vector<16x384xf32>
    %315 = vector.shape_cast %314 : vector<16x384xf32> to vector<8x2x384xf32>
    %c0_86 = arith.constant 0 : index
    %c0_87 = arith.constant 0 : index
    %316 = vector.load %arg7[%c0_86, %c0_87] : memref<128x384xf32, #tpu.memory_space<vmem>>, vector<128x384xf32>
    %c0_88 = arith.constant 0 : index
    %c0_89 = arith.constant 0 : index
    %317 = vector.load %arg9[%c0_88, %c0_89] : memref<1x128xf32, #tpu.memory_space<vmem>>, vector<1x128xf32>
    %318 = vector.shape_cast %317 : vector<1x128xf32> to vector<1x128xf32>
    %319 = vector.broadcast %318 : vector<1x128xf32> to vector<2x128xf32>
    %cst_90 = arith.constant 0.000000e+00 : f32
    %320 = vector.broadcast %cst_90 : f32 to vector<2x128xf32>
    %321 = vector.extract_strided_slice %315 {offsets = [0, 0, 0], sizes = [1, 2, 384], strides = [1, 1, 1]} : vector<8x2x384xf32> to vector<1x2x384xf32>
    %322 = vector.shape_cast %321 : vector<1x2x384xf32> to vector<2x384xf32>
    %cst_91 = arith.constant dense<0.000000e+00> : vector<2x384xf32>
    %323 = tpu.matmul %320, %316, %cst_91 {dimension_numbers = #tpu.dot_dimension_numbers<[1], [0], [0], [1], [0, 0, 1, 1], [], []>} : vector<2x128xf32>, vector<128x384xf32>, vector<2x384xf32> -> vector<2x384xf32>
    %324 = vector.extract_strided_slice %322 {offsets = [0, 0], sizes = [2, 128], strides = [1, 1]} : vector<2x384xf32> to vector<2x128xf32>
    %325 = vector.extract_strided_slice %323 {offsets = [0, 0], sizes = [2, 128], strides = [1, 1]} : vector<2x384xf32> to vector<2x128xf32>
    %326 = arith.addf %324, %325 : vector<2x128xf32>
    %327 = arith.negf %326 : vector<2x128xf32>
    %328 = math.exp %327 : vector<2x128xf32>
    %cst_92 = arith.constant 1.000000e+00 : f32
    %329 = vector.broadcast %cst_92 : f32 to vector<2x128xf32>
    %330 = arith.addf %329, %328 : vector<2x128xf32>
    %331 = arith.divf %329, %330 : vector<2x128xf32>
    %332 = vector.extract_strided_slice %322 {offsets = [0, 128], sizes = [2, 128], strides = [1, 1]} : vector<2x384xf32> to vector<2x128xf32>
    %333 = vector.extract_strided_slice %323 {offsets = [0, 128], sizes = [2, 128], strides = [1, 1]} : vector<2x384xf32> to vector<2x128xf32>
    %334 = arith.addf %332, %333 : vector<2x128xf32>
    %335 = arith.negf %334 : vector<2x128xf32>
    %336 = math.exp %335 : vector<2x128xf32>
    %cst_93 = arith.constant 1.000000e+00 : f32
    %337 = vector.broadcast %cst_93 : f32 to vector<2x128xf32>
    %338 = arith.addf %337, %336 : vector<2x128xf32>
    %339 = arith.divf %337, %338 : vector<2x128xf32>
    %340 = vector.extract_strided_slice %322 {offsets = [0, 256], sizes = [2, 128], strides = [1, 1]} : vector<2x384xf32> to vector<2x128xf32>
    %341 = vector.extract_strided_slice %323 {offsets = [0, 256], sizes = [2, 128], strides = [1, 1]} : vector<2x384xf32> to vector<2x128xf32>
    %342 = arith.addf %341, %319 : vector<2x128xf32>
    %343 = arith.mulf %331, %342 : vector<2x128xf32>
    %344 = arith.addf %340, %343 : vector<2x128xf32>
    %345 = math.tanh %344 : vector<2x128xf32>
    %cst_94 = arith.constant 1.000000e+00 : f32
    %346 = vector.broadcast %cst_94 : f32 to vector<2x128xf32>
    %347 = arith.subf %346, %339 : vector<2x128xf32>
    %348 = arith.mulf %347, %345 : vector<2x128xf32>
    %349 = arith.mulf %339, %320 : vector<2x128xf32>
    %350 = arith.addf %348, %349 : vector<2x128xf32>
    %351 = vector.extract_strided_slice %315 {offsets = [1, 0, 0], sizes = [1, 2, 384], strides = [1, 1, 1]} : vector<8x2x384xf32> to vector<1x2x384xf32>
    %352 = vector.shape_cast %351 : vector<1x2x384xf32> to vector<2x384xf32>
    %cst_95 = arith.constant dense<0.000000e+00> : vector<2x384xf32>
    %353 = tpu.matmul %350, %316, %cst_95 {dimension_numbers = #tpu.dot_dimension_numbers<[1], [0], [0], [1], [0, 0, 1, 1], [], []>} : vector<2x128xf32>, vector<128x384xf32>, vector<2x384xf32> -> vector<2x384xf32>
    %354 = vector.extract_strided_slice %352 {offsets = [0, 0], sizes = [2, 128], strides = [1, 1]} : vector<2x384xf32> to vector<2x128xf32>
    %355 = vector.extract_strided_slice %353 {offsets = [0, 0], sizes = [2, 128], strides = [1, 1]} : vector<2x384xf32> to vector<2x128xf32>
    %356 = arith.addf %354, %355 : vector<2x128xf32>
    %357 = arith.negf %356 : vector<2x128xf32>
    %358 = math.exp %357 : vector<2x128xf32>
    %cst_96 = arith.constant 1.000000e+00 : f32
    %359 = vector.broadcast %cst_96 : f32 to vector<2x128xf32>
    %360 = arith.addf %359, %358 : vector<2x128xf32>
    %361 = arith.divf %359, %360 : vector<2x128xf32>
    %362 = vector.extract_strided_slice %352 {offsets = [0, 128], sizes = [2, 128], strides = [1, 1]} : vector<2x384xf32> to vector<2x128xf32>
    %363 = vector.extract_strided_slice %353 {offsets = [0, 128], sizes = [2, 128], strides = [1, 1]} : vector<2x384xf32> to vector<2x128xf32>
    %364 = arith.addf %362, %363 : vector<2x128xf32>
    %365 = arith.negf %364 : vector<2x128xf32>
    %366 = math.exp %365 : vector<2x128xf32>
    %cst_97 = arith.constant 1.000000e+00 : f32
    %367 = vector.broadcast %cst_97 : f32 to vector<2x128xf32>
    %368 = arith.addf %367, %366 : vector<2x128xf32>
    %369 = arith.divf %367, %368 : vector<2x128xf32>
    %370 = vector.extract_strided_slice %352 {offsets = [0, 256], sizes = [2, 128], strides = [1, 1]} : vector<2x384xf32> to vector<2x128xf32>
    %371 = vector.extract_strided_slice %353 {offsets = [0, 256], sizes = [2, 128], strides = [1, 1]} : vector<2x384xf32> to vector<2x128xf32>
    %372 = arith.addf %371, %319 : vector<2x128xf32>
    %373 = arith.mulf %361, %372 : vector<2x128xf32>
    %374 = arith.addf %370, %373 : vector<2x128xf32>
    %375 = math.tanh %374 : vector<2x128xf32>
    %cst_98 = arith.constant 1.000000e+00 : f32
    %376 = vector.broadcast %cst_98 : f32 to vector<2x128xf32>
    %377 = arith.subf %376, %369 : vector<2x128xf32>
    %378 = arith.mulf %377, %375 : vector<2x128xf32>
    %379 = arith.mulf %369, %350 : vector<2x128xf32>
    %380 = arith.addf %378, %379 : vector<2x128xf32>
    %381 = vector.extract_strided_slice %315 {offsets = [2, 0, 0], sizes = [1, 2, 384], strides = [1, 1, 1]} : vector<8x2x384xf32> to vector<1x2x384xf32>
    %382 = vector.shape_cast %381 : vector<1x2x384xf32> to vector<2x384xf32>
    %cst_99 = arith.constant dense<0.000000e+00> : vector<2x384xf32>
    %383 = tpu.matmul %380, %316, %cst_99 {dimension_numbers = #tpu.dot_dimension_numbers<[1], [0], [0], [1], [0, 0, 1, 1], [], []>} : vector<2x128xf32>, vector<128x384xf32>, vector<2x384xf32> -> vector<2x384xf32>
    %384 = vector.extract_strided_slice %382 {offsets = [0, 0], sizes = [2, 128], strides = [1, 1]} : vector<2x384xf32> to vector<2x128xf32>
    %385 = vector.extract_strided_slice %383 {offsets = [0, 0], sizes = [2, 128], strides = [1, 1]} : vector<2x384xf32> to vector<2x128xf32>
    %386 = arith.addf %384, %385 : vector<2x128xf32>
    %387 = arith.negf %386 : vector<2x128xf32>
    %388 = math.exp %387 : vector<2x128xf32>
    %cst_100 = arith.constant 1.000000e+00 : f32
    %389 = vector.broadcast %cst_100 : f32 to vector<2x128xf32>
    %390 = arith.addf %389, %388 : vector<2x128xf32>
    %391 = arith.divf %389, %390 : vector<2x128xf32>
    %392 = vector.extract_strided_slice %382 {offsets = [0, 128], sizes = [2, 128], strides = [1, 1]} : vector<2x384xf32> to vector<2x128xf32>
    %393 = vector.extract_strided_slice %383 {offsets = [0, 128], sizes = [2, 128], strides = [1, 1]} : vector<2x384xf32> to vector<2x128xf32>
    %394 = arith.addf %392, %393 : vector<2x128xf32>
    %395 = arith.negf %394 : vector<2x128xf32>
    %396 = math.exp %395 : vector<2x128xf32>
    %cst_101 = arith.constant 1.000000e+00 : f32
    %397 = vector.broadcast %cst_101 : f32 to vector<2x128xf32>
    %398 = arith.addf %397, %396 : vector<2x128xf32>
    %399 = arith.divf %397, %398 : vector<2x128xf32>
    %400 = vector.extract_strided_slice %382 {offsets = [0, 256], sizes = [2, 128], strides = [1, 1]} : vector<2x384xf32> to vector<2x128xf32>
    %401 = vector.extract_strided_slice %383 {offsets = [0, 256], sizes = [2, 128], strides = [1, 1]} : vector<2x384xf32> to vector<2x128xf32>
    %402 = arith.addf %401, %319 : vector<2x128xf32>
    %403 = arith.mulf %391, %402 : vector<2x128xf32>
    %404 = arith.addf %400, %403 : vector<2x128xf32>
    %405 = math.tanh %404 : vector<2x128xf32>
    %cst_102 = arith.constant 1.000000e+00 : f32
    %406 = vector.broadcast %cst_102 : f32 to vector<2x128xf32>
    %407 = arith.subf %406, %399 : vector<2x128xf32>
    %408 = arith.mulf %407, %405 : vector<2x128xf32>
    %409 = arith.mulf %399, %380 : vector<2x128xf32>
    %410 = arith.addf %408, %409 : vector<2x128xf32>
    %411 = vector.extract_strided_slice %315 {offsets = [3, 0, 0], sizes = [1, 2, 384], strides = [1, 1, 1]} : vector<8x2x384xf32> to vector<1x2x384xf32>
    %412 = vector.shape_cast %411 : vector<1x2x384xf32> to vector<2x384xf32>
    %cst_103 = arith.constant dense<0.000000e+00> : vector<2x384xf32>
    %413 = tpu.matmul %410, %316, %cst_103 {dimension_numbers = #tpu.dot_dimension_numbers<[1], [0], [0], [1], [0, 0, 1, 1], [], []>} : vector<2x128xf32>, vector<128x384xf32>, vector<2x384xf32> -> vector<2x384xf32>
    %414 = vector.extract_strided_slice %412 {offsets = [0, 0], sizes = [2, 128], strides = [1, 1]} : vector<2x384xf32> to vector<2x128xf32>
    %415 = vector.extract_strided_slice %413 {offsets = [0, 0], sizes = [2, 128], strides = [1, 1]} : vector<2x384xf32> to vector<2x128xf32>
    %416 = arith.addf %414, %415 : vector<2x128xf32>
    %417 = arith.negf %416 : vector<2x128xf32>
    %418 = math.exp %417 : vector<2x128xf32>
    %cst_104 = arith.constant 1.000000e+00 : f32
    %419 = vector.broadcast %cst_104 : f32 to vector<2x128xf32>
    %420 = arith.addf %419, %418 : vector<2x128xf32>
    %421 = arith.divf %419, %420 : vector<2x128xf32>
    %422 = vector.extract_strided_slice %412 {offsets = [0, 128], sizes = [2, 128], strides = [1, 1]} : vector<2x384xf32> to vector<2x128xf32>
    %423 = vector.extract_strided_slice %413 {offsets = [0, 128], sizes = [2, 128], strides = [1, 1]} : vector<2x384xf32> to vector<2x128xf32>
    %424 = arith.addf %422, %423 : vector<2x128xf32>
    %425 = arith.negf %424 : vector<2x128xf32>
    %426 = math.exp %425 : vector<2x128xf32>
    %cst_105 = arith.constant 1.000000e+00 : f32
    %427 = vector.broadcast %cst_105 : f32 to vector<2x128xf32>
    %428 = arith.addf %427, %426 : vector<2x128xf32>
    %429 = arith.divf %427, %428 : vector<2x128xf32>
    %430 = vector.extract_strided_slice %412 {offsets = [0, 256], sizes = [2, 128], strides = [1, 1]} : vector<2x384xf32> to vector<2x128xf32>
    %431 = vector.extract_strided_slice %413 {offsets = [0, 256], sizes = [2, 128], strides = [1, 1]} : vector<2x384xf32> to vector<2x128xf32>
    %432 = arith.addf %431, %319 : vector<2x128xf32>
    %433 = arith.mulf %421, %432 : vector<2x128xf32>
    %434 = arith.addf %430, %433 : vector<2x128xf32>
    %435 = math.tanh %434 : vector<2x128xf32>
    %cst_106 = arith.constant 1.000000e+00 : f32
    %436 = vector.broadcast %cst_106 : f32 to vector<2x128xf32>
    %437 = arith.subf %436, %429 : vector<2x128xf32>
    %438 = arith.mulf %437, %435 : vector<2x128xf32>
    %439 = arith.mulf %429, %410 : vector<2x128xf32>
    %440 = arith.addf %438, %439 : vector<2x128xf32>
    %441 = vector.extract_strided_slice %315 {offsets = [4, 0, 0], sizes = [1, 2, 384], strides = [1, 1, 1]} : vector<8x2x384xf32> to vector<1x2x384xf32>
    %442 = vector.shape_cast %441 : vector<1x2x384xf32> to vector<2x384xf32>
    %cst_107 = arith.constant dense<0.000000e+00> : vector<2x384xf32>
    %443 = tpu.matmul %440, %316, %cst_107 {dimension_numbers = #tpu.dot_dimension_numbers<[1], [0], [0], [1], [0, 0, 1, 1], [], []>} : vector<2x128xf32>, vector<128x384xf32>, vector<2x384xf32> -> vector<2x384xf32>
    %444 = vector.extract_strided_slice %442 {offsets = [0, 0], sizes = [2, 128], strides = [1, 1]} : vector<2x384xf32> to vector<2x128xf32>
    %445 = vector.extract_strided_slice %443 {offsets = [0, 0], sizes = [2, 128], strides = [1, 1]} : vector<2x384xf32> to vector<2x128xf32>
    %446 = arith.addf %444, %445 : vector<2x128xf32>
    %447 = arith.negf %446 : vector<2x128xf32>
    %448 = math.exp %447 : vector<2x128xf32>
    %cst_108 = arith.constant 1.000000e+00 : f32
    %449 = vector.broadcast %cst_108 : f32 to vector<2x128xf32>
    %450 = arith.addf %449, %448 : vector<2x128xf32>
    %451 = arith.divf %449, %450 : vector<2x128xf32>
    %452 = vector.extract_strided_slice %442 {offsets = [0, 128], sizes = [2, 128], strides = [1, 1]} : vector<2x384xf32> to vector<2x128xf32>
    %453 = vector.extract_strided_slice %443 {offsets = [0, 128], sizes = [2, 128], strides = [1, 1]} : vector<2x384xf32> to vector<2x128xf32>
    %454 = arith.addf %452, %453 : vector<2x128xf32>
    %455 = arith.negf %454 : vector<2x128xf32>
    %456 = math.exp %455 : vector<2x128xf32>
    %cst_109 = arith.constant 1.000000e+00 : f32
    %457 = vector.broadcast %cst_109 : f32 to vector<2x128xf32>
    %458 = arith.addf %457, %456 : vector<2x128xf32>
    %459 = arith.divf %457, %458 : vector<2x128xf32>
    %460 = vector.extract_strided_slice %442 {offsets = [0, 256], sizes = [2, 128], strides = [1, 1]} : vector<2x384xf32> to vector<2x128xf32>
    %461 = vector.extract_strided_slice %443 {offsets = [0, 256], sizes = [2, 128], strides = [1, 1]} : vector<2x384xf32> to vector<2x128xf32>
    %462 = arith.addf %461, %319 : vector<2x128xf32>
    %463 = arith.mulf %451, %462 : vector<2x128xf32>
    %464 = arith.addf %460, %463 : vector<2x128xf32>
    %465 = math.tanh %464 : vector<2x128xf32>
    %cst_110 = arith.constant 1.000000e+00 : f32
    %466 = vector.broadcast %cst_110 : f32 to vector<2x128xf32>
    %467 = arith.subf %466, %459 : vector<2x128xf32>
    %468 = arith.mulf %467, %465 : vector<2x128xf32>
    %469 = arith.mulf %459, %440 : vector<2x128xf32>
    %470 = arith.addf %468, %469 : vector<2x128xf32>
    %471 = vector.extract_strided_slice %315 {offsets = [5, 0, 0], sizes = [1, 2, 384], strides = [1, 1, 1]} : vector<8x2x384xf32> to vector<1x2x384xf32>
    %472 = vector.shape_cast %471 : vector<1x2x384xf32> to vector<2x384xf32>
    %cst_111 = arith.constant dense<0.000000e+00> : vector<2x384xf32>
    %473 = tpu.matmul %470, %316, %cst_111 {dimension_numbers = #tpu.dot_dimension_numbers<[1], [0], [0], [1], [0, 0, 1, 1], [], []>} : vector<2x128xf32>, vector<128x384xf32>, vector<2x384xf32> -> vector<2x384xf32>
    %474 = vector.extract_strided_slice %472 {offsets = [0, 0], sizes = [2, 128], strides = [1, 1]} : vector<2x384xf32> to vector<2x128xf32>
    %475 = vector.extract_strided_slice %473 {offsets = [0, 0], sizes = [2, 128], strides = [1, 1]} : vector<2x384xf32> to vector<2x128xf32>
    %476 = arith.addf %474, %475 : vector<2x128xf32>
    %477 = arith.negf %476 : vector<2x128xf32>
    %478 = math.exp %477 : vector<2x128xf32>
    %cst_112 = arith.constant 1.000000e+00 : f32
    %479 = vector.broadcast %cst_112 : f32 to vector<2x128xf32>
    %480 = arith.addf %479, %478 : vector<2x128xf32>
    %481 = arith.divf %479, %480 : vector<2x128xf32>
    %482 = vector.extract_strided_slice %472 {offsets = [0, 128], sizes = [2, 128], strides = [1, 1]} : vector<2x384xf32> to vector<2x128xf32>
    %483 = vector.extract_strided_slice %473 {offsets = [0, 128], sizes = [2, 128], strides = [1, 1]} : vector<2x384xf32> to vector<2x128xf32>
    %484 = arith.addf %482, %483 : vector<2x128xf32>
    %485 = arith.negf %484 : vector<2x128xf32>
    %486 = math.exp %485 : vector<2x128xf32>
    %cst_113 = arith.constant 1.000000e+00 : f32
    %487 = vector.broadcast %cst_113 : f32 to vector<2x128xf32>
    %488 = arith.addf %487, %486 : vector<2x128xf32>
    %489 = arith.divf %487, %488 : vector<2x128xf32>
    %490 = vector.extract_strided_slice %472 {offsets = [0, 256], sizes = [2, 128], strides = [1, 1]} : vector<2x384xf32> to vector<2x128xf32>
    %491 = vector.extract_strided_slice %473 {offsets = [0, 256], sizes = [2, 128], strides = [1, 1]} : vector<2x384xf32> to vector<2x128xf32>
    %492 = arith.addf %491, %319 : vector<2x128xf32>
    %493 = arith.mulf %481, %492 : vector<2x128xf32>
    %494 = arith.addf %490, %493 : vector<2x128xf32>
    %495 = math.tanh %494 : vector<2x128xf32>
    %cst_114 = arith.constant 1.000000e+00 : f32
    %496 = vector.broadcast %cst_114 : f32 to vector<2x128xf32>
    %497 = arith.subf %496, %489 : vector<2x128xf32>
    %498 = arith.mulf %497, %495 : vector<2x128xf32>
    %499 = arith.mulf %489, %470 : vector<2x128xf32>
    %500 = arith.addf %498, %499 : vector<2x128xf32>
    %501 = vector.extract_strided_slice %315 {offsets = [6, 0, 0], sizes = [1, 2, 384], strides = [1, 1, 1]} : vector<8x2x384xf32> to vector<1x2x384xf32>
    %502 = vector.shape_cast %501 : vector<1x2x384xf32> to vector<2x384xf32>
    %cst_115 = arith.constant dense<0.000000e+00> : vector<2x384xf32>
    %503 = tpu.matmul %500, %316, %cst_115 {dimension_numbers = #tpu.dot_dimension_numbers<[1], [0], [0], [1], [0, 0, 1, 1], [], []>} : vector<2x128xf32>, vector<128x384xf32>, vector<2x384xf32> -> vector<2x384xf32>
    %504 = vector.extract_strided_slice %502 {offsets = [0, 0], sizes = [2, 128], strides = [1, 1]} : vector<2x384xf32> to vector<2x128xf32>
    %505 = vector.extract_strided_slice %503 {offsets = [0, 0], sizes = [2, 128], strides = [1, 1]} : vector<2x384xf32> to vector<2x128xf32>
    %506 = arith.addf %504, %505 : vector<2x128xf32>
    %507 = arith.negf %506 : vector<2x128xf32>
    %508 = math.exp %507 : vector<2x128xf32>
    %cst_116 = arith.constant 1.000000e+00 : f32
    %509 = vector.broadcast %cst_116 : f32 to vector<2x128xf32>
    %510 = arith.addf %509, %508 : vector<2x128xf32>
    %511 = arith.divf %509, %510 : vector<2x128xf32>
    %512 = vector.extract_strided_slice %502 {offsets = [0, 128], sizes = [2, 128], strides = [1, 1]} : vector<2x384xf32> to vector<2x128xf32>
    %513 = vector.extract_strided_slice %503 {offsets = [0, 128], sizes = [2, 128], strides = [1, 1]} : vector<2x384xf32> to vector<2x128xf32>
    %514 = arith.addf %512, %513 : vector<2x128xf32>
    %515 = arith.negf %514 : vector<2x128xf32>
    %516 = math.exp %515 : vector<2x128xf32>
    %cst_117 = arith.constant 1.000000e+00 : f32
    %517 = vector.broadcast %cst_117 : f32 to vector<2x128xf32>
    %518 = arith.addf %517, %516 : vector<2x128xf32>
    %519 = arith.divf %517, %518 : vector<2x128xf32>
    %520 = vector.extract_strided_slice %502 {offsets = [0, 256], sizes = [2, 128], strides = [1, 1]} : vector<2x384xf32> to vector<2x128xf32>
    %521 = vector.extract_strided_slice %503 {offsets = [0, 256], sizes = [2, 128], strides = [1, 1]} : vector<2x384xf32> to vector<2x128xf32>
    %522 = arith.addf %521, %319 : vector<2x128xf32>
    %523 = arith.mulf %511, %522 : vector<2x128xf32>
    %524 = arith.addf %520, %523 : vector<2x128xf32>
    %525 = math.tanh %524 : vector<2x128xf32>
    %cst_118 = arith.constant 1.000000e+00 : f32
    %526 = vector.broadcast %cst_118 : f32 to vector<2x128xf32>
    %527 = arith.subf %526, %519 : vector<2x128xf32>
    %528 = arith.mulf %527, %525 : vector<2x128xf32>
    %529 = arith.mulf %519, %500 : vector<2x128xf32>
    %530 = arith.addf %528, %529 : vector<2x128xf32>
    %531 = vector.extract_strided_slice %315 {offsets = [7, 0, 0], sizes = [1, 2, 384], strides = [1, 1, 1]} : vector<8x2x384xf32> to vector<1x2x384xf32>
    %532 = vector.shape_cast %531 : vector<1x2x384xf32> to vector<2x384xf32>
    %cst_119 = arith.constant dense<0.000000e+00> : vector<2x384xf32>
    %533 = tpu.matmul %530, %316, %cst_119 {dimension_numbers = #tpu.dot_dimension_numbers<[1], [0], [0], [1], [0, 0, 1, 1], [], []>} : vector<2x128xf32>, vector<128x384xf32>, vector<2x384xf32> -> vector<2x384xf32>
    %534 = vector.extract_strided_slice %532 {offsets = [0, 0], sizes = [2, 128], strides = [1, 1]} : vector<2x384xf32> to vector<2x128xf32>
    %535 = vector.extract_strided_slice %533 {offsets = [0, 0], sizes = [2, 128], strides = [1, 1]} : vector<2x384xf32> to vector<2x128xf32>
    %536 = arith.addf %534, %535 : vector<2x128xf32>
    %537 = arith.negf %536 : vector<2x128xf32>
    %538 = math.exp %537 : vector<2x128xf32>
    %cst_120 = arith.constant 1.000000e+00 : f32
    %539 = vector.broadcast %cst_120 : f32 to vector<2x128xf32>
    %540 = arith.addf %539, %538 : vector<2x128xf32>
    %541 = arith.divf %539, %540 : vector<2x128xf32>
    %542 = vector.extract_strided_slice %532 {offsets = [0, 128], sizes = [2, 128], strides = [1, 1]} : vector<2x384xf32> to vector<2x128xf32>
    %543 = vector.extract_strided_slice %533 {offsets = [0, 128], sizes = [2, 128], strides = [1, 1]} : vector<2x384xf32> to vector<2x128xf32>
    %544 = arith.addf %542, %543 : vector<2x128xf32>
    %545 = arith.negf %544 : vector<2x128xf32>
    %546 = math.exp %545 : vector<2x128xf32>
    %cst_121 = arith.constant 1.000000e+00 : f32
    %547 = vector.broadcast %cst_121 : f32 to vector<2x128xf32>
    %548 = arith.addf %547, %546 : vector<2x128xf32>
    %549 = arith.divf %547, %548 : vector<2x128xf32>
    %550 = vector.extract_strided_slice %532 {offsets = [0, 256], sizes = [2, 128], strides = [1, 1]} : vector<2x384xf32> to vector<2x128xf32>
    %551 = vector.extract_strided_slice %533 {offsets = [0, 256], sizes = [2, 128], strides = [1, 1]} : vector<2x384xf32> to vector<2x128xf32>
    %552 = arith.addf %551, %319 : vector<2x128xf32>
    %553 = arith.mulf %541, %552 : vector<2x128xf32>
    %554 = arith.addf %550, %553 : vector<2x128xf32>
    %555 = math.tanh %554 : vector<2x128xf32>
    %cst_122 = arith.constant 1.000000e+00 : f32
    %556 = vector.broadcast %cst_122 : f32 to vector<2x128xf32>
    %557 = arith.subf %556, %549 : vector<2x128xf32>
    %558 = arith.mulf %557, %555 : vector<2x128xf32>
    %559 = arith.mulf %549, %530 : vector<2x128xf32>
    %560 = arith.addf %558, %559 : vector<2x128xf32>
    %c0_123 = arith.constant 0 : index
    %c0_124 = arith.constant 0 : index
    %561 = vector.load %arg10[%c0_123, %c0_124] : memref<128x2xf32, #tpu.memory_space<vmem>>, vector<128x2xf32>
    %cst_125 = arith.constant dense<0.000000e+00> : vector<2x2xf32>
    %562 = tpu.matmul %560, %561, %cst_125 {dimension_numbers = #tpu.dot_dimension_numbers<[1], [0], [0], [1], [0, 0, 1, 1], [], []>} : vector<2x128xf32>, vector<128x2xf32>, vector<2x2xf32> -> vector<2x2xf32>
    %c0_126 = arith.constant 0 : index
    %c0_127 = arith.constant 0 : index
    %563 = vector.load %arg11[%c0_126, %c0_127] : memref<1x2xf32, #tpu.memory_space<vmem>>, vector<1x2xf32>
    %564 = vector.broadcast %563 : vector<1x2xf32> to vector<2x2xf32>
    %565 = arith.addf %562, %564 : vector<2x2xf32>
    %c0_128 = arith.constant 0 : index
    %c0_129 = arith.constant 0 : index
    %566 = vector.load %arg12[%c0_128, %c0_129] : memref<2x2xf32, #tpu.memory_space<vmem>>, vector<2x2xf32>
    tpu.vector_store %arg12[%c0_128, %c0_129], %565 {strides = array<i32>} : memref<2x2xf32, #tpu.memory_space<vmem>>, vector<2x2xf32>,
    return
  }
}

</mosaic_0001>

<llo_original>
// kernel: gru_forward.1
$region0: #{gru_forward.1}
  #allocation0 [shape = 'u32[]', space=smem, size = 0x4, offset = 0x4, fixed_abs, tag = 'smem constant byte address 0x4 - core index']
  #allocation1 [shape = 'u32[144,128]{1,0:T(1,128)}', space=vmem, size = 0x12000, scoped, tag = 'internal scratch']
  %s0 = inlined_call_operand.vmem [shape: s32[2,8], index: 0, kind: input, shape index: {}]
  %s1 = inlined_call_operand.vmem [shape: f32[100,32], index: 1, kind: input, shape index: {}]
  %s2 = inlined_call_operand.vmem [shape: f32[32,384], index: 2, kind: input, shape index: {}]
  %s3 = inlined_call_operand.hbm [shape: f32[128,384], index: 3, kind: input, shape index: {}]
  %s4 = inlined_call_operand.vmem [shape: f32[1,384], index: 4, kind: input, shape index: {}]
  %s5 = inlined_call_operand.vmem [shape: f32[1,128], index: 5, kind: input, shape index: {}]
  %s6 = inlined_call_operand.hbm [shape: f32[128,384], index: 6, kind: input, shape index: {}]
  %s7 = inlined_call_operand.hbm [shape: f32[128,384], index: 7, kind: input, shape index: {}]
  %s8 = inlined_call_operand.vmem [shape: f32[1,384], index: 8, kind: input, shape index: {}]
  %s9 = inlined_call_operand.vmem [shape: f32[1,128], index: 9, kind: input, shape index: {}]
  %s10 = inlined_call_operand.vmem [shape: f32[128,2], index: 10, kind: input, shape index: {}]
  %s11 = inlined_call_operand.vmem [shape: f32[1,2], index: 11, kind: input, shape index: {}]
  %s12 = inlined_call_operand.hbm [shape: f32[2,2], index: 12, kind: output, shape index: {}]
  %s13 = sld [smem:[#allocation0]]
  $region74: #{gru_forward.1} parent=0
    _
  %s15 = ssub.s32 1, %s13
  %s16 = scalar_select 0, %s15, %s13
  $region1: #{gru_forward.1} parent=0
    #allocation2 [shape = 'u8[1024]{0}', space=smem, size = 0x400, scoped, tag = 'input window, operand 0, single buffered']
    #allocation3 [shape = 's32[1]{0}', space=sflag, size = 0x4, scoped, tag = 'scoped memory for gru_forward.1']
    #allocation4 [shape = 's32[1]{0}', space=sflag, size = 0x4, scoped, tag = 'scoped memory for gru_forward.1']
    #allocation5 [shape = 's32[1]{0}', space=sflag, size = 0x4, scoped, tag = 'scoped memory for gru_forward.1']
    #allocation6 [shape = 'u8[196608]{0}', space=vmem, size = 0x30000, scoped, tag = 'input window, operand 3, single buffered']
    #allocation7 [shape = 'u8[196608]{0}', space=vmem, size = 0x30000, scoped, tag = 'input window, operand 6, single buffered']
    #allocation8 [shape = 's32[1]{0}', space=sflag, size = 0x4, scoped, tag = 'scoped memory for gru_forward.1']
    #allocation9 [shape = 'u8[196608]{0}', space=vmem, size = 0x30000, scoped, tag = 'input window, operand 7, single buffered']
    #allocation10 [shape = 'u8[1024]{0}', space=vmem, size = 0x400, scoped, tag = 'output window, operand 0, single buffered']
    %17 = vsyncpa [#allocation5], 0
    %18 = vsyncpa [#allocation3], 0
    %19 = vsyncpa [#allocation8], 0
    %20 = vsyncpa [#allocation4], 0
    // Predicated region
    $region2: #{gru_forward.1} parent=1 // pred_check
      _
    $region3: #{gru_forward.1} parent=1 // pred_check_branch
      %22 = sbr.rel (0) target = $region5
    $region4: #{gru_forward.1} parent=1 // pred_region
      %s24 = ssub.s32 32, 32
      %25 = vsyncadd [#allocation5], %s24
      %s27 = sshll.u32 %s0, 4
      %s28 = int_to_ptr.vmem [resolvable:$true] %s27
      %30 = dma.vmem_to_smem %s28, 32, [#allocation2], [#allocation5]
    $region5: #{gru_forward.1} parent=1 // pred_fallthru
      _
    // Predicated region
    $region6: #{gru_forward.1} parent=1 // pred_check
      _
    $region7: #{gru_forward.1} parent=1 // pred_check_branch
      %32 = sbr.rel (0) target = $region9
    $region8: #{gru_forward.1} parent=1 // pred_region
      _
    $region9: #{gru_forward.1} parent=1 // pred_fallthru
      _
    // Predicated region
    $region10: #{gru_forward.1} parent=1 // pred_check
      _
    $region11: #{gru_forward.1} parent=1 // pred_check_branch
      %34 = sbr.rel (0) target = $region13
    $region12: #{gru_forward.1} parent=1 // pred_region
      _
    $region13: #{gru_forward.1} parent=1 // pred_fallthru
      _
    // Predicated region
    $region14: #{gru_forward.1} parent=1 // pred_check
      _
    $region15: #{gru_forward.1} parent=1 // pred_check_branch
      %36 = sbr.rel (0) target = $region17
    $region16: #{gru_forward.1} parent=1 // pred_region
      %s38 = ssub.s32 6144, 6144
      %39 = vsyncadd [#allocation3], %s38
      %s40 = sshll.u32 [#allocation6], 4
      %s41 = int_to_ptr.vmem [resolvable:$true] %s40
      %46 = dma.hbm_to_vmem [thread:$0]  %s3, 6144, %s41, [#allocation3], 384, 384, 24
    $region17: #{gru_forward.1} parent=1 // pred_fallthru
      _
    // Predicated region
    $region18: #{gru_forward.1} parent=1 // pred_check
      _
    $region19: #{gru_forward.1} parent=1 // pred_check_branch
      %48 = sbr.rel (0) target = $region21
    $region20: #{gru_forward.1} parent=1 // pred_region
      _
    $region21: #{gru_forward.1} parent=1 // pred_fallthru
      _
    // Predicated region
    $region22: #{gru_forward.1} parent=1 // pred_check
      _
    $region23: #{gru_forward.1} parent=1 // pred_check_branch
      %50 = sbr.rel (0) target = $region25
    $region24: #{gru_forward.1} parent=1 // pred_region
      _
    $region25: #{gru_forward.1} parent=1 // pred_fallthru
      _
    // Predicated region
    $region26: #{gru_forward.1} parent=1 // pred_check
      _
    $region27: #{gru_forward.1} parent=1 // pred_check_branch
      %52 = sbr.rel (0) target = $region29
    $region28: #{gru_forward.1} parent=1 // pred_region
      %s54 = ssub.s32 6144, 6144
      %55 = vsyncadd [#allocation8], %s54
      %s56 = sshll.u32 [#allocation7], 4
      %s57 = int_to_ptr.vmem [resolvable:$true] %s56
      %62 = dma.hbm_to_vmem [thread:$0]  %s6, 6144, %s57, [#allocation8], 384, 384, 24
    $region29: #{gru_forward.1} parent=1 // pred_fallthru
      _
    // Predicated region
    $region30: #{gru_forward.1} parent=1 // pred_check
      _
    $region31: #{gru_forward.1} parent=1 // pred_check_branch
      %64 = sbr.rel (0) target = $region33
    $region32: #{gru_forward.1} parent=1 // pred_region
      %s66 = ssub.s32 6144, 6144
      %67 = vsyncadd [#allocation8], %s66
      %s68 = sshll.u32 [#allocation9], 4
      %s69 = int_to_ptr.vmem [resolvable:$true] %s68
      %74 = dma.hbm_to_vmem [thread:$0]  %s7, 6144, %s69, [#allocation8], 384, 384, 24
    $region33: #{gru_forward.1} parent=1 // pred_fallthru
      _
    // Predicated region
    $region34: #{gru_forward.1} parent=1 // pred_check
      _
    $region35: #{gru_forward.1} parent=1 // pred_check_branch
      %76 = sbr.rel (0) target = $region37
    $region36: #{gru_forward.1} parent=1 // pred_region
      _
    $region37: #{gru_forward.1} parent=1 // pred_fallthru
      _
    // Predicated region
    $region38: #{gru_forward.1} parent=1 // pred_check
      _
    $region39: #{gru_forward.1} parent=1 // pred_check_branch
      %78 = sbr.rel (0) target = $region41
    $region40: #{gru_forward.1} parent=1 // pred_region
      _
    $region41: #{gru_forward.1} parent=1 // pred_fallthru
      _
    // Predicated region
    $region42: #{gru_forward.1} parent=1 // pred_check
      _
    $region43: #{gru_forward.1} parent=1 // pred_check_branch
      %80 = sbr.rel (0) target = $region45
    $region44: #{gru_forward.1} parent=1 // pred_region
      _
    $region45: #{gru_forward.1} parent=1 // pred_fallthru
      _
    // Predicated region
    $region46: #{gru_forward.1} parent=1 // pred_check
      _
    $region47: #{gru_forward.1} parent=1 // pred_check_branch
      %82 = sbr.rel (0) target = $region49
    $region48: #{gru_forward.1} parent=1 // pred_region
      _
    $region49: #{gru_forward.1} parent=1 // pred_fallthru
      _
    // Predicated region
    $region50: #{gru_forward.1} parent=1 // pred_check
      _
    $region51: #{gru_forward.1} parent=1 // pred_check_branch
      %84 = sbr.rel (0) target = $region53
    $region52: #{gru_forward.1} parent=1 // pred_region
      %85 = dma.done [#allocation5], 32
    $region53: #{gru_forward.1} parent=1 // pred_fallthru
      _
    // Predicated region
    $region54: #{gru_forward.1} parent=1 // pred_check
      _
    $region55: #{gru_forward.1} parent=1 // pred_check_branch
      %87 = sbr.rel (0) target = $region57
    $region56: #{gru_forward.1} parent=1 // pred_region
      %88 = dma.done [#allocation3], 6144
    $region57: #{gru_forward.1} parent=1 // pred_fallthru
      _
    // Predicated region
    $region58: #{gru_forward.1} parent=1 // pred_check
      _
    $region59: #{gru_forward.1} parent=1 // pred_check_branch
      %90 = sbr.rel (0) target = $region61
    $region60: #{gru_forward.1} parent=1 // pred_region
      %91 = dma.done [#allocation8], 6144
    $region61: #{gru_forward.1} parent=1 // pred_fallthru
      _
    // Predicated region
    $region62: #{gru_forward.1} parent=1 // pred_check
      _
    $region63: #{gru_forward.1} parent=1 // pred_check_branch
      %93 = sbr.rel (0) target = $region65
    $region64: #{gru_forward.1} parent=1 // pred_region
      %94 = dma.done [#allocation8], 6144
    $region65: #{gru_forward.1} parent=1 // pred_fallthru
      _
    %95 = sfence
    %s96 = sld [smem:[#allocation2]]
    %s97 = scalar_lea.vmem %s1, %s96
    %v98 = vld [vmem:[%s97] sm:$0x1]
    %s99 = sld [smem:[#allocation2 + $0x80]]
    %s100 = scalar_lea.vmem %s1, %s99
    %v101 = vld [vmem:[%s100] sm:$0x1]
    %s102 = sld [smem:[#allocation2 + $0x1]]
    %s103 = scalar_lea.vmem %s1, %s102
    %v104 = vld [vmem:[%s103] sm:$0x1]
    %s105 = sld [smem:[#allocation2 + $0x81]]
    %s106 = scalar_lea.vmem %s1, %s105
    %v107 = vld [vmem:[%s106] sm:$0x1]
    %s108 = sld [smem:[#allocation2 + $0x2]]
    %s109 = scalar_lea.vmem %s1, %s108
    %v110 = vld [vmem:[%s109] sm:$0x1]
    %s111 = sld [smem:[#allocation2 + $0x82]]
    %s112 = scalar_lea.vmem %s1, %s111
    %v113 = vld [vmem:[%s112] sm:$0x1]
    %s114 = sld [smem:[#allocation2 + $0x3]]
    %s115 = scalar_lea.vmem %s1, %s114
    %v116 = vld [vmem:[%s115] sm:$0x1]
    %s117 = sld [smem:[#allocation2 + $0x83]]
    %s118 = scalar_lea.vmem %s1, %s117
    %v119 = vld [vmem:[%s118] sm:$0x1]
    %s120 = sld [smem:[#allocation2 + $0x4]]
    %s121 = scalar_lea.vmem %s1, %s120
    %v122 = vld [vmem:[%s121] sm:$0x1]
    %s123 = sld [smem:[#allocation2 + $0x84]]
    %s124 = scalar_lea.vmem %s1, %s123
    %v125 = vld [vmem:[%s124] sm:$0x1]
    %s126 = sld [smem:[#allocation2 + $0x5]]
    %s127 = scalar_lea.vmem %s1, %s126
    %v128 = vld [vmem:[%s127] sm:$0x1]
    %s129 = sld [smem:[#allocation2 + $0x85]]
    %s130 = scalar_lea.vmem %s1, %s129
    %v131 = vld [vmem:[%s130] sm:$0x1]
    %s132 = sld [smem:[#allocation2 + $0x6]]
    %s133 = scalar_lea.vmem %s1, %s132
    %v134 = vld [vmem:[%s133] sm:$0x1]
    %s135 = sld [smem:[#allocation2 + $0x86]]
    %s136 = scalar_lea.vmem %s1, %s135
    %v137 = vld [vmem:[%s136] sm:$0x1]
    %s138 = sld [smem:[#allocation2 + $0x7]]
    %s139 = scalar_lea.vmem %s1, %s138
    %v140 = vld [vmem:[%s139] sm:$0x1]
    %s141 = sld [smem:[#allocation2 + $0x87]]
    %s142 = scalar_lea.vmem %s1, %s141
    %v143 = vld [vmem:[%s142] sm:$0x1]
    %v145 = vrot.slane %v101, 7
    %v148 = vrot.slane %v104, 6
    %v151 = vrot.slane %v107, 5
    %v154 = vrot.slane %v110, 4
    %v157 = vrot.slane %v113, 3
    %v160 = vrot.slane %v116, 2
    %v163 = vrot.slane %v119, 1
    %v166 = vrot.slane %v125, 7
    %v169 = vrot.slane %v128, 6
    %v172 = vrot.slane %v131, 5
    %v175 = vrot.slane %v134, 4
    %v178 = vrot.slane %v137, 3
    %v181 = vrot.slane %v140, 2
    %v184 = vrot.slane %v143, 1
    %vm186 = vcmask 1040384
    %v187 = vsel %vm186, %v98, %v145
    %vm188 = vcmask 1041408
    %v189 = vsel %vm188, %v187, %v148
    %vm190 = vcmask 1042432
    %v191 = vsel %vm190, %v189, %v151
    %vm192 = vcmask 1043456
    %v193 = vsel %vm192, %v191, %v154
    %vm194 = vcmask 1044480
    %v195 = vsel %vm194, %v193, %v157
    %vm196 = vcmask 1045504
    %v197 = vsel %vm196, %v195, %v160
    %vm198 = vcmask 1046528
    %v199 = vsel %vm198, %v197, %v163
    %v200 = vsel %vm186, %v122, %v166
    %v201 = vsel %vm188, %v200, %v169
    %v202 = vsel %vm190, %v201, %v172
    %v203 = vsel %vm192, %v202, %v175
    %v204 = vsel %vm194, %v203, %v178
    %v205 = vsel %vm196, %v204, %v181
    %v206 = vsel %vm198, %v205, %v184
    %v207 = vld [vmem:[%s2] sm:$0xff]
    %v208 = vld [vmem:[%s2 + $0x8] sm:$0xff]
    %v209 = vld [vmem:[%s2 + $0x10] sm:$0xff]
    %v210 = vld [vmem:[%s2 + $0x18] sm:$0xff]
    %v211 = vld [vmem:[%s2 + $0x20] sm:$0xff]
    %v212 = vld [vmem:[%s2 + $0x28] sm:$0xff]
    %v213 = vld [vmem:[%s2 + $0x30] sm:$0xff]
    %v214 = vld [vmem:[%s2 + $0x38] sm:$0xff]
    %v215 = vld [vmem:[%s2 + $0x40] sm:$0xff]
    %v216 = vld [vmem:[%s2 + $0x48] sm:$0xff]
    %v217 = vld [vmem:[%s2 + $0x50] sm:$0xff]
    %v218 = vld [vmem:[%s2 + $0x58] sm:$0xff]
    %v219 = vld [vmem:[%s4] sm:$0x7]
    %v221 = vlaneseq
    %v222 = vshrl.u32 %v221, 7
    %v223 = vsub.s32 0, %v222
    %v224 = vrot.slane %v219, %v223
    %v225 = vlaneseq
    %v226 = vshrl.u32 %v225, 7
    %v227 = vsub.s32 1, %v226
    %v228 = vrot.slane %v219, %v227
    %v229 = vlaneseq
    %v230 = vshrl.u32 %v229, 7
    %v231 = vsub.s32 2, %v230
    %v232 = vrot.slane %v219, %v231
    %vm236 = vcmask 261120
    %v238 = vsel %vm236, %v199, 0
    %v241 = vsel %vm236, %v206, 0
    %243 = vmatprep.subr.mxu0 0.0
    %244 = vmatpush1.msra.mxu0 0.0
    %245 = vmatprep.subr.mxu0 0.0
    %246 = vmatpush1.msra.mxu0 0.0
    %247 = vmatprep.subr.mxu0 0.0
    %248 = vmatpush1.msra.mxu0 0.0
    %249 = vmatprep.subr.mxu0 0.0
    %250 = vmatpush1.msra.mxu0 0.0
    %251 = vmatprep.subr.mxu0 0.0
    %252 = vmatpush1.msra.mxu0 0.0
    %253 = vmatprep.subr.mxu0 0.0
    %254 = vmatpush1.msra.mxu0 0.0
    %255 = vmatprep.subr.mxu0 0.0
    %256 = vmatpush1.msra.mxu0 0.0
    %257 = vmatprep.subr.mxu0 0.0
    %258 = vmatpush1.msra.mxu0 0.0
    %259 = vmatprep.subr.mxu0 0.0
    %260 = vmatpush1.msra.mxu0 0.0
    %261 = vmatprep.subr.mxu0 0.0
    %262 = vmatpush1.msra.mxu0 0.0
    %263 = vmatprep.subr.mxu0 0.0
    %264 = vmatpush1.msra.mxu0 0.0
    %265 = vmatprep.subr.mxu0 0.0
    %266 = vmatpush1.msra.mxu0 0.0
    %267 = vmatprep.subr.mxu0 %v217
    %268 = vmatpush1.msra.mxu0 %v216
    %269 = vmatprep.subr.mxu0 %v214
    %270 = vmatpush1.msra.mxu0 %v213
    %271 = vmatprep.subr.mxu0 %v211
    %272 = vmatpush1.msra.mxu0 %v210
    %273 = vmatprep.subr.mxu0 %v208
    %274 = vmatpush1.msra.mxu0 %v207
    %275 = vmatprep.subr.mxu0 0.0
    %276 = vmatpush2.msra.mxu0 0.0
    %277 = vmatprep.subr.mxu0 0.0
    %278 = vmatpush2.msra.mxu0 0.0
    %279 = vmatprep.subr.mxu0 0.0
    %280 = vmatpush2.msra.mxu0 0.0
    %281 = vmatprep.subr.mxu0 0.0
    %282 = vmatpush2.msra.mxu0 0.0
    %283 = vmatprep.subr.mxu0 0.0
    %284 = vmatpush2.msra.mxu0 0.0
    %285 = vmatprep.subr.mxu0 0.0
    %286 = vmatpush2.msra.mxu0 0.0
    %287 = vmatprep.subr.mxu0 0.0
    %288 = vmatpush2.msra.mxu0 0.0
    %289 = vmatprep.subr.mxu0 0.0
    %290 = vmatpush2.msra.mxu0 0.0
    %291 = vmatprep.subr.mxu0 0.0
    %292 = vmatpush2.msra.mxu0 0.0
    %293 = vmatprep.subr.mxu0 0.0
    %294 = vmatpush2.msra.mxu0 0.0
    %295 = vmatprep.subr.mxu0 0.0
    %296 = vmatpush2.msra.mxu0 0.0
    %297 = vmatprep.subr.mxu0 0.0
    %298 = vmatpush2.msra.mxu0 0.0
    %299 = vmatprep.subr.mxu0 0.0
    %300 = vmatpush2.msra.mxu0 0.0
    %301 = vmatprep.subr.mxu0 0.0
    %302 = vmatpush2.msra.mxu0 0.0
    %303 = vmatprep.subr.mxu0 0.0
    %304 = vmatpush2.msra.mxu0 0.0
    %305 = vmatprep.subr.mxu0 0.0
    %306 = vmatpush2.msra.mxu0 0.0
    %307 = vmatprep.mubr.f32.mxu0 0.0
    %308 = vmatmul.mubr.f32.gmra.mxu0 %v238
    %v309 = vpop.f32.mrf.mxu0
    %v310 = vadd.f32 %v224, %v309
    %v311 = vpop.f32.mrf.mxu0
    %v312 = vadd.f32 %v228, %v311
    %313 = vmatprep.mubr.f32.mxu0 0.0
    %314 = vmatmul.mubr.f32.gmra.mxu0 %v241
    %v315 = vpop.f32.mrf.mxu0
    %v316 = vadd.f32 %v224, %v315
    %v317 = vpop.f32.mrf.mxu0
    %v318 = vadd.f32 %v228, %v317
    %319 = vdwg.mxu0
    %320 = vmatprep.subr.mxu0 0.0
    %321 = vmatpush1.msra.mxu0 0.0
    %322 = vmatprep.subr.mxu0 0.0
    %323 = vmatpush1.msra.mxu0 0.0
    %324 = vmatprep.subr.mxu0 0.0
    %325 = vmatpush1.msra.mxu0 0.0
    %326 = vmatprep.subr.mxu0 0.0
    %327 = vmatpush1.msra.mxu0 0.0
    %328 = vmatprep.subr.mxu0 0.0
    %329 = vmatpush1.msra.mxu0 0.0
    %330 = vmatprep.subr.mxu0 0.0
    %331 = vmatpush1.msra.mxu0 0.0
    %332 = vmatprep.subr.mxu0 0.0
    %333 = vmatpush1.msra.mxu0 0.0
    %334 = vmatprep.subr.mxu0 0.0
    %335 = vmatpush1.msra.mxu0 0.0
    %336 = vmatprep.subr.mxu0 0.0
    %337 = vmatpush1.msra.mxu0 0.0
    %338 = vmatprep.subr.mxu0 0.0
    %339 = vmatpush1.msra.mxu0 0.0
    %340 = vmatprep.subr.mxu0 0.0
    %341 = vmatpush1.msra.mxu0 0.0
    %342 = vmatprep.subr.mxu0 0.0
    %343 = vmatpush1.msra.mxu0 0.0
    %344 = vmatprep.subr.mxu0 0.0
    %345 = vmatpush1.msra.mxu0 %v218
    %346 = vmatprep.subr.mxu0 0.0
    %347 = vmatpush1.msra.mxu0 %v215
    %348 = vmatprep.subr.mxu0 0.0
    %349 = vmatpush1.msra.mxu0 %v212
    %350 = vmatprep.subr.mxu0 0.0
    %351 = vmatpush1.msra.mxu0 %v209
    %352 = vmatprep.subr.mxu0 0.0
    %353 = vmatpush2.msra.mxu0 0.0
    %354 = vmatprep.subr.mxu0 0.0
    %355 = vmatpush2.msra.mxu0 0.0
    %356 = vmatprep.subr.mxu0 0.0
    %357 = vmatpush2.msra.mxu0 0.0
    %358 = vmatprep.subr.mxu0 0.0
    %359 = vmatpush2.msra.mxu0 0.0
    %360 = vmatprep.subr.mxu0 0.0
    %361 = vmatpush2.msra.mxu0 0.0
    %362 = vmatprep.subr.mxu0 0.0
    %363 = vmatpush2.msra.mxu0 0.0
    %364 = vmatprep.subr.mxu0 0.0
    %365 = vmatpush2.msra.mxu0 0.0
    %366 = vmatprep.subr.mxu0 0.0
    %367 = vmatpush2.msra.mxu0 0.0
    %368 = vmatprep.subr.mxu0 0.0
    %369 = vmatpush2.msra.mxu0 0.0
    %370 = vmatprep.subr.mxu0 0.0
    %371 = vmatpush2.msra.mxu0 0.0
    %372 = vmatprep.subr.mxu0 0.0
    %373 = vmatpush2.msra.mxu0 0.0
    %374 = vmatprep.subr.mxu0 0.0
    %375 = vmatpush2.msra.mxu0 0.0
    %376 = vmatprep.subr.mxu0 0.0
    %377 = vmatpush2.msra.mxu0 0.0
    %378 = vmatprep.subr.mxu0 0.0
    %379 = vmatpush2.msra.mxu0 0.0
    %380 = vmatprep.subr.mxu0 0.0
    %381 = vmatpush2.msra.mxu0 0.0
    %382 = vmatprep.subr.mxu0 0.0
    %383 = vmatpush2.msra.mxu0 0.0
    %384 = vmatprep.mubr.f32.mxu0 0.0
    %385 = vmatmul.mubr.f32.gmra.mxu0 %v238
    %v386 = vpop.f32.mrf.mxu0
    %v387 = vadd.f32 %v232, %v386
    %v388 = vpop.f32.mrf.mxu0
    %389 = vmatprep.mubr.f32.mxu0 0.0
    %390 = vmatmul.mubr.f32.gmra.mxu0 %v241
    %v391 = vpop.f32.mrf.mxu0
    %v392 = vadd.f32 %v232, %v391
    %v393 = vpop.f32.mrf.mxu0
    %394 = vdwg.mxu0
    %v401 = vcombine.low %v310, %v312
    %v402 = vcombine.high %v310, %v312
    %v403 = vcombine.high %v387, %v387
    %v405 = vunpack.c.l.s4 1983009808
    %v406 = vunpack.c.0.s8 %v405
    %v407 = vlaneseq
    %v408 = vshrl.u32 %v407, 7
    %v409 = vsub.s32 %v406, %v408
    %v410 = vrot.slane %v401, %v409
    %v412 = vunpack.c.l.s4 1983009808
    %v413 = vunpack.c.0.s8 %v412
    %v414 = vlaneseq
    %v415 = vshrl.u32 %v414, 7
    %v416 = vsub.s32 %v413, %v415
    %v417 = vrot.slane %v402, %v416
    %v419 = vunpack.c.l.s4 1983009808
    %v420 = vunpack.c.0.s8 %v419
    %v421 = vlaneseq
    %v422 = vshrl.u32 %v421, 7
    %v423 = vsub.s32 %v420, %v422
    %v424 = vrot.slane %v387, %v423
    %v426 = vunpack.c.l.s4 1983009808
    %v427 = vunpack.c.0.s8 %v426
    %v428 = vlaneseq
    %v429 = vshrl.u32 %v428, 7
    %v430 = vsub.s32 %v427, %v429
    %v431 = vrot.slane %v403, %v430
    %v432 = vcombine.low %v410, %v424
    %v433 = vcombine.high %v410, %v424
    %v434 = vcombine.low %v417, %v431
    %v435 = vcombine.high %v417, %v431
    %v436 = vcombine.low %v316, %v318
    %v437 = vcombine.high %v316, %v318
    %v438 = vcombine.high %v392, %v392
    %v440 = vunpack.c.l.s4 1983009808
    %v441 = vunpack.c.0.s8 %v440
    %v442 = vlaneseq
    %v443 = vshrl.u32 %v442, 7
    %v444 = vsub.s32 %v441, %v443
    %v445 = vrot.slane %v436, %v444
    %v447 = vunpack.c.l.s4 1983009808
    %v448 = vunpack.c.0.s8 %v447
    %v449 = vlaneseq
    %v450 = vshrl.u32 %v449, 7
    %v451 = vsub.s32 %v448, %v450
    %v452 = vrot.slane %v437, %v451
    %v454 = vunpack.c.l.s4 1983009808
    %v455 = vunpack.c.0.s8 %v454
    %v456 = vlaneseq
    %v457 = vshrl.u32 %v456, 7
    %v458 = vsub.s32 %v455, %v457
    %v459 = vrot.slane %v392, %v458
    %v461 = vunpack.c.l.s4 1983009808
    %v462 = vunpack.c.0.s8 %v461
    %v463 = vlaneseq
    %v464 = vshrl.u32 %v463, 7
    %v465 = vsub.s32 %v462, %v464
    %v466 = vrot.slane %v438, %v465
    %v467 = vcombine.low %v445, %v459
    %v468 = vcombine.high %v445, %v459
    %v469 = vcombine.low %v452, %v466
    %v470 = vcombine.high %v452, %v466
    %v479 = vld [vmem:[#allocation6] sm:$0xff]
    %v480 = vld [vmem:[#allocation6 + $0x8] sm:$0xff]
    %v481 = vld [vmem:[#allocation6 + $0x10] sm:$0xff]
    %v482 = vld [vmem:[#allocation6 + $0x18] sm:$0xff]
    %v483 = vld [vmem:[#allocation6 + $0x20] sm:$0xff]
    %v484 = vld [vmem:[#allocation6 + $0x28] sm:$0xff]
    %v485 = vld [vmem:[#allocation6 + $0x30] sm:$0xff]
    %v486 = vld [vmem:[#allocation6 + $0x38] sm:$0xff]
    %v487 = vld [vmem:[#allocation6 + $0x40] sm:$0xff]
    %v488 = vld [vmem:[#allocation6 + $0x48] sm:$0xff]
    %v489 = vld [vmem:[#allocation6 + $0x50] sm:$0xff]
    %v490 = vld [vmem:[#allocation6 + $0x58] sm:$0xff]
    %v491 = vld [vmem:[#allocation6 + $0x60] sm:$0xff]
    %v492 = vld [vmem:[#allocation6 + $0x68] sm:$0xff]
    %v493 = vld [vmem:[#allocation6 + $0x70] sm:$0xff]
    %v494 = vld [vmem:[#allocation6 + $0x78] sm:$0xff]
    %v495 = vld [vmem:[#allocation6 + $0x80] sm:$0xff]
    %v496 = vld [vmem:[#allocation6 + $0x88] sm:$0xff]
    %v497 = vld [vmem:[#allocation6 + $0x90] sm:$0xff]
    %v498 = vld [vmem:[#allocation6 + $0x98] sm:$0xff]
    %v499 = vld [vmem:[#allocation6 + $0xa0] sm:$0xff]
    %v500 = vld [vmem:[#allocation6 + $0xa8] sm:$0xff]
    %v501 = vld [vmem:[#allocation6 + $0xb0] sm:$0xff]
    %v502 = vld [vmem:[#allocation6 + $0xb8] sm:$0xff]
    %v503 = vld [vmem:[#allocation6 + $0xc0] sm:$0xff]
    %v504 = vld [vmem:[#allocation6 + $0xc8] sm:$0xff]
    %v505 = vld [vmem:[#allocation6 + $0xd0] sm:$0xff]
    %v506 = vld [vmem:[#allocation6 + $0xd8] sm:$0xff]
    %v507 = vld [vmem:[#allocation6 + $0xe0] sm:$0xff]
    %v508 = vld [vmem:[#allocation6 + $0xe8] sm:$0xff]
    %v509 = vld [vmem:[#allocation6 + $0xf0] sm:$0xff]
    %v510 = vld [vmem:[#allocation6 + $0xf8] sm:$0xff]
    %v511 = vld [vmem:[#allocation6 + $0x100] sm:$0xff]
    %v512 = vld [vmem:[#allocation6 + $0x108] sm:$0xff]
    %v513 = vld [vmem:[#allocation6 + $0x110] sm:$0xff]
    %v514 = vld [vmem:[#allocation6 + $0x118] sm:$0xff]
    %v515 = vld [vmem:[#allocation6 + $0x120] sm:$0xff]
    %v516 = vld [vmem:[#allocation6 + $0x128] sm:$0xff]
    %v517 = vld [vmem:[#allocation6 + $0x130] sm:$0xff]
    %v518 = vld [vmem:[#allocation6 + $0x138] sm:$0xff]
    %v519 = vld [vmem:[#allocation6 + $0x140] sm:$0xff]
    %v520 = vld [vmem:[#allocation6 + $0x148] sm:$0xff]
    %v521 = vld [vmem:[#allocation6 + $0x150] sm:$0xff]
    %v522 = vld [vmem:[#allocation6 + $0x158] sm:$0xff]
    %v523 = vld [vmem:[#allocation6 + $0x160] sm:$0xff]
    %v524 = vld [vmem:[#allocation6 + $0x168] sm:$0xff]
    %v525 = vld [vmem:[#allocation6 + $0x170] sm:$0xff]
    %v526 = vld [vmem:[#allocation6 + $0x178] sm:$0xff]
    %v527 = vld [vmem:[%s5] sm:$0x1]
    %v529 = vlaneseq
    %v530 = vshrl.u32 %v529, 7
    %v531 = vsub.s32 0, %v530
    %v532 = vrot.slane %v527, %v531
    %534 = vmatprep.subr.mxu0 %v525
    %535 = vmatpush1.msra.mxu0 %v524
    %536 = vmatprep.subr.mxu0 %v522
    %537 = vmatpush1.msra.mxu0 %v521
    %538 = vmatprep.subr.mxu0 %v519
    %539 = vmatpush1.msra.mxu0 %v518
    %540 = vmatprep.subr.mxu0 %v516
    %541 = vmatpush1.msra.mxu0 %v515
    %542 = vmatprep.subr.mxu0 %v513
    %543 = vmatpush1.msra.mxu0 %v512
    %544 = vmatprep.subr.mxu0 %v510
    %545 = vmatpush1.msra.mxu0 %v509
    %546 = vmatprep.subr.mxu0 %v507
    %547 = vmatpush1.msra.mxu0 %v506
    %548 = vmatprep.subr.mxu0 %v504
    %549 = vmatpush1.msra.mxu0 %v503
    %550 = vmatprep.subr.mxu0 %v501
    %551 = vmatpush1.msra.mxu0 %v500
    %552 = vmatprep.subr.mxu0 %v498
    %553 = vmatpush1.msra.mxu0 %v497
    %554 = vmatprep.subr.mxu0 %v495
    %555 = vmatpush1.msra.mxu0 %v494
    %556 = vmatprep.subr.mxu0 %v492
    %557 = vmatpush1.msra.mxu0 %v491
    %558 = vmatprep.subr.mxu0 %v489
    %559 = vmatpush1.msra.mxu0 %v488
    %560 = vmatprep.subr.mxu0 %v486
    %561 = vmatpush1.msra.mxu0 %v485
    %562 = vmatprep.subr.mxu0 %v483
    %563 = vmatpush1.msra.mxu0 %v482
    %564 = vmatprep.subr.mxu0 %v480
    %565 = vmatpush1.msra.mxu0 %v479
    %566 = vmatprep.subr.mxu0 0.0
    %567 = vmatpush2.msra.mxu0 0.0
    %568 = vmatprep.subr.mxu0 0.0
    %569 = vmatpush2.msra.mxu0 0.0
    %570 = vmatprep.subr.mxu0 0.0
    %571 = vmatpush2.msra.mxu0 0.0
    %572 = vmatprep.subr.mxu0 0.0
    %573 = vmatpush2.msra.mxu0 0.0
    %574 = vmatprep.subr.mxu0 0.0
    %575 = vmatpush2.msra.mxu0 0.0
    %576 = vmatprep.subr.mxu0 0.0
    %577 = vmatpush2.msra.mxu0 0.0
    %578 = vmatprep.subr.mxu0 0.0
    %579 = vmatpush2.msra.mxu0 0.0
    %580 = vmatprep.subr.mxu0 0.0
    %581 = vmatpush2.msra.mxu0 0.0
    %582 = vmatprep.subr.mxu0 0.0
    %583 = vmatpush2.msra.mxu0 0.0
    %584 = vmatprep.subr.mxu0 0.0
    %585 = vmatpush2.msra.mxu0 0.0
    %586 = vmatprep.subr.mxu0 0.0
    %587 = vmatpush2.msra.mxu0 0.0
    %588 = vmatprep.subr.mxu0 0.0
    %589 = vmatpush2.msra.mxu0 0.0
    %590 = vmatprep.subr.mxu0 0.0
    %591 = vmatpush2.msra.mxu0 0.0
    %592 = vmatprep.subr.mxu0 0.0
    %593 = vmatpush2.msra.mxu0 0.0
    %594 = vmatprep.subr.mxu0 0.0
    %595 = vmatpush2.msra.mxu0 0.0
    %596 = vmatprep.subr.mxu0 0.0
    %597 = vmatpush2.msra.mxu0 0.0
    %598 = vmatprep.mubr.f32.mxu0 0.0
    %599 = vmatmul.mubr.f32.gmra.mxu0 0.0
    %v600 = vpop.f32.mrf.mxu0
    %v601 = vadd.f32 0.0, %v600
    %v602 = vpop.f32.mrf.mxu0
    %v603 = vadd.f32 0.0, %v602
    %604 = vdwg.mxu0
    %605 = vmatprep.subr.mxu0 0.0
    %606 = vmatpush1.msra.mxu0 %v526
    %607 = vmatprep.subr.mxu0 0.0
    %608 = vmatpush1.msra.mxu0 %v523
    %609 = vmatprep.subr.mxu0 0.0
    %610 = vmatpush1.msra.mxu0 %v520
    %611 = vmatprep.subr.mxu0 0.0
    %612 = vmatpush1.msra.mxu0 %v517
    %613 = vmatprep.subr.mxu0 0.0
    %614 = vmatpush1.msra.mxu0 %v514
    %615 = vmatprep.subr.mxu0 0.0
    %616 = vmatpush1.msra.mxu0 %v511
    %617 = vmatprep.subr.mxu0 0.0
    %618 = vmatpush1.msra.mxu0 %v508
    %619 = vmatprep.subr.mxu0 0.0
    %620 = vmatpush1.msra.mxu0 %v505
    %621 = vmatprep.subr.mxu0 0.0
    %622 = vmatpush1.msra.mxu0 %v502
    %623 = vmatprep.subr.mxu0 0.0
    %624 = vmatpush1.msra.mxu0 %v499
    %625 = vmatprep.subr.mxu0 0.0
    %626 = vmatpush1.msra.mxu0 %v496
    %627 = vmatprep.subr.mxu0 0.0
    %628 = vmatpush1.msra.mxu0 %v493
    %629 = vmatprep.subr.mxu0 0.0
    %630 = vmatpush1.msra.mxu0 %v490
    %631 = vmatprep.subr.mxu0 0.0
    %632 = vmatpush1.msra.mxu0 %v487
    %633 = vmatprep.subr.mxu0 0.0
    %634 = vmatpush1.msra.mxu0 %v484
    %635 = vmatprep.subr.mxu0 0.0
    %636 = vmatpush1.msra.mxu0 %v481
    %637 = vmatprep.subr.mxu0 0.0
    %638 = vmatpush2.msra.mxu0 0.0
    %639 = vmatprep.subr.mxu0 0.0
    %640 = vmatpush2.msra.mxu0 0.0
    %641 = vmatprep.subr.mxu0 0.0
    %642 = vmatpush2.msra.mxu0 0.0
    %643 = vmatprep.subr.mxu0 0.0
    %644 = vmatpush2.msra.mxu0 0.0
    %645 = vmatprep.subr.mxu0 0.0
    %646 = vmatpush2.msra.mxu0 0.0
    %647 = vmatprep.subr.mxu0 0.0
    %648 = vmatpush2.msra.mxu0 0.0
    %649 = vmatprep.subr.mxu0 0.0
    %650 = vmatpush2.msra.mxu0 0.0
    %651 = vmatprep.subr.mxu0 0.0
    %652 = vmatpush2.msra.mxu0 0.0
    %653 = vmatprep.subr.mxu0 0.0
    %654 = vmatpush2.msra.mxu0 0.0
    %655 = vmatprep.subr.mxu0 0.0
    %656 = vmatpush2.msra.mxu0 0.0
    %657 = vmatprep.subr.mxu0 0.0
    %658 = vmatpush2.msra.mxu0 0.0
    %659 = vmatprep.subr.mxu0 0.0
    %660 = vmatpush2.msra.mxu0 0.0
    %661 = vmatprep.subr.mxu0 0.0
    %662 = vmatpush2.msra.mxu0 0.0
    %663 = vmatprep.subr.mxu0 0.0
    %664 = vmatpush2.msra.mxu0 0.0
    %665 = vmatprep.subr.mxu0 0.0
    %666 = vmatpush2.msra.mxu0 0.0
    %667 = vmatprep.subr.mxu0 0.0
    %668 = vmatpush2.msra.mxu0 0.0
    %669 = vmatprep.mubr.f32.mxu0 0.0
    %670 = vmatmul.mubr.f32.gmra.mxu0 0.0
    %v671 = vpop.f32.mrf.mxu0
    %v672 = vadd.f32 0.0, %v671
    %v673 = vpop.f32.mrf.mxu0
    %674 = vdwg.mxu0
    %v675 = vadd.f32 %v432, %v601
    %v676 = vxor.u32 %v675, 2147483648
    %v677 = vmul.f32 %v676, 1.442695
    %v678 = vpow.pop %v677
    %v679 = vadd.f32 %v678, 1.0
    %v680 = vrcp.pop %v679
    %v681 = vmul.f32 1.0, %v680
    %v682 = vrot.slane %v432, 2
    %v684 = vadd.f32 %v682, %v603
    %v685 = vxor.u32 %v684, 2147483648
    %v686 = vmul.f32 %v685, 1.442695
    %v687 = vpow.pop %v686
    %v688 = vadd.f32 %v687, 1.0
    %v689 = vrcp.pop %v688
    %v690 = vmul.f32 1.0, %v689
    %v691 = vadd.f32 %v672, %v532
    %v692 = vmul.f32 %v681, %v691
    %v693 = vrot.slane %v432, 4
    %v695 = vadd.f32 %v693, %v692
    %v696 = vtanh.pop %v695
    %v697 = vsub.f32 1.0, %v690
    %v698 = vmul.f32 %v697, %v696
    %v699 = vmul.f32 %v690, 0.0
    %v700 = vadd.f32 %v698, %v699
    %701 = vmatprep.subr.mxu0 %v525
    %702 = vmatpush1.msra.mxu0 %v524
    %703 = vmatprep.subr.mxu0 %v522
    %704 = vmatpush1.msra.mxu0 %v521
    %705 = vmatprep.subr.mxu0 %v519
    %706 = vmatpush1.msra.mxu0 %v518
    %707 = vmatprep.subr.mxu0 %v516
    %708 = vmatpush1.msra.mxu0 %v515
    %709 = vmatprep.subr.mxu0 %v513
    %710 = vmatpush1.msra.mxu0 %v512
    %711 = vmatprep.subr.mxu0 %v510
    %712 = vmatpush1.msra.mxu0 %v509
    %713 = vmatprep.subr.mxu0 %v507
    %714 = vmatpush1.msra.mxu0 %v506
    %715 = vmatprep.subr.mxu0 %v504
    %716 = vmatpush1.msra.mxu0 %v503
    %717 = vmatprep.subr.mxu0 %v501
    %718 = vmatpush1.msra.mxu0 %v500
    %719 = vmatprep.subr.mxu0 %v498
    %720 = vmatpush1.msra.mxu0 %v497
    %721 = vmatprep.subr.mxu0 %v495
    %722 = vmatpush1.msra.mxu0 %v494
    %723 = vmatprep.subr.mxu0 %v492
    %724 = vmatpush1.msra.mxu0 %v491
    %725 = vmatprep.subr.mxu0 %v489
    %726 = vmatpush1.msra.mxu0 %v488
    %727 = vmatprep.subr.mxu0 %v486
    %728 = vmatpush1.msra.mxu0 %v485
    %729 = vmatprep.subr.mxu0 %v483
    %730 = vmatpush1.msra.mxu0 %v482
    %731 = vmatprep.subr.mxu0 %v480
    %732 = vmatpush1.msra.mxu0 %v479
    %733 = vmatprep.subr.mxu0 0.0
    %734 = vmatpush2.msra.mxu0 0.0
    %735 = vmatprep.subr.mxu0 0.0
    %736 = vmatpush2.msra.mxu0 0.0
    %737 = vmatprep.subr.mxu0 0.0
    %738 = vmatpush2.msra.mxu0 0.0
    %739 = vmatprep.subr.mxu0 0.0
    %740 = vmatpush2.msra.mxu0 0.0
    %741 = vmatprep.subr.mxu0 0.0
    %742 = vmatpush2.msra.mxu0 0.0
    %743 = vmatprep.subr.mxu0 0.0
    %744 = vmatpush2.msra.mxu0 0.0
    %745 = vmatprep.subr.mxu0 0.0
    %746 = vmatpush2.msra.mxu0 0.0
    %747 = vmatprep.subr.mxu0 0.0
    %748 = vmatpush2.msra.mxu0 0.0
    %749 = vmatprep.subr.mxu0 0.0
    %750 = vmatpush2.msra.mxu0 0.0
    %751 = vmatprep.subr.mxu0 0.0
    %752 = vmatpush2.msra.mxu0 0.0
    %753 = vmatprep.subr.mxu0 0.0
    %754 = vmatpush2.msra.mxu0 0.0
    %755 = vmatprep.subr.mxu0 0.0
    %756 = vmatpush2.msra.mxu0 0.0
    %757 = vmatprep.subr.mxu0 0.0
    %758 = vmatpush2.msra.mxu0 0.0
    %759 = vmatprep.subr.mxu0 0.0
    %760 = vmatpush2.msra.mxu0 0.0
    %761 = vmatprep.subr.mxu0 0.0
    %762 = vmatpush2.msra.mxu0 0.0
    %763 = vmatprep.subr.mxu0 0.0
    %764 = vmatpush2.msra.mxu0 0.0
    %765 = vmatprep.mubr.f32.mxu0 0.0
    %766 = vmatmul.mubr.f32.gmra.mxu0 %v700
    %v767 = vpop.f32.mrf.mxu0
    %v768 = vadd.f32 0.0, %v767
    %v769 = vpop.f32.mrf.mxu0
    %v770 = vadd.f32 0.0, %v769
    %771 = vdwg.mxu0
    %772 = vmatprep.subr.mxu0 0.0
    %773 = vmatpush1.msra.mxu0 %v526
    %774 = vmatprep.subr.mxu0 0.0
    %775 = vmatpush1.msra.mxu0 %v523
    %776 = vmatprep.subr.mxu0 0.0
    %777 = vmatpush1.msra.mxu0 %v520
    %778 = vmatprep.subr.mxu0 0.0
    %779 = vmatpush1.msra.mxu0 %v517
    %780 = vmatprep.subr.mxu0 0.0
    %781 = vmatpush1.msra.mxu0 %v514
    %782 = vmatprep.subr.mxu0 0.0
    %783 = vmatpush1.msra.mxu0 %v511
    %784 = vmatprep.subr.mxu0 0.0
    %785 = vmatpush1.msra.mxu0 %v508
    %786 = vmatprep.subr.mxu0 0.0
    %787 = vmatpush1.msra.mxu0 %v505
    %788 = vmatprep.subr.mxu0 0.0
    %789 = vmatpush1.msra.mxu0 %v502
    %790 = vmatprep.subr.mxu0 0.0
    %791 = vmatpush1.msra.mxu0 %v499
    %792 = vmatprep.subr.mxu0 0.0
    %793 = vmatpush1.msra.mxu0 %v496
    %794 = vmatprep.subr.mxu0 0.0
    %795 = vmatpush1.msra.mxu0 %v493
    %796 = vmatprep.subr.mxu0 0.0
    %797 = vmatpush1.msra.mxu0 %v490
    %798 = vmatprep.subr.mxu0 0.0
    %799 = vmatpush1.msra.mxu0 %v487
    %800 = vmatprep.subr.mxu0 0.0
    %801 = vmatpush1.msra.mxu0 %v484
    %802 = vmatprep.subr.mxu0 0.0
    %803 = vmatpush1.msra.mxu0 %v481
    %804 = vmatprep.subr.mxu0 0.0
    %805 = vmatpush2.msra.mxu0 0.0
    %806 = vmatprep.subr.mxu0 0.0
    %807 = vmatpush2.msra.mxu0 0.0
    %808 = vmatprep.subr.mxu0 0.0
    %809 = vmatpush2.msra.mxu0 0.0
    %810 = vmatprep.subr.mxu0 0.0
    %811 = vmatpush2.msra.mxu0 0.0
    %812 = vmatprep.subr.mxu0 0.0
    %813 = vmatpush2.msra.mxu0 0.0
    %814 = vmatprep.subr.mxu0 0.0
    %815 = vmatpush2.msra.mxu0 0.0
    %816 = vmatprep.subr.mxu0 0.0
    %817 = vmatpush2.msra.mxu0 0.0
    %818 = vmatprep.subr.mxu0 0.0
    %819 = vmatpush2.msra.mxu0 0.0
    %820 = vmatprep.subr.mxu0 0.0
    %821 = vmatpush2.msra.mxu0 0.0
    %822 = vmatprep.subr.mxu0 0.0
    %823 = vmatpush2.msra.mxu0 0.0
    %824 = vmatprep.subr.mxu0 0.0
    %825 = vmatpush2.msra.mxu0 0.0
    %826 = vmatprep.subr.mxu0 0.0
    %827 = vmatpush2.msra.mxu0 0.0
    %828 = vmatprep.subr.mxu0 0.0
    %829 = vmatpush2.msra.mxu0 0.0
    %830 = vmatprep.subr.mxu0 0.0
    %831 = vmatpush2.msra.mxu0 0.0
    %832 = vmatprep.subr.mxu0 0.0
    %833 = vmatpush2.msra.mxu0 0.0
    %834 = vmatprep.subr.mxu0 0.0
    %835 = vmatpush2.msra.mxu0 0.0
    %836 = vmatprep.mubr.f32.mxu0 0.0
    %837 = vmatmul.mubr.f32.gmra.mxu0 %v700
    %v838 = vpop.f32.mrf.mxu0
    %v839 = vadd.f32 0.0, %v838
    %v840 = vpop.f32.mrf.mxu0
    %841 = vdwg.mxu0
    %v842 = vadd.f32 %v433, %v768
    %v843 = vxor.u32 %v842, 2147483648
    %v844 = vmul.f32 %v843, 1.442695
    %v845 = vpow.pop %v844
    %v846 = vadd.f32 %v845, 1.0
    %v847 = vrcp.pop %v846
    %v848 = vmul.f32 1.0, %v847
    %v849 = vrot.slane %v433, 2
    %v851 = vadd.f32 %v849, %v770
    %v852 = vxor.u32 %v851, 2147483648
    %v853 = vmul.f32 %v852, 1.442695
    %v854 = vpow.pop %v853
    %v855 = vadd.f32 %v854, 1.0
    %v856 = vrcp.pop %v855
    %v857 = vmul.f32 1.0, %v856
    %v858 = vadd.f32 %v839, %v532
    %v859 = vmul.f32 %v848, %v858
    %v860 = vrot.slane %v433, 4
    %v862 = vadd.f32 %v860, %v859
    %v863 = vtanh.pop %v862
    %v864 = vsub.f32 1.0, %v857
    %v865 = vmul.f32 %v864, %v863
    %v866 = vmul.f32 %v857, %v700
    %v867 = vadd.f32 %v865, %v866
    %868 = vmatprep.subr.mxu0 %v525
    %869 = vmatpush1.msra.mxu0 %v524
    %870 = vmatprep.subr.mxu0 %v522
    %871 = vmatpush1.msra.mxu0 %v521
    %872 = vmatprep.subr.mxu0 %v519
    %873 = vmatpush1.msra.mxu0 %v518
    %874 = vmatprep.subr.mxu0 %v516
    %875 = vmatpush1.msra.mxu0 %v515
    %876 = vmatprep.subr.mxu0 %v513
    %877 = vmatpush1.msra.mxu0 %v512
    %878 = vmatprep.subr.mxu0 %v510
    %879 = vmatpush1.msra.mxu0 %v509
    %880 = vmatprep.subr.mxu0 %v507
    %881 = vmatpush1.msra.mxu0 %v506
    %882 = vmatprep.subr.mxu0 %v504
    %883 = vmatpush1.msra.mxu0 %v503
    %884 = vmatprep.subr.mxu0 %v501
    %885 = vmatpush1.msra.mxu0 %v500
    %886 = vmatprep.subr.mxu0 %v498
    %887 = vmatpush1.msra.mxu0 %v497
    %888 = vmatprep.subr.mxu0 %v495
    %889 = vmatpush1.msra.mxu0 %v494
    %890 = vmatprep.subr.mxu0 %v492
    %891 = vmatpush1.msra.mxu0 %v491
    %892 = vmatprep.subr.mxu0 %v489
    %893 = vmatpush1.msra.mxu0 %v488
    %894 = vmatprep.subr.mxu0 %v486
    %895 = vmatpush1.msra.mxu0 %v485
    %896 = vmatprep.subr.mxu0 %v483
    %897 = vmatpush1.msra.mxu0 %v482
    %898 = vmatprep.subr.mxu0 %v480
    %899 = vmatpush1.msra.mxu0 %v479
    %900 = vmatprep.subr.mxu0 0.0
    %901 = vmatpush2.msra.mxu0 0.0
    %902 = vmatprep.subr.mxu0 0.0
    %903 = vmatpush2.msra.mxu0 0.0
    %904 = vmatprep.subr.mxu0 0.0
    %905 = vmatpush2.msra.mxu0 0.0
    %906 = vmatprep.subr.mxu0 0.0
    %907 = vmatpush2.msra.mxu0 0.0
    %908 = vmatprep.subr.mxu0 0.0
    %909 = vmatpush2.msra.mxu0 0.0
    %910 = vmatprep.subr.mxu0 0.0
    %911 = vmatpush2.msra.mxu0 0.0
    %912 = vmatprep.subr.mxu0 0.0
    %913 = vmatpush2.msra.mxu0 0.0
    %914 = vmatprep.subr.mxu0 0.0
    %915 = vmatpush2.msra.mxu0 0.0
    %916 = vmatprep.subr.mxu0 0.0
    %917 = vmatpush2.msra.mxu0 0.0
    %918 = vmatprep.subr.mxu0 0.0
    %919 = vmatpush2.msra.mxu0 0.0
    %920 = vmatprep.subr.mxu0 0.0
    %921 = vmatpush2.msra.mxu0 0.0
    %922 = vmatprep.subr.mxu0 0.0
    %923 = vmatpush2.msra.mxu0 0.0
    %924 = vmatprep.subr.mxu0 0.0
    %925 = vmatpush2.msra.mxu0 0.0
    %926 = vmatprep.subr.mxu0 0.0
    %927 = vmatpush2.msra.mxu0 0.0
    %928 = vmatprep.subr.mxu0 0.0
    %929 = vmatpush2.msra.mxu0 0.0
    %930 = vmatprep.subr.mxu0 0.0
    %931 = vmatpush2.msra.mxu0 0.0
    %932 = vmatprep.mubr.f32.mxu0 0.0
    %933 = vmatmul.mubr.f32.gmra.mxu0 %v867
    %v934 = vpop.f32.mrf.mxu0
    %v935 = vadd.f32 0.0, %v934
    %v936 = vpop.f32.mrf.mxu0
    %v937 = vadd.f32 0.0, %v936
    %938 = vdwg.mxu0
    %939 = vmatprep.subr.mxu0 0.0
    %940 = vmatpush1.msra.mxu0 %v526
    %941 = vmatprep.subr.mxu0 0.0
    %942 = vmatpush1.msra.mxu0 %v523
    %943 = vmatprep.subr.mxu0 0.0
    %944 = vmatpush1.msra.mxu0 %v520
    %945 = vmatprep.subr.mxu0 0.0
    %946 = vmatpush1.msra.mxu0 %v517
    %947 = vmatprep.subr.mxu0 0.0
    %948 = vmatpush1.msra.mxu0 %v514
    %949 = vmatprep.subr.mxu0 0.0
    %950 = vmatpush1.msra.mxu0 %v511
    %951 = vmatprep.subr.mxu0 0.0
    %952 = vmatpush1.msra.mxu0 %v508
    %953 = vmatprep.subr.mxu0 0.0
    %954 = vmatpush1.msra.mxu0 %v505
    %955 = vmatprep.subr.mxu0 0.0
    %956 = vmatpush1.msra.mxu0 %v502
    %957 = vmatprep.subr.mxu0 0.0
    %958 = vmatpush1.msra.mxu0 %v499
    %959 = vmatprep.subr.mxu0 0.0
    %960 = vmatpush1.msra.mxu0 %v496
    %961 = vmatprep.subr.mxu0 0.0
    %962 = vmatpush1.msra.mxu0 %v493
    %963 = vmatprep.subr.mxu0 0.0
    %964 = vmatpush1.msra.mxu0 %v490
    %965 = vmatprep.subr.mxu0 0.0
    %966 = vmatpush1.msra.mxu0 %v487
    %967 = vmatprep.subr.mxu0 0.0
    %968 = vmatpush1.msra.mxu0 %v484
    %969 = vmatprep.subr.mxu0 0.0
    %970 = vmatpush1.msra.mxu0 %v481
    %971 = vmatprep.subr.mxu0 0.0
    %972 = vmatpush2.msra.mxu0 0.0
    %973 = vmatprep.subr.mxu0 0.0
    %974 = vmatpush2.msra.mxu0 0.0
    %975 = vmatprep.subr.mxu0 0.0
    %976 = vmatpush2.msra.mxu0 0.0
    %977 = vmatprep.subr.mxu0 0.0
    %978 = vmatpush2.msra.mxu0 0.0
    %979 = vmatprep.subr.mxu0 0.0
    %980 = vmatpush2.msra.mxu0 0.0
    %981 = vmatprep.subr.mxu0 0.0
    %982 = vmatpush2.msra.mxu0 0.0
    %983 = vmatprep.subr.mxu0 0.0
    %984 = vmatpush2.msra.mxu0 0.0
    %985 = vmatprep.subr.mxu0 0.0
    %986 = vmatpush2.msra.mxu0 0.0
    %987 = vmatprep.subr.mxu0 0.0
    %988 = vmatpush2.msra.mxu0 0.0
    %989 = vmatprep.subr.mxu0 0.0
    %990 = vmatpush2.msra.mxu0 0.0
    %991 = vmatprep.subr.mxu0 0.0
    %992 = vmatpush2.msra.mxu0 0.0
    %993 = vmatprep.subr.mxu0 0.0
    %994 = vmatpush2.msra.mxu0 0.0
    %995 = vmatprep.subr.mxu0 0.0
    %996 = vmatpush2.msra.mxu0 0.0
    %997 = vmatprep.subr.mxu0 0.0
    %998 = vmatpush2.msra.mxu0 0.0
    %999 = vmatprep.subr.mxu0 0.0
    %1000 = vmatpush2.msra.mxu0 0.0
    %1001 = vmatprep.subr.mxu0 0.0
    %1002 = vmatpush2.msra.mxu0 0.0
    %1003 = vmatprep.mubr.f32.mxu0 0.0
    %1004 = vmatmul.mubr.f32.gmra.mxu0 %v867
    %v1005 = vpop.f32.mrf.mxu0
    %v1006 = vadd.f32 0.0, %v1005
    %v1007 = vpop.f32.mrf.mxu0
    %1008 = vdwg.mxu0
    %v1009 = vadd.f32 %v434, %v935
    %v1010 = vxor.u32 %v1009, 2147483648
    %v1011 = vmul.f32 %v1010, 1.442695
    %v1012 = vpow.pop %v1011
    %v1013 = vadd.f32 %v1012, 1.0
    %v1014 = vrcp.pop %v1013
    %v1015 = vmul.f32 1.0, %v1014
    %v1016 = vrot.slane %v434, 2
    %v1018 = vadd.f32 %v1016, %v937
    %v1019 = vxor.u32 %v1018, 2147483648
    %v1020 = vmul.f32 %v1019, 1.442695
    %v1021 = vpow.pop %v1020
    %v1022 = vadd.f32 %v1021, 1.0
    %v1023 = vrcp.pop %v1022
    %v1024 = vmul.f32 1.0, %v1023
    %v1025 = vadd.f32 %v1006, %v532
    %v1026 = vmul.f32 %v1015, %v1025
    %v1027 = vrot.slane %v434, 4
    %v1029 = vadd.f32 %v1027, %v1026
    %v1030 = vtanh.pop %v1029
    %v1031 = vsub.f32 1.0, %v1024
    %v1032 = vmul.f32 %v1031, %v1030
    %v1033 = vmul.f32 %v1024, %v867
    %v1034 = vadd.f32 %v1032, %v1033
    %1035 = vmatprep.subr.mxu0 %v525
    %1036 = vmatpush1.msra.mxu0 %v524
    %1037 = vmatprep.subr.mxu0 %v522
    %1038 = vmatpush1.msra.mxu0 %v521
    %1039 = vmatprep.subr.mxu0 %v519
    %1040 = vmatpush1.msra.mxu0 %v518
    %1041 = vmatprep.subr.mxu0 %v516
    %1042 = vmatpush1.msra.mxu0 %v515
    %1043 = vmatprep.subr.mxu0 %v513
    %1044 = vmatpush1.msra.mxu0 %v512
    %1045 = vmatprep.subr.mxu0 %v510
    %1046 = vmatpush1.msra.mxu0 %v509
    %1047 = vmatprep.subr.mxu0 %v507
    %1048 = vmatpush1.msra.mxu0 %v506
    %1049 = vmatprep.subr.mxu0 %v504
    %1050 = vmatpush1.msra.mxu0 %v503
    %1051 = vmatprep.subr.mxu0 %v501
    %1052 = vmatpush1.msra.mxu0 %v500
    %1053 = vmatprep.subr.mxu0 %v498
    %1054 = vmatpush1.msra.mxu0 %v497
    %1055 = vmatprep.subr.mxu0 %v495
    %1056 = vmatpush1.msra.mxu0 %v494
    %1057 = vmatprep.subr.mxu0 %v492
    %1058 = vmatpush1.msra.mxu0 %v491
    %1059 = vmatprep.subr.mxu0 %v489
    %1060 = vmatpush1.msra.mxu0 %v488
    %1061 = vmatprep.subr.mxu0 %v486
    %1062 = vmatpush1.msra.mxu0 %v485
    %1063 = vmatprep.subr.mxu0 %v483
    %1064 = vmatpush1.msra.mxu0 %v482
    %1065 = vmatprep.subr.mxu0 %v480
    %1066 = vmatpush1.msra.mxu0 %v479
    %1067 = vmatprep.subr.mxu0 0.0
    %1068 = vmatpush2.msra.mxu0 0.0
    %1069 = vmatprep.subr.mxu0 0.0
    %1070 = vmatpush2.msra.mxu0 0.0
    %1071 = vmatprep.subr.mxu0 0.0
    %1072 = vmatpush2.msra.mxu0 0.0
    %1073 = vmatprep.subr.mxu0 0.0
    %1074 = vmatpush2.msra.mxu0 0.0
    %1075 = vmatprep.subr.mxu0 0.0
    %1076 = vmatpush2.msra.mxu0 0.0
    %1077 = vmatprep.subr.mxu0 0.0
    %1078 = vmatpush2.msra.mxu0 0.0
    %1079 = vmatprep.subr.mxu0 0.0
    %1080 = vmatpush2.msra.mxu0 0.0
    %1081 = vmatprep.subr.mxu0 0.0
    %1082 = vmatpush2.msra.mxu0 0.0
    %1083 = vmatprep.subr.mxu0 0.0
    %1084 = vmatpush2.msra.mxu0 0.0
    %1085 = vmatprep.subr.mxu0 0.0
    %1086 = vmatpush2.msra.mxu0 0.0
    %1087 = vmatprep.subr.mxu0 0.0
    %1088 = vmatpush2.msra.mxu0 0.0
    %1089 = vmatprep.subr.mxu0 0.0
    %1090 = vmatpush2.msra.mxu0 0.0
    %1091 = vmatprep.subr.mxu0 0.0
    %1092 = vmatpush2.msra.mxu0 0.0
    %1093 = vmatprep.subr.mxu0 0.0
    %1094 = vmatpush2.msra.mxu0 0.0
    %1095 = vmatprep.subr.mxu0 0.0
    %1096 = vmatpush2.msra.mxu0 0.0
    %1097 = vmatprep.subr.mxu0 0.0
    %1098 = vmatpush2.msra.mxu0 0.0
    %1099 = vmatprep.mubr.f32.mxu0 0.0
    %1100 = vmatmul.mubr.f32.gmra.mxu0 %v1034
    %v1101 = vpop.f32.mrf.mxu0
    %v1102 = vadd.f32 0.0, %v1101
    %v1103 = vpop.f32.mrf.mxu0
    %v1104 = vadd.f32 0.0, %v1103
    %1105 = vdwg.mxu0
    %1106 = vmatprep.subr.mxu0 0.0
    %1107 = vmatpush1.msra.mxu0 %v526
    %1108 = vmatprep.subr.mxu0 0.0
    %1109 = vmatpush1.msra.mxu0 %v523
    %1110 = vmatprep.subr.mxu0 0.0
    %1111 = vmatpush1.msra.mxu0 %v520
    %1112 = vmatprep.subr.mxu0 0.0
    %1113 = vmatpush1.msra.mxu0 %v517
    %1114 = vmatprep.subr.mxu0 0.0
    %1115 = vmatpush1.msra.mxu0 %v514
    %1116 = vmatprep.subr.mxu0 0.0
    %1117 = vmatpush1.msra.mxu0 %v511
    %1118 = vmatprep.subr.mxu0 0.0
    %1119 = vmatpush1.msra.mxu0 %v508
    %1120 = vmatprep.subr.mxu0 0.0
    %1121 = vmatpush1.msra.mxu0 %v505
    %1122 = vmatprep.subr.mxu0 0.0
    %1123 = vmatpush1.msra.mxu0 %v502
    %1124 = vmatprep.subr.mxu0 0.0
    %1125 = vmatpush1.msra.mxu0 %v499
    %1126 = vmatprep.subr.mxu0 0.0
    %1127 = vmatpush1.msra.mxu0 %v496
    %1128 = vmatprep.subr.mxu0 0.0
    %1129 = vmatpush1.msra.mxu0 %v493
    %1130 = vmatprep.subr.mxu0 0.0
    %1131 = vmatpush1.msra.mxu0 %v490
    %1132 = vmatprep.subr.mxu0 0.0
    %1133 = vmatpush1.msra.mxu0 %v487
    %1134 = vmatprep.subr.mxu0 0.0
    %1135 = vmatpush1.msra.mxu0 %v484
    %1136 = vmatprep.subr.mxu0 0.0
    %1137 = vmatpush1.msra.mxu0 %v481
    %1138 = vmatprep.subr.mxu0 0.0
    %1139 = vmatpush2.msra.mxu0 0.0
    %1140 = vmatprep.subr.mxu0 0.0
    %1141 = vmatpush2.msra.mxu0 0.0
    %1142 = vmatprep.subr.mxu0 0.0
    %1143 = vmatpush2.msra.mxu0 0.0
    %1144 = vmatprep.subr.mxu0 0.0
    %1145 = vmatpush2.msra.mxu0 0.0
    %1146 = vmatprep.subr.mxu0 0.0
    %1147 = vmatpush2.msra.mxu0 0.0
    %1148 = vmatprep.subr.mxu0 0.0
    %1149 = vmatpush2.msra.mxu0 0.0
    %1150 = vmatprep.subr.mxu0 0.0
    %1151 = vmatpush2.msra.mxu0 0.0
    %1152 = vmatprep.subr.mxu0 0.0
    %1153 = vmatpush2.msra.mxu0 0.0
    %1154 = vmatprep.subr.mxu0 0.0
    %1155 = vmatpush2.msra.mxu0 0.0
    %1156 = vmatprep.subr.mxu0 0.0
    %1157 = vmatpush2.msra.mxu0 0.0
    %1158 = vmatprep.subr.mxu0 0.0
    %1159 = vmatpush2.msra.mxu0 0.0
    %1160 = vmatprep.subr.mxu0 0.0
    %1161 = vmatpush2.msra.mxu0 0.0
    %1162 = vmatprep.subr.mxu0 0.0
    %1163 = vmatpush2.msra.mxu0 0.0
    %1164 = vmatprep.subr.mxu0 0.0
    %1165 = vmatpush2.msra.mxu0 0.0
    %1166 = vmatprep.subr.mxu0 0.0
    %1167 = vmatpush2.msra.mxu0 0.0
    %1168 = vmatprep.subr.mxu0 0.0
    %1169 = vmatpush2.msra.mxu0 0.0
    %1170 = vmatprep.mubr.f32.mxu0 0.0
    %1171 = vmatmul.mubr.f32.gmra.mxu0 %v1034
    %v1172 = vpop.f32.mrf.mxu0
    %v1173 = vadd.f32 0.0, %v1172
    %v1174 = vpop.f32.mrf.mxu0
    %1175 = vdwg.mxu0
    %v1176 = vadd.f32 %v435, %v1102
    %v1177 = vxor.u32 %v1176, 2147483648
    %v1178 = vmul.f32 %v1177, 1.442695
    %v1179 = vpow.pop %v1178
    %v1180 = vadd.f32 %v1179, 1.0
    %v1181 = vrcp.pop %v1180
    %v1182 = vmul.f32 1.0, %v1181
    %v1183 = vrot.slane %v435, 2
    %v1185 = vadd.f32 %v1183, %v1104
    %v1186 = vxor.u32 %v1185, 2147483648
    %v1187 = vmul.f32 %v1186, 1.442695
    %v1188 = vpow.pop %v1187
    %v1189 = vadd.f32 %v1188, 1.0
    %v1190 = vrcp.pop %v1189
    %v1191 = vmul.f32 1.0, %v1190
    %v1192 = vadd.f32 %v1173, %v532
    %v1193 = vmul.f32 %v1182, %v1192
    %v1194 = vrot.slane %v435, 4
    %v1196 = vadd.f32 %v1194, %v1193
    %v1197 = vtanh.pop %v1196
    %v1198 = vsub.f32 1.0, %v1191
    %v1199 = vmul.f32 %v1198, %v1197
    %v1200 = vmul.f32 %v1191, %v1034
    %v1201 = vadd.f32 %v1199, %v1200
    %1202 = vmatprep.subr.mxu0 %v525
    %1203 = vmatpush1.msra.mxu0 %v524
    %1204 = vmatprep.subr.mxu0 %v522
    %1205 = vmatpush1.msra.mxu0 %v521
    %1206 = vmatprep.subr.mxu0 %v519
    %1207 = vmatpush1.msra.mxu0 %v518
    %1208 = vmatprep.subr.mxu0 %v516
    %1209 = vmatpush1.msra.mxu0 %v515
    %1210 = vmatprep.subr.mxu0 %v513
    %1211 = vmatpush1.msra.mxu0 %v512
    %1212 = vmatprep.subr.mxu0 %v510
    %1213 = vmatpush1.msra.mxu0 %v509
    %1214 = vmatprep.subr.mxu0 %v507
    %1215 = vmatpush1.msra.mxu0 %v506
    %1216 = vmatprep.subr.mxu0 %v504
    %1217 = vmatpush1.msra.mxu0 %v503
    %1218 = vmatprep.subr.mxu0 %v501
    %1219 = vmatpush1.msra.mxu0 %v500
    %1220 = vmatprep.subr.mxu0 %v498
    %1221 = vmatpush1.msra.mxu0 %v497
    %1222 = vmatprep.subr.mxu0 %v495
    %1223 = vmatpush1.msra.mxu0 %v494
    %1224 = vmatprep.subr.mxu0 %v492
    %1225 = vmatpush1.msra.mxu0 %v491
    %1226 = vmatprep.subr.mxu0 %v489
    %1227 = vmatpush1.msra.mxu0 %v488
    %1228 = vmatprep.subr.mxu0 %v486
    %1229 = vmatpush1.msra.mxu0 %v485
    %1230 = vmatprep.subr.mxu0 %v483
    %1231 = vmatpush1.msra.mxu0 %v482
    %1232 = vmatprep.subr.mxu0 %v480
    %1233 = vmatpush1.msra.mxu0 %v479
    %1234 = vmatprep.subr.mxu0 0.0
    %1235 = vmatpush2.msra.mxu0 0.0
    %1236 = vmatprep.subr.mxu0 0.0
    %1237 = vmatpush2.msra.mxu0 0.0
    %1238 = vmatprep.subr.mxu0 0.0
    %1239 = vmatpush2.msra.mxu0 0.0
    %1240 = vmatprep.subr.mxu0 0.0
    %1241 = vmatpush2.msra.mxu0 0.0
    %1242 = vmatprep.subr.mxu0 0.0
    %1243 = vmatpush2.msra.mxu0 0.0
    %1244 = vmatprep.subr.mxu0 0.0
    %1245 = vmatpush2.msra.mxu0 0.0
    %1246 = vmatprep.subr.mxu0 0.0
    %1247 = vmatpush2.msra.mxu0 0.0
    %1248 = vmatprep.subr.mxu0 0.0
    %1249 = vmatpush2.msra.mxu0 0.0
    %1250 = vmatprep.subr.mxu0 0.0
    %1251 = vmatpush2.msra.mxu0 0.0
    %1252 = vmatprep.subr.mxu0 0.0
    %1253 = vmatpush2.msra.mxu0 0.0
    %1254 = vmatprep.subr.mxu0 0.0
    %1255 = vmatpush2.msra.mxu0 0.0
    %1256 = vmatprep.subr.mxu0 0.0
    %1257 = vmatpush2.msra.mxu0 0.0
    %1258 = vmatprep.subr.mxu0 0.0
    %1259 = vmatpush2.msra.mxu0 0.0
    %1260 = vmatprep.subr.mxu0 0.0
    %1261 = vmatpush2.msra.mxu0 0.0
    %1262 = vmatprep.subr.mxu0 0.0
    %1263 = vmatpush2.msra.mxu0 0.0
    %1264 = vmatprep.subr.mxu0 0.0
    %1265 = vmatpush2.msra.mxu0 0.0
    %1266 = vmatprep.mubr.f32.mxu0 0.0
    %1267 = vmatmul.mubr.f32.gmra.mxu0 %v1201
    %v1268 = vpop.f32.mrf.mxu0
    %v1269 = vadd.f32 0.0, %v1268
    %v1270 = vpop.f32.mrf.mxu0
    %v1271 = vadd.f32 0.0, %v1270
    %1272 = vdwg.mxu0
    %1273 = vmatprep.subr.mxu0 0.0
    %1274 = vmatpush1.msra.mxu0 %v526
    %1275 = vmatprep.subr.mxu0 0.0
    %1276 = vmatpush1.msra.mxu0 %v523
    %1277 = vmatprep.subr.mxu0 0.0
    %1278 = vmatpush1.msra.mxu0 %v520
    %1279 = vmatprep.subr.mxu0 0.0
    %1280 = vmatpush1.msra.mxu0 %v517
    %1281 = vmatprep.subr.mxu0 0.0
    %1282 = vmatpush1.msra.mxu0 %v514
    %1283 = vmatprep.subr.mxu0 0.0
    %1284 = vmatpush1.msra.mxu0 %v511
    %1285 = vmatprep.subr.mxu0 0.0
    %1286 = vmatpush1.msra.mxu0 %v508
    %1287 = vmatprep.subr.mxu0 0.0
    %1288 = vmatpush1.msra.mxu0 %v505
    %1289 = vmatprep.subr.mxu0 0.0
    %1290 = vmatpush1.msra.mxu0 %v502
    %1291 = vmatprep.subr.mxu0 0.0
    %1292 = vmatpush1.msra.mxu0 %v499
    %1293 = vmatprep.subr.mxu0 0.0
    %1294 = vmatpush1.msra.mxu0 %v496
    %1295 = vmatprep.subr.mxu0 0.0
    %1296 = vmatpush1.msra.mxu0 %v493
    %1297 = vmatprep.subr.mxu0 0.0
    %1298 = vmatpush1.msra.mxu0 %v490
    %1299 = vmatprep.subr.mxu0 0.0
    %1300 = vmatpush1.msra.mxu0 %v487
    %1301 = vmatprep.subr.mxu0 0.0
    %1302 = vmatpush1.msra.mxu0 %v484
    %1303 = vmatprep.subr.mxu0 0.0
    %1304 = vmatpush1.msra.mxu0 %v481
    %1305 = vmatprep.subr.mxu0 0.0
    %1306 = vmatpush2.msra.mxu0 0.0
    %1307 = vmatprep.subr.mxu0 0.0
    %1308 = vmatpush2.msra.mxu0 0.0
    %1309 = vmatprep.subr.mxu0 0.0
    %1310 = vmatpush2.msra.mxu0 0.0
    %1311 = vmatprep.subr.mxu0 0.0
    %1312 = vmatpush2.msra.mxu0 0.0
    %1313 = vmatprep.subr.mxu0 0.0
    %1314 = vmatpush2.msra.mxu0 0.0
    %1315 = vmatprep.subr.mxu0 0.0
    %1316 = vmatpush2.msra.mxu0 0.0
    %1317 = vmatprep.subr.mxu0 0.0
    %1318 = vmatpush2.msra.mxu0 0.0
    %1319 = vmatprep.subr.mxu0 0.0
    %1320 = vmatpush2.msra.mxu0 0.0
    %1321 = vmatprep.subr.mxu0 0.0
    %1322 = vmatpush2.msra.mxu0 0.0
    %1323 = vmatprep.subr.mxu0 0.0
    %1324 = vmatpush2.msra.mxu0 0.0
    %1325 = vmatprep.subr.mxu0 0.0
    %1326 = vmatpush2.msra.mxu0 0.0
    %1327 = vmatprep.subr.mxu0 0.0
    %1328 = vmatpush2.msra.mxu0 0.0
    %1329 = vmatprep.subr.mxu0 0.0
    %1330 = vmatpush2.msra.mxu0 0.0
    %1331 = vmatprep.subr.mxu0 0.0
    %1332 = vmatpush2.msra.mxu0 0.0
    %1333 = vmatprep.subr.mxu0 0.0
    %1334 = vmatpush2.msra.mxu0 0.0
    %1335 = vmatprep.subr.mxu0 0.0
    %1336 = vmatpush2.msra.mxu0 0.0
    %1337 = vmatprep.mubr.f32.mxu0 0.0
    %1338 = vmatmul.mubr.f32.gmra.mxu0 %v1201
    %v1339 = vpop.f32.mrf.mxu0
    %v1340 = vadd.f32 0.0, %v1339
    %v1341 = vpop.f32.mrf.mxu0
    %1342 = vdwg.mxu0
    %v1343 = vadd.f32 %v467, %v1269
    %v1344 = vxor.u32 %v1343, 2147483648
    %v1345 = vmul.f32 %v1344, 1.442695
    %v1346 = vpow.pop %v1345
    %v1347 = vadd.f32 %v1346, 1.0
    %v1348 = vrcp.pop %v1347
    %v1349 = vmul.f32 1.0, %v1348
    %v1350 = vrot.slane %v467, 2
    %v1352 = vadd.f32 %v1350, %v1271
    %v1353 = vxor.u32 %v1352, 2147483648
    %v1354 = vmul.f32 %v1353, 1.442695
    %v1355 = vpow.pop %v1354
    %v1356 = vadd.f32 %v1355, 1.0
    %v1357 = vrcp.pop %v1356
    %v1358 = vmul.f32 1.0, %v1357
    %v1359 = vadd.f32 %v1340, %v532
    %v1360 = vmul.f32 %v1349, %v1359
    %v1361 = vrot.slane %v467, 4
    %v1363 = vadd.f32 %v1361, %v1360
    %v1364 = vtanh.pop %v1363
    %v1365 = vsub.f32 1.0, %v1358
    %v1366 = vmul.f32 %v1365, %v1364
    %v1367 = vmul.f32 %v1358, %v1201
    %v1368 = vadd.f32 %v1366, %v1367
    %1369 = vmatprep.subr.mxu0 %v525
    %1370 = vmatpush1.msra.mxu0 %v524
    %1371 = vmatprep.subr.mxu0 %v522
    %1372 = vmatpush1.msra.mxu0 %v521
    %1373 = vmatprep.subr.mxu0 %v519
    %1374 = vmatpush1.msra.mxu0 %v518
    %1375 = vmatprep.subr.mxu0 %v516
    %1376 = vmatpush1.msra.mxu0 %v515
    %1377 = vmatprep.subr.mxu0 %v513
    %1378 = vmatpush1.msra.mxu0 %v512
    %1379 = vmatprep.subr.mxu0 %v510
    %1380 = vmatpush1.msra.mxu0 %v509
    %1381 = vmatprep.subr.mxu0 %v507
    %1382 = vmatpush1.msra.mxu0 %v506
    %1383 = vmatprep.subr.mxu0 %v504
    %1384 = vmatpush1.msra.mxu0 %v503
    %1385 = vmatprep.subr.mxu0 %v501
    %1386 = vmatpush1.msra.mxu0 %v500
    %1387 = vmatprep.subr.mxu0 %v498
    %1388 = vmatpush1.msra.mxu0 %v497
    %1389 = vmatprep.subr.mxu0 %v495
    %1390 = vmatpush1.msra.mxu0 %v494
    %1391 = vmatprep.subr.mxu0 %v492
    %1392 = vmatpush1.msra.mxu0 %v491
    %1393 = vmatprep.subr.mxu0 %v489
    %1394 = vmatpush1.msra.mxu0 %v488
    %1395 = vmatprep.subr.mxu0 %v486
    %1396 = vmatpush1.msra.mxu0 %v485
    %1397 = vmatprep.subr.mxu0 %v483
    %1398 = vmatpush1.msra.mxu0 %v482
    %1399 = vmatprep.subr.mxu0 %v480
    %1400 = vmatpush1.msra.mxu0 %v479
    %1401 = vmatprep.subr.mxu0 0.0
    %1402 = vmatpush2.msra.mxu0 0.0
    %1403 = vmatprep.subr.mxu0 0.0
    %1404 = vmatpush2.msra.mxu0 0.0
    %1405 = vmatprep.subr.mxu0 0.0
    %1406 = vmatpush2.msra.mxu0 0.0
    %1407 = vmatprep.subr.mxu0 0.0
    %1408 = vmatpush2.msra.mxu0 0.0
    %1409 = vmatprep.subr.mxu0 0.0
    %1410 = vmatpush2.msra.mxu0 0.0
    %1411 = vmatprep.subr.mxu0 0.0
    %1412 = vmatpush2.msra.mxu0 0.0
    %1413 = vmatprep.subr.mxu0 0.0
    %1414 = vmatpush2.msra.mxu0 0.0
    %1415 = vmatprep.subr.mxu0 0.0
    %1416 = vmatpush2.msra.mxu0 0.0
    %1417 = vmatprep.subr.mxu0 0.0
    %1418 = vmatpush2.msra.mxu0 0.0
    %1419 = vmatprep.subr.mxu0 0.0
    %1420 = vmatpush2.msra.mxu0 0.0
    %1421 = vmatprep.subr.mxu0 0.0
    %1422 = vmatpush2.msra.mxu0 0.0
    %1423 = vmatprep.subr.mxu0 0.0
    %1424 = vmatpush2.msra.mxu0 0.0
    %1425 = vmatprep.subr.mxu0 0.0
    %1426 = vmatpush2.msra.mxu0 0.0
    %1427 = vmatprep.subr.mxu0 0.0
    %1428 = vmatpush2.msra.mxu0 0.0
    %1429 = vmatprep.subr.mxu0 0.0
    %1430 = vmatpush2.msra.mxu0 0.0
    %1431 = vmatprep.subr.mxu0 0.0
    %1432 = vmatpush2.msra.mxu0 0.0
    %1433 = vmatprep.mubr.f32.mxu0 0.0
    %1434 = vmatmul.mubr.f32.gmra.mxu0 %v1368
    %v1435 = vpop.f32.mrf.mxu0
    %v1436 = vadd.f32 0.0, %v1435
    %v1437 = vpop.f32.mrf.mxu0
    %v1438 = vadd.f32 0.0, %v1437
    %1439 = vdwg.mxu0
    %1440 = vmatprep.subr.mxu0 0.0
    %1441 = vmatpush1.msra.mxu0 %v526
    %1442 = vmatprep.subr.mxu0 0.0
    %1443 = vmatpush1.msra.mxu0 %v523
    %1444 = vmatprep.subr.mxu0 0.0
    %1445 = vmatpush1.msra.mxu0 %v520
    %1446 = vmatprep.subr.mxu0 0.0
    %1447 = vmatpush1.msra.mxu0 %v517
    %1448 = vmatprep.subr.mxu0 0.0
    %1449 = vmatpush1.msra.mxu0 %v514
    %1450 = vmatprep.subr.mxu0 0.0
    %1451 = vmatpush1.msra.mxu0 %v511
    %1452 = vmatprep.subr.mxu0 0.0
    %1453 = vmatpush1.msra.mxu0 %v508
    %1454 = vmatprep.subr.mxu0 0.0
    %1455 = vmatpush1.msra.mxu0 %v505
    %1456 = vmatprep.subr.mxu0 0.0
    %1457 = vmatpush1.msra.mxu0 %v502
    %1458 = vmatprep.subr.mxu0 0.0
    %1459 = vmatpush1.msra.mxu0 %v499
    %1460 = vmatprep.subr.mxu0 0.0
    %1461 = vmatpush1.msra.mxu0 %v496
    %1462 = vmatprep.subr.mxu0 0.0
    %1463 = vmatpush1.msra.mxu0 %v493
    %1464 = vmatprep.subr.mxu0 0.0
    %1465 = vmatpush1.msra.mxu0 %v490
    %1466 = vmatprep.subr.mxu0 0.0
    %1467 = vmatpush1.msra.mxu0 %v487
    %1468 = vmatprep.subr.mxu0 0.0
    %1469 = vmatpush1.msra.mxu0 %v484
    %1470 = vmatprep.subr.mxu0 0.0
    %1471 = vmatpush1.msra.mxu0 %v481
    %1472 = vmatprep.subr.mxu0 0.0
    %1473 = vmatpush2.msra.mxu0 0.0
    %1474 = vmatprep.subr.mxu0 0.0
    %1475 = vmatpush2.msra.mxu0 0.0
    %1476 = vmatprep.subr.mxu0 0.0
    %1477 = vmatpush2.msra.mxu0 0.0
    %1478 = vmatprep.subr.mxu0 0.0
    %1479 = vmatpush2.msra.mxu0 0.0
    %1480 = vmatprep.subr.mxu0 0.0
    %1481 = vmatpush2.msra.mxu0 0.0
    %1482 = vmatprep.subr.mxu0 0.0
    %1483 = vmatpush2.msra.mxu0 0.0
    %1484 = vmatprep.subr.mxu0 0.0
    %1485 = vmatpush2.msra.mxu0 0.0
    %1486 = vmatprep.subr.mxu0 0.0
    %1487 = vmatpush2.msra.mxu0 0.0
    %1488 = vmatprep.subr.mxu0 0.0
    %1489 = vmatpush2.msra.mxu0 0.0
    %1490 = vmatprep.subr.mxu0 0.0
    %1491 = vmatpush2.msra.mxu0 0.0
    %1492 = vmatprep.subr.mxu0 0.0
    %1493 = vmatpush2.msra.mxu0 0.0
    %1494 = vmatprep.subr.mxu0 0.0
    %1495 = vmatpush2.msra.mxu0 0.0
    %1496 = vmatprep.subr.mxu0 0.0
    %1497 = vmatpush2.msra.mxu0 0.0
    %1498 = vmatprep.subr.mxu0 0.0
    %1499 = vmatpush2.msra.mxu0 0.0
    %1500 = vmatprep.subr.mxu0 0.0
    %1501 = vmatpush2.msra.mxu0 0.0
    %1502 = vmatprep.subr.mxu0 0.0
    %1503 = vmatpush2.msra.mxu0 0.0
    %1504 = vmatprep.mubr.f32.mxu0 0.0
    %1505 = vmatmul.mubr.f32.gmra.mxu0 %v1368
    %v1506 = vpop.f32.mrf.mxu0
    %v1507 = vadd.f32 0.0, %v1506
    %v1508 = vpop.f32.mrf.mxu0
    %1509 = vdwg.mxu0
    %v1510 = vadd.f32 %v468, %v1436
    %v1511 = vxor.u32 %v1510, 2147483648
    %v1512 = vmul.f32 %v1511, 1.442695
    %v1513 = vpow.pop %v1512
    %v1514 = vadd.f32 %v1513, 1.0
    %v1515 = vrcp.pop %v1514
    %v1516 = vmul.f32 1.0, %v1515
    %v1517 = vrot.slane %v468, 2
    %v1519 = vadd.f32 %v1517, %v1438
    %v1520 = vxor.u32 %v1519, 2147483648
    %v1521 = vmul.f32 %v1520, 1.442695
    %v1522 = vpow.pop %v1521
    %v1523 = vadd.f32 %v1522, 1.0
    %v1524 = vrcp.pop %v1523
    %v1525 = vmul.f32 1.0, %v1524
    %v1526 = vadd.f32 %v1507, %v532
    %v1527 = vmul.f32 %v1516, %v1526
    %v1528 = vrot.slane %v468, 4
    %v1530 = vadd.f32 %v1528, %v1527
    %v1531 = vtanh.pop %v1530
    %v1532 = vsub.f32 1.0, %v1525
    %v1533 = vmul.f32 %v1532, %v1531
    %v1534 = vmul.f32 %v1525, %v1368
    %v1535 = vadd.f32 %v1533, %v1534
    %1536 = vmatprep.subr.mxu0 %v525
    %1537 = vmatpush1.msra.mxu0 %v524
    %1538 = vmatprep.subr.mxu0 %v522
    %1539 = vmatpush1.msra.mxu0 %v521
    %1540 = vmatprep.subr.mxu0 %v519
    %1541 = vmatpush1.msra.mxu0 %v518
    %1542 = vmatprep.subr.mxu0 %v516
    %1543 = vmatpush1.msra.mxu0 %v515
    %1544 = vmatprep.subr.mxu0 %v513
    %1545 = vmatpush1.msra.mxu0 %v512
    %1546 = vmatprep.subr.mxu0 %v510
    %1547 = vmatpush1.msra.mxu0 %v509
    %1548 = vmatprep.subr.mxu0 %v507
    %1549 = vmatpush1.msra.mxu0 %v506
    %1550 = vmatprep.subr.mxu0 %v504
    %1551 = vmatpush1.msra.mxu0 %v503
    %1552 = vmatprep.subr.mxu0 %v501
    %1553 = vmatpush1.msra.mxu0 %v500
    %1554 = vmatprep.subr.mxu0 %v498
    %1555 = vmatpush1.msra.mxu0 %v497
    %1556 = vmatprep.subr.mxu0 %v495
    %1557 = vmatpush1.msra.mxu0 %v494
    %1558 = vmatprep.subr.mxu0 %v492
    %1559 = vmatpush1.msra.mxu0 %v491
    %1560 = vmatprep.subr.mxu0 %v489
    %1561 = vmatpush1.msra.mxu0 %v488
    %1562 = vmatprep.subr.mxu0 %v486
    %1563 = vmatpush1.msra.mxu0 %v485
    %1564 = vmatprep.subr.mxu0 %v483
    %1565 = vmatpush1.msra.mxu0 %v482
    %1566 = vmatprep.subr.mxu0 %v480
    %1567 = vmatpush1.msra.mxu0 %v479
    %1568 = vmatprep.subr.mxu0 0.0
    %1569 = vmatpush2.msra.mxu0 0.0
    %1570 = vmatprep.subr.mxu0 0.0
    %1571 = vmatpush2.msra.mxu0 0.0
    %1572 = vmatprep.subr.mxu0 0.0
    %1573 = vmatpush2.msra.mxu0 0.0
    %1574 = vmatprep.subr.mxu0 0.0
    %1575 = vmatpush2.msra.mxu0 0.0
    %1576 = vmatprep.subr.mxu0 0.0
    %1577 = vmatpush2.msra.mxu0 0.0
    %1578 = vmatprep.subr.mxu0 0.0
    %1579 = vmatpush2.msra.mxu0 0.0
    %1580 = vmatprep.subr.mxu0 0.0
    %1581 = vmatpush2.msra.mxu0 0.0
    %1582 = vmatprep.subr.mxu0 0.0
    %1583 = vmatpush2.msra.mxu0 0.0
    %1584 = vmatprep.subr.mxu0 0.0
    %1585 = vmatpush2.msra.mxu0 0.0
    %1586 = vmatprep.subr.mxu0 0.0
    %1587 = vmatpush2.msra.mxu0 0.0
    %1588 = vmatprep.subr.mxu0 0.0
    %1589 = vmatpush2.msra.mxu0 0.0
    %1590 = vmatprep.subr.mxu0 0.0
    %1591 = vmatpush2.msra.mxu0 0.0
    %1592 = vmatprep.subr.mxu0 0.0
    %1593 = vmatpush2.msra.mxu0 0.0
    %1594 = vmatprep.subr.mxu0 0.0
    %1595 = vmatpush2.msra.mxu0 0.0
    %1596 = vmatprep.subr.mxu0 0.0
    %1597 = vmatpush2.msra.mxu0 0.0
    %1598 = vmatprep.subr.mxu0 0.0
    %1599 = vmatpush2.msra.mxu0 0.0
    %1600 = vmatprep.mubr.f32.mxu0 0.0
    %1601 = vmatmul.mubr.f32.gmra.mxu0 %v1535
    %v1602 = vpop.f32.mrf.mxu0
    %v1603 = vadd.f32 0.0, %v1602
    %v1604 = vpop.f32.mrf.mxu0
    %v1605 = vadd.f32 0.0, %v1604
    %1606 = vdwg.mxu0
    %1607 = vmatprep.subr.mxu0 0.0
    %1608 = vmatpush1.msra.mxu0 %v526
    %1609 = vmatprep.subr.mxu0 0.0
    %1610 = vmatpush1.msra.mxu0 %v523
    %1611 = vmatprep.subr.mxu0 0.0
    %1612 = vmatpush1.msra.mxu0 %v520
    %1613 = vmatprep.subr.mxu0 0.0
    %1614 = vmatpush1.msra.mxu0 %v517
    %1615 = vmatprep.subr.mxu0 0.0
    %1616 = vmatpush1.msra.mxu0 %v514
    %1617 = vmatprep.subr.mxu0 0.0
    %1618 = vmatpush1.msra.mxu0 %v511
    %1619 = vmatprep.subr.mxu0 0.0
    %1620 = vmatpush1.msra.mxu0 %v508
    %1621 = vmatprep.subr.mxu0 0.0
    %1622 = vmatpush1.msra.mxu0 %v505
    %1623 = vmatprep.subr.mxu0 0.0
    %1624 = vmatpush1.msra.mxu0 %v502
    %1625 = vmatprep.subr.mxu0 0.0
    %1626 = vmatpush1.msra.mxu0 %v499
    %1627 = vmatprep.subr.mxu0 0.0
    %1628 = vmatpush1.msra.mxu0 %v496
    %1629 = vmatprep.subr.mxu0 0.0
    %1630 = vmatpush1.msra.mxu0 %v493
    %1631 = vmatprep.subr.mxu0 0.0
    %1632 = vmatpush1.msra.mxu0 %v490
    %1633 = vmatprep.subr.mxu0 0.0
    %1634 = vmatpush1.msra.mxu0 %v487
    %1635 = vmatprep.subr.mxu0 0.0
    %1636 = vmatpush1.msra.mxu0 %v484
    %1637 = vmatprep.subr.mxu0 0.0
    %1638 = vmatpush1.msra.mxu0 %v481
    %1639 = vmatprep.subr.mxu0 0.0
    %1640 = vmatpush2.msra.mxu0 0.0
    %1641 = vmatprep.subr.mxu0 0.0
    %1642 = vmatpush2.msra.mxu0 0.0
    %1643 = vmatprep.subr.mxu0 0.0
    %1644 = vmatpush2.msra.mxu0 0.0
    %1645 = vmatprep.subr.mxu0 0.0
    %1646 = vmatpush2.msra.mxu0 0.0
    %1647 = vmatprep.subr.mxu0 0.0
    %1648 = vmatpush2.msra.mxu0 0.0
    %1649 = vmatprep.subr.mxu0 0.0
    %1650 = vmatpush2.msra.mxu0 0.0
    %1651 = vmatprep.subr.mxu0 0.0
    %1652 = vmatpush2.msra.mxu0 0.0
    %1653 = vmatprep.subr.mxu0 0.0
    %1654 = vmatpush2.msra.mxu0 0.0
    %1655 = vmatprep.subr.mxu0 0.0
    %1656 = vmatpush2.msra.mxu0 0.0
    %1657 = vmatprep.subr.mxu0 0.0
    %1658 = vmatpush2.msra.mxu0 0.0
    %1659 = vmatprep.subr.mxu0 0.0
    %1660 = vmatpush2.msra.mxu0 0.0
    %1661 = vmatprep.subr.mxu0 0.0
    %1662 = vmatpush2.msra.mxu0 0.0
    %1663 = vmatprep.subr.mxu0 0.0
    %1664 = vmatpush2.msra.mxu0 0.0
    %1665 = vmatprep.subr.mxu0 0.0
    %1666 = vmatpush2.msra.mxu0 0.0
    %1667 = vmatprep.subr.mxu0 0.0
    %1668 = vmatpush2.msra.mxu0 0.0
    %1669 = vmatprep.subr.mxu0 0.0
    %1670 = vmatpush2.msra.mxu0 0.0
    %1671 = vmatprep.mubr.f32.mxu0 0.0
    %1672 = vmatmul.mubr.f32.gmra.mxu0 %v1535
    %v1673 = vpop.f32.mrf.mxu0
    %v1674 = vadd.f32 0.0, %v1673
    %v1675 = vpop.f32.mrf.mxu0
    %1676 = vdwg.mxu0
    %v1677 = vadd.f32 %v469, %v1603
    %v1678 = vxor.u32 %v1677, 2147483648
    %v1679 = vmul.f32 %v1678, 1.442695
    %v1680 = vpow.pop %v1679
    %v1681 = vadd.f32 %v1680, 1.0
    %v1682 = vrcp.pop %v1681
    %v1683 = vmul.f32 1.0, %v1682
    %v1684 = vrot.slane %v469, 2
    %v1686 = vadd.f32 %v1684, %v1605
    %v1687 = vxor.u32 %v1686, 2147483648
    %v1688 = vmul.f32 %v1687, 1.442695
    %v1689 = vpow.pop %v1688
    %v1690 = vadd.f32 %v1689, 1.0
    %v1691 = vrcp.pop %v1690
    %v1692 = vmul.f32 1.0, %v1691
    %v1693 = vadd.f32 %v1674, %v532
    %v1694 = vmul.f32 %v1683, %v1693
    %v1695 = vrot.slane %v469, 4
    %v1697 = vadd.f32 %v1695, %v1694
    %v1698 = vtanh.pop %v1697
    %v1699 = vsub.f32 1.0, %v1692
    %v1700 = vmul.f32 %v1699, %v1698
    %v1701 = vmul.f32 %v1692, %v1535
    %v1702 = vadd.f32 %v1700, %v1701
    %1703 = vmatprep.subr.mxu0 %v525
    %1704 = vmatpush1.msra.mxu0 %v524
    %1705 = vmatprep.subr.mxu0 %v522
    %1706 = vmatpush1.msra.mxu0 %v521
    %1707 = vmatprep.subr.mxu0 %v519
    %1708 = vmatpush1.msra.mxu0 %v518
    %1709 = vmatprep.subr.mxu0 %v516
    %1710 = vmatpush1.msra.mxu0 %v515
    %1711 = vmatprep.subr.mxu0 %v513
    %1712 = vmatpush1.msra.mxu0 %v512
    %1713 = vmatprep.subr.mxu0 %v510
    %1714 = vmatpush1.msra.mxu0 %v509
    %1715 = vmatprep.subr.mxu0 %v507
    %1716 = vmatpush1.msra.mxu0 %v506
    %1717 = vmatprep.subr.mxu0 %v504
    %1718 = vmatpush1.msra.mxu0 %v503
    %1719 = vmatprep.subr.mxu0 %v501
    %1720 = vmatpush1.msra.mxu0 %v500
    %1721 = vmatprep.subr.mxu0 %v498
    %1722 = vmatpush1.msra.mxu0 %v497
    %1723 = vmatprep.subr.mxu0 %v495
    %1724 = vmatpush1.msra.mxu0 %v494
    %1725 = vmatprep.subr.mxu0 %v492
    %1726 = vmatpush1.msra.mxu0 %v491
    %1727 = vmatprep.subr.mxu0 %v489
    %1728 = vmatpush1.msra.mxu0 %v488
    %1729 = vmatprep.subr.mxu0 %v486
    %1730 = vmatpush1.msra.mxu0 %v485
    %1731 = vmatprep.subr.mxu0 %v483
    %1732 = vmatpush1.msra.mxu0 %v482
    %1733 = vmatprep.subr.mxu0 %v480
    %1734 = vmatpush1.msra.mxu0 %v479
    %1735 = vmatprep.subr.mxu0 0.0
    %1736 = vmatpush2.msra.mxu0 0.0
    %1737 = vmatprep.subr.mxu0 0.0
    %1738 = vmatpush2.msra.mxu0 0.0
    %1739 = vmatprep.subr.mxu0 0.0
    %1740 = vmatpush2.msra.mxu0 0.0
    %1741 = vmatprep.subr.mxu0 0.0
    %1742 = vmatpush2.msra.mxu0 0.0
    %1743 = vmatprep.subr.mxu0 0.0
    %1744 = vmatpush2.msra.mxu0 0.0
    %1745 = vmatprep.subr.mxu0 0.0
    %1746 = vmatpush2.msra.mxu0 0.0
    %1747 = vmatprep.subr.mxu0 0.0
    %1748 = vmatpush2.msra.mxu0 0.0
    %1749 = vmatprep.subr.mxu0 0.0
    %1750 = vmatpush2.msra.mxu0 0.0
    %1751 = vmatprep.subr.mxu0 0.0
    %1752 = vmatpush2.msra.mxu0 0.0
    %1753 = vmatprep.subr.mxu0 0.0
    %1754 = vmatpush2.msra.mxu0 0.0
    %1755 = vmatprep.subr.mxu0 0.0
    %1756 = vmatpush2.msra.mxu0 0.0
    %1757 = vmatprep.subr.mxu0 0.0
    %1758 = vmatpush2.msra.mxu0 0.0
    %1759 = vmatprep.subr.mxu0 0.0
    %1760 = vmatpush2.msra.mxu0 0.0
    %1761 = vmatprep.subr.mxu0 0.0
    %1762 = vmatpush2.msra.mxu0 0.0
    %1763 = vmatprep.subr.mxu0 0.0
    %1764 = vmatpush2.msra.mxu0 0.0
    %1765 = vmatprep.subr.mxu0 0.0
    %1766 = vmatpush2.msra.mxu0 0.0
    %1767 = vmatprep.mubr.f32.mxu0 0.0
    %1768 = vmatmul.mubr.f32.gmra.mxu0 %v1702
    %v1769 = vpop.f32.mrf.mxu0
    %v1770 = vadd.f32 0.0, %v1769
    %v1771 = vpop.f32.mrf.mxu0
    %v1772 = vadd.f32 0.0, %v1771
    %1773 = vdwg.mxu0
    %1774 = vmatprep.subr.mxu0 0.0
    %1775 = vmatpush1.msra.mxu0 %v526
    %1776 = vmatprep.subr.mxu0 0.0
    %1777 = vmatpush1.msra.mxu0 %v523
    %1778 = vmatprep.subr.mxu0 0.0
    %1779 = vmatpush1.msra.mxu0 %v520
    %1780 = vmatprep.subr.mxu0 0.0
    %1781 = vmatpush1.msra.mxu0 %v517
    %1782 = vmatprep.subr.mxu0 0.0
    %1783 = vmatpush1.msra.mxu0 %v514
    %1784 = vmatprep.subr.mxu0 0.0
    %1785 = vmatpush1.msra.mxu0 %v511
    %1786 = vmatprep.subr.mxu0 0.0
    %1787 = vmatpush1.msra.mxu0 %v508
    %1788 = vmatprep.subr.mxu0 0.0
    %1789 = vmatpush1.msra.mxu0 %v505
    %1790 = vmatprep.subr.mxu0 0.0
    %1791 = vmatpush1.msra.mxu0 %v502
    %1792 = vmatprep.subr.mxu0 0.0
    %1793 = vmatpush1.msra.mxu0 %v499
    %1794 = vmatprep.subr.mxu0 0.0
    %1795 = vmatpush1.msra.mxu0 %v496
    %1796 = vmatprep.subr.mxu0 0.0
    %1797 = vmatpush1.msra.mxu0 %v493
    %1798 = vmatprep.subr.mxu0 0.0
    %1799 = vmatpush1.msra.mxu0 %v490
    %1800 = vmatprep.subr.mxu0 0.0
    %1801 = vmatpush1.msra.mxu0 %v487
    %1802 = vmatprep.subr.mxu0 0.0
    %1803 = vmatpush1.msra.mxu0 %v484
    %1804 = vmatprep.subr.mxu0 0.0
    %1805 = vmatpush1.msra.mxu0 %v481
    %1806 = vmatprep.subr.mxu0 0.0
    %1807 = vmatpush2.msra.mxu0 0.0
    %1808 = vmatprep.subr.mxu0 0.0
    %1809 = vmatpush2.msra.mxu0 0.0
    %1810 = vmatprep.subr.mxu0 0.0
    %1811 = vmatpush2.msra.mxu0 0.0
    %1812 = vmatprep.subr.mxu0 0.0
    %1813 = vmatpush2.msra.mxu0 0.0
    %1814 = vmatprep.subr.mxu0 0.0
    %1815 = vmatpush2.msra.mxu0 0.0
    %1816 = vmatprep.subr.mxu0 0.0
    %1817 = vmatpush2.msra.mxu0 0.0
    %1818 = vmatprep.subr.mxu0 0.0
    %1819 = vmatpush2.msra.mxu0 0.0
    %1820 = vmatprep.subr.mxu0 0.0
    %1821 = vmatpush2.msra.mxu0 0.0
    %1822 = vmatprep.subr.mxu0 0.0
    %1823 = vmatpush2.msra.mxu0 0.0
    %1824 = vmatprep.subr.mxu0 0.0
    %1825 = vmatpush2.msra.mxu0 0.0
    %1826 = vmatprep.subr.mxu0 0.0
    %1827 = vmatpush2.msra.mxu0 0.0
    %1828 = vmatprep.subr.mxu0 0.0
    %1829 = vmatpush2.msra.mxu0 0.0
    %1830 = vmatprep.subr.mxu0 0.0
    %1831 = vmatpush2.msra.mxu0 0.0
    %1832 = vmatprep.subr.mxu0 0.0
    %1833 = vmatpush2.msra.mxu0 0.0
    %1834 = vmatprep.subr.mxu0 0.0
    %1835 = vmatpush2.msra.mxu0 0.0
    %1836 = vmatprep.subr.mxu0 0.0
    %1837 = vmatpush2.msra.mxu0 0.0
    %1838 = vmatprep.mubr.f32.mxu0 0.0
    %1839 = vmatmul.mubr.f32.gmra.mxu0 %v1702
    %v1840 = vpop.f32.mrf.mxu0
    %v1841 = vadd.f32 0.0, %v1840
    %v1842 = vpop.f32.mrf.mxu0
    %1843 = vdwg.mxu0
    %v1844 = vadd.f32 %v470, %v1770
    %v1845 = vxor.u32 %v1844, 2147483648
    %v1846 = vmul.f32 %v1845, 1.442695
    %v1847 = vpow.pop %v1846
    %v1848 = vadd.f32 %v1847, 1.0
    %v1849 = vrcp.pop %v1848
    %v1850 = vmul.f32 1.0, %v1849
    %v1851 = vrot.slane %v470, 2
    %v1853 = vadd.f32 %v1851, %v1772
    %v1854 = vxor.u32 %v1853, 2147483648
    %v1855 = vmul.f32 %v1854, 1.442695
    %v1856 = vpow.pop %v1855
    %v1857 = vadd.f32 %v1856, 1.0
    %v1858 = vrcp.pop %v1857
    %v1859 = vmul.f32 1.0, %v1858
    %v1860 = vadd.f32 %v1841, %v532
    %v1861 = vmul.f32 %v1850, %v1860
    %v1862 = vrot.slane %v470, 4
    %v1864 = vadd.f32 %v1862, %v1861
    %v1865 = vtanh.pop %v1864
    %v1866 = vsub.f32 1.0, %v1859
    %v1867 = vmul.f32 %v1866, %v1865
    %v1868 = vmul.f32 %v1859, %v1702
    %v1869 = vadd.f32 %v1867, %v1868
    %v1870 = vld [vmem:[#allocation7] sm:$0xff]
    %v1871 = vld [vmem:[#allocation7 + $0x8] sm:$0xff]
    %v1872 = vld [vmem:[#allocation7 + $0x10] sm:$0xff]
    %v1873 = vld [vmem:[#allocation7 + $0x18] sm:$0xff]
    %v1874 = vld [vmem:[#allocation7 + $0x20] sm:$0xff]
    %v1875 = vld [vmem:[#allocation7 + $0x28] sm:$0xff]
    %v1876 = vld [vmem:[#allocation7 + $0x30] sm:$0xff]
    %v1877 = vld [vmem:[#allocation7 + $0x38] sm:$0xff]
    %v1878 = vld [vmem:[#allocation7 + $0x40] sm:$0xff]
    %v1879 = vld [vmem:[#allocation7 + $0x48] sm:$0xff]
    %v1880 = vld [vmem:[#allocation7 + $0x50] sm:$0xff]
    %v1881 = vld [vmem:[#allocation7 + $0x58] sm:$0xff]
    %v1882 = vld [vmem:[#allocation7 + $0x60] sm:$0xff]
    %v1883 = vld [vmem:[#allocation7 + $0x68] sm:$0xff]
    %v1884 = vld [vmem:[#allocation7 + $0x70] sm:$0xff]
    %v1885 = vld [vmem:[#allocation7 + $0x78] sm:$0xff]
    %v1886 = vld [vmem:[#allocation7 + $0x80] sm:$0xff]
    %v1887 = vld [vmem:[#allocation7 + $0x88] sm:$0xff]
    %v1888 = vld [vmem:[#allocation7 + $0x90] sm:$0xff]
    %v1889 = vld [vmem:[#allocation7 + $0x98] sm:$0xff]
    %v1890 = vld [vmem:[#allocation7 + $0xa0] sm:$0xff]
    %v1891 = vld [vmem:[#allocation7 + $0xa8] sm:$0xff]
    %v1892 = vld [vmem:[#allocation7 + $0xb0] sm:$0xff]
    %v1893 = vld [vmem:[#allocation7 + $0xb8] sm:$0xff]
    %v1894 = vld [vmem:[#allocation7 + $0xc0] sm:$0xff]
    %v1895 = vld [vmem:[#allocation7 + $0xc8] sm:$0xff]
    %v1896 = vld [vmem:[#allocation7 + $0xd0] sm:$0xff]
    %v1897 = vld [vmem:[#allocation7 + $0xd8] sm:$0xff]
    %v1898 = vld [vmem:[#allocation7 + $0xe0] sm:$0xff]
    %v1899 = vld [vmem:[#allocation7 + $0xe8] sm:$0xff]
    %v1900 = vld [vmem:[#allocation7 + $0xf0] sm:$0xff]
    %v1901 = vld [vmem:[#allocation7 + $0xf8] sm:$0xff]
    %v1902 = vld [vmem:[#allocation7 + $0x100] sm:$0xff]
    %v1903 = vld [vmem:[#allocation7 + $0x108] sm:$0xff]
    %v1904 = vld [vmem:[#allocation7 + $0x110] sm:$0xff]
    %v1905 = vld [vmem:[#allocation7 + $0x118] sm:$0xff]
    %v1906 = vld [vmem:[#allocation7 + $0x120] sm:$0xff]
    %v1907 = vld [vmem:[#allocation7 + $0x128] sm:$0xff]
    %v1908 = vld [vmem:[#allocation7 + $0x130] sm:$0xff]
    %v1909 = vld [vmem:[#allocation7 + $0x138] sm:$0xff]
    %v1910 = vld [vmem:[#allocation7 + $0x140] sm:$0xff]
    %v1911 = vld [vmem:[#allocation7 + $0x148] sm:$0xff]
    %v1912 = vld [vmem:[#allocation7 + $0x150] sm:$0xff]
    %v1913 = vld [vmem:[#allocation7 + $0x158] sm:$0xff]
    %v1914 = vld [vmem:[#allocation7 + $0x160] sm:$0xff]
    %v1915 = vld [vmem:[#allocation7 + $0x168] sm:$0xff]
    %v1916 = vld [vmem:[#allocation7 + $0x170] sm:$0xff]
    %v1917 = vld [vmem:[#allocation7 + $0x178] sm:$0xff]
    %v1918 = vld [vmem:[%s8] sm:$0x7]
    %v1920 = vlaneseq
    %v1921 = vshrl.u32 %v1920, 7
    %v1922 = vsub.s32 0, %v1921
    %v1923 = vrot.slane %v1918, %v1922
    %v1924 = vlaneseq
    %v1925 = vshrl.u32 %v1924, 7
    %v1926 = vsub.s32 1, %v1925
    %v1927 = vrot.slane %v1918, %v1926
    %v1928 = vlaneseq
    %v1929 = vshrl.u32 %v1928, 7
    %v1930 = vsub.s32 2, %v1929
    %v1931 = vrot.slane %v1918, %v1930
    %v1943 = vcombine.low %v700, %v867
    %v1944 = vcombine.low %v1034, %v1201
    %v1946 = vunpack.c.l.s4 1983009808
    %v1947 = vunpack.c.0.s8 %v1946
    %v1948 = vlaneseq
    %v1949 = vshrl.u32 %v1948, 7
    %v1950 = vsub.s32 %v1947, %v1949
    %v1951 = vrot.slane %v1943, %v1950
    %v1953 = vunpack.c.l.s4 1983009808
    %v1954 = vunpack.c.0.s8 %v1953
    %v1955 = vlaneseq
    %v1956 = vshrl.u32 %v1955, 7
    %v1957 = vsub.s32 %v1954, %v1956
    %v1958 = vrot.slane %v1944, %v1957
    %v1959 = vcombine.low %v1951, %v1958
    %v1960 = vcombine.low %v1368, %v1535
    %v1961 = vcombine.low %v1702, %v1869
    %v1963 = vunpack.c.l.s4 1983009808
    %v1964 = vunpack.c.0.s8 %v1963
    %v1965 = vlaneseq
    %v1966 = vshrl.u32 %v1965, 7
    %v1967 = vsub.s32 %v1964, %v1966
    %v1968 = vrot.slane %v1960, %v1967
    %v1970 = vunpack.c.l.s4 1983009808
    %v1971 = vunpack.c.0.s8 %v1970
    %v1972 = vlaneseq
    %v1973 = vshrl.u32 %v1972, 7
    %v1974 = vsub.s32 %v1971, %v1973
    %v1975 = vrot.slane %v1961, %v1974
    %v1976 = vcombine.low %v1968, %v1975
    %1979 = vmatprep.subr.mxu0 %v1916
    %1980 = vmatpush1.msra.mxu0 %v1915
    %1981 = vmatprep.subr.mxu0 %v1913
    %1982 = vmatpush1.msra.mxu0 %v1912
    %1983 = vmatprep.subr.mxu0 %v1910
    %1984 = vmatpush1.msra.mxu0 %v1909
    %1985 = vmatprep.subr.mxu0 %v1907
    %1986 = vmatpush1.msra.mxu0 %v1906
    %1987 = vmatprep.subr.mxu0 %v1904
    %1988 = vmatpush1.msra.mxu0 %v1903
    %1989 = vmatprep.subr.mxu0 %v1901
    %1990 = vmatpush1.msra.mxu0 %v1900
    %1991 = vmatprep.subr.mxu0 %v1898
    %1992 = vmatpush1.msra.mxu0 %v1897
    %1993 = vmatprep.subr.mxu0 %v1895
    %1994 = vmatpush1.msra.mxu0 %v1894
    %1995 = vmatprep.subr.mxu0 %v1892
    %1996 = vmatpush1.msra.mxu0 %v1891
    %1997 = vmatprep.subr.mxu0 %v1889
    %1998 = vmatpush1.msra.mxu0 %v1888
    %1999 = vmatprep.subr.mxu0 %v1886
    %2000 = vmatpush1.msra.mxu0 %v1885
    %2001 = vmatprep.subr.mxu0 %v1883
    %2002 = vmatpush1.msra.mxu0 %v1882
    %2003 = vmatprep.subr.mxu0 %v1880
    %2004 = vmatpush1.msra.mxu0 %v1879
    %2005 = vmatprep.subr.mxu0 %v1877
    %2006 = vmatpush1.msra.mxu0 %v1876
    %2007 = vmatprep.subr.mxu0 %v1874
    %2008 = vmatpush1.msra.mxu0 %v1873
    %2009 = vmatprep.subr.mxu0 %v1871
    %2010 = vmatpush1.msra.mxu0 %v1870
    %2011 = vmatprep.subr.mxu0 0.0
    %2012 = vmatpush2.msra.mxu0 0.0
    %2013 = vmatprep.subr.mxu0 0.0
    %2014 = vmatpush2.msra.mxu0 0.0
    %2015 = vmatprep.subr.mxu0 0.0
    %2016 = vmatpush2.msra.mxu0 0.0
    %2017 = vmatprep.subr.mxu0 0.0
    %2018 = vmatpush2.msra.mxu0 0.0
    %2019 = vmatprep.subr.mxu0 0.0
    %2020 = vmatpush2.msra.mxu0 0.0
    %2021 = vmatprep.subr.mxu0 0.0
    %2022 = vmatpush2.msra.mxu0 0.0
    %2023 = vmatprep.subr.mxu0 0.0
    %2024 = vmatpush2.msra.mxu0 0.0
    %2025 = vmatprep.subr.mxu0 0.0
    %2026 = vmatpush2.msra.mxu0 0.0
    %2027 = vmatprep.subr.mxu0 0.0
    %2028 = vmatpush2.msra.mxu0 0.0
    %2029 = vmatprep.subr.mxu0 0.0
    %2030 = vmatpush2.msra.mxu0 0.0
    %2031 = vmatprep.subr.mxu0 0.0
    %2032 = vmatpush2.msra.mxu0 0.0
    %2033 = vmatprep.subr.mxu0 0.0
    %2034 = vmatpush2.msra.mxu0 0.0
    %2035 = vmatprep.subr.mxu0 0.0
    %2036 = vmatpush2.msra.mxu0 0.0
    %2037 = vmatprep.subr.mxu0 0.0
    %2038 = vmatpush2.msra.mxu0 0.0
    %2039 = vmatprep.subr.mxu0 0.0
    %2040 = vmatpush2.msra.mxu0 0.0
    %2041 = vmatprep.subr.mxu0 0.0
    %2042 = vmatpush2.msra.mxu0 0.0
    %2043 = vmatprep.mubr.f32.mxu0 0.0
    %2044 = vmatmul.mubr.f32.gmra.mxu0 %v1959
    %v2045 = vpop.f32.mrf.mxu0
    %v2046 = vadd.f32 %v1923, %v2045
    %v2047 = vpop.f32.mrf.mxu0
    %v2048 = vadd.f32 %v1927, %v2047
    %2049 = vmatprep.mubr.f32.mxu0 0.0
    %2050 = vmatmul.mubr.f32.gmra.mxu0 %v1976
    %v2051 = vpop.f32.mrf.mxu0
    %v2052 = vadd.f32 %v1923, %v2051
    %v2053 = vpop.f32.mrf.mxu0
    %v2054 = vadd.f32 %v1927, %v2053
    %2055 = vdwg.mxu0
    %2056 = vmatprep.subr.mxu0 0.0
    %2057 = vmatpush1.msra.mxu0 %v1917
    %2058 = vmatprep.subr.mxu0 0.0
    %2059 = vmatpush1.msra.mxu0 %v1914
    %2060 = vmatprep.subr.mxu0 0.0
    %2061 = vmatpush1.msra.mxu0 %v1911
    %2062 = vmatprep.subr.mxu0 0.0
    %2063 = vmatpush1.msra.mxu0 %v1908
    %2064 = vmatprep.subr.mxu0 0.0
    %2065 = vmatpush1.msra.mxu0 %v1905
    %2066 = vmatprep.subr.mxu0 0.0
    %2067 = vmatpush1.msra.mxu0 %v1902
    %2068 = vmatprep.subr.mxu0 0.0
    %2069 = vmatpush1.msra.mxu0 %v1899
    %2070 = vmatprep.subr.mxu0 0.0
    %2071 = vmatpush1.msra.mxu0 %v1896
    %2072 = vmatprep.subr.mxu0 0.0
    %2073 = vmatpush1.msra.mxu0 %v1893
    %2074 = vmatprep.subr.mxu0 0.0
    %2075 = vmatpush1.msra.mxu0 %v1890
    %2076 = vmatprep.subr.mxu0 0.0
    %2077 = vmatpush1.msra.mxu0 %v1887
    %2078 = vmatprep.subr.mxu0 0.0
    %2079 = vmatpush1.msra.mxu0 %v1884
    %2080 = vmatprep.subr.mxu0 0.0
    %2081 = vmatpush1.msra.mxu0 %v1881
    %2082 = vmatprep.subr.mxu0 0.0
    %2083 = vmatpush1.msra.mxu0 %v1878
    %2084 = vmatprep.subr.mxu0 0.0
    %2085 = vmatpush1.msra.mxu0 %v1875
    %2086 = vmatprep.subr.mxu0 0.0
    %2087 = vmatpush1.msra.mxu0 %v1872
    %2088 = vmatprep.subr.mxu0 0.0
    %2089 = vmatpush2.msra.mxu0 0.0
    %2090 = vmatprep.subr.mxu0 0.0
    %2091 = vmatpush2.msra.mxu0 0.0
    %2092 = vmatprep.subr.mxu0 0.0
    %2093 = vmatpush2.msra.mxu0 0.0
    %2094 = vmatprep.subr.mxu0 0.0
    %2095 = vmatpush2.msra.mxu0 0.0
    %2096 = vmatprep.subr.mxu0 0.0
    %2097 = vmatpush2.msra.mxu0 0.0
    %2098 = vmatprep.subr.mxu0 0.0
    %2099 = vmatpush2.msra.mxu0 0.0
    %2100 = vmatprep.subr.mxu0 0.0
    %2101 = vmatpush2.msra.mxu0 0.0
    %2102 = vmatprep.subr.mxu0 0.0
    %2103 = vmatpush2.msra.mxu0 0.0
    %2104 = vmatprep.subr.mxu0 0.0
    %2105 = vmatpush2.msra.mxu0 0.0
    %2106 = vmatprep.subr.mxu0 0.0
    %2107 = vmatpush2.msra.mxu0 0.0
    %2108 = vmatprep.subr.mxu0 0.0
    %2109 = vmatpush2.msra.mxu0 0.0
    %2110 = vmatprep.subr.mxu0 0.0
    %2111 = vmatpush2.msra.mxu0 0.0
    %2112 = vmatprep.subr.mxu0 0.0
    %2113 = vmatpush2.msra.mxu0 0.0
    %2114 = vmatprep.subr.mxu0 0.0
    %2115 = vmatpush2.msra.mxu0 0.0
    %2116 = vmatprep.subr.mxu0 0.0
    %2117 = vmatpush2.msra.mxu0 0.0
    %2118 = vmatprep.subr.mxu0 0.0
    %2119 = vmatpush2.msra.mxu0 0.0
    %2120 = vmatprep.mubr.f32.mxu0 0.0
    %2121 = vmatmul.mubr.f32.gmra.mxu0 %v1959
    %v2122 = vpop.f32.mrf.mxu0
    %v2123 = vadd.f32 %v1931, %v2122
    %v2124 = vpop.f32.mrf.mxu0
    %2125 = vmatprep.mubr.f32.mxu0 0.0
    %2126 = vmatmul.mubr.f32.gmra.mxu0 %v1976
    %v2127 = vpop.f32.mrf.mxu0
    %v2128 = vadd.f32 %v1931, %v2127
    %v2129 = vpop.f32.mrf.mxu0
    %2130 = vdwg.mxu0
    %v2137 = vcombine.low %v2046, %v2048
    %v2138 = vcombine.high %v2046, %v2048
    %v2139 = vcombine.high %v2123, %v2123
    %v2141 = vunpack.c.l.s4 1983009808
    %v2142 = vunpack.c.0.s8 %v2141
    %v2143 = vlaneseq
    %v2144 = vshrl.u32 %v2143, 7
    %v2145 = vsub.s32 %v2142, %v2144
    %v2146 = vrot.slane %v2137, %v2145
    %v2148 = vunpack.c.l.s4 1983009808
    %v2149 = vunpack.c.0.s8 %v2148
    %v2150 = vlaneseq
    %v2151 = vshrl.u32 %v2150, 7
    %v2152 = vsub.s32 %v2149, %v2151
    %v2153 = vrot.slane %v2138, %v2152
    %v2155 = vunpack.c.l.s4 1983009808
    %v2156 = vunpack.c.0.s8 %v2155
    %v2157 = vlaneseq
    %v2158 = vshrl.u32 %v2157, 7
    %v2159 = vsub.s32 %v2156, %v2158
    %v2160 = vrot.slane %v2123, %v2159
    %v2162 = vunpack.c.l.s4 1983009808
    %v2163 = vunpack.c.0.s8 %v2162
    %v2164 = vlaneseq
    %v2165 = vshrl.u32 %v2164, 7
    %v2166 = vsub.s32 %v2163, %v2165
    %v2167 = vrot.slane %v2139, %v2166
    %v2168 = vcombine.low %v2146, %v2160
    %v2169 = vcombine.high %v2146, %v2160
    %v2170 = vcombine.low %v2153, %v2167
    %v2171 = vcombine.high %v2153, %v2167
    %v2172 = vcombine.low %v2052, %v2054
    %v2173 = vcombine.high %v2052, %v2054
    %v2174 = vcombine.high %v2128, %v2128
    %v2176 = vunpack.c.l.s4 1983009808
    %v2177 = vunpack.c.0.s8 %v2176
    %v2178 = vlaneseq
    %v2179 = vshrl.u32 %v2178, 7
    %v2180 = vsub.s32 %v2177, %v2179
    %v2181 = vrot.slane %v2172, %v2180
    %v2183 = vunpack.c.l.s4 1983009808
    %v2184 = vunpack.c.0.s8 %v2183
    %v2185 = vlaneseq
    %v2186 = vshrl.u32 %v2185, 7
    %v2187 = vsub.s32 %v2184, %v2186
    %v2188 = vrot.slane %v2173, %v2187
    %v2190 = vunpack.c.l.s4 1983009808
    %v2191 = vunpack.c.0.s8 %v2190
    %v2192 = vlaneseq
    %v2193 = vshrl.u32 %v2192, 7
    %v2194 = vsub.s32 %v2191, %v2193
    %v2195 = vrot.slane %v2128, %v2194
    %v2197 = vunpack.c.l.s4 1983009808
    %v2198 = vunpack.c.0.s8 %v2197
    %v2199 = vlaneseq
    %v2200 = vshrl.u32 %v2199, 7
    %v2201 = vsub.s32 %v2198, %v2200
    %v2202 = vrot.slane %v2174, %v2201
    %v2203 = vcombine.low %v2181, %v2195
    %v2204 = vcombine.high %v2181, %v2195
    %v2205 = vcombine.low %v2188, %v2202
    %v2206 = vcombine.high %v2188, %v2202
    %v2215 = vld [vmem:[#allocation9] sm:$0xff]
    %v2216 = vld [vmem:[#allocation9 + $0x8] sm:$0xff]
    %v2217 = vld [vmem:[#allocation9 + $0x10] sm:$0xff]
    %v2218 = vld [vmem:[#allocation9 + $0x18] sm:$0xff]
    %v2219 = vld [vmem:[#allocation9 + $0x20] sm:$0xff]
    %v2220 = vld [vmem:[#allocation9 + $0x28] sm:$0xff]
    %v2221 = vld [vmem:[#allocation9 + $0x30] sm:$0xff]
    %v2222 = vld [vmem:[#allocation9 + $0x38] sm:$0xff]
    %v2223 = vld [vmem:[#allocation9 + $0x40] sm:$0xff]
    %v2224 = vld [vmem:[#allocation9 + $0x48] sm:$0xff]
    %v2225 = vld [vmem:[#allocation9 + $0x50] sm:$0xff]
    %v2226 = vld [vmem:[#allocation9 + $0x58] sm:$0xff]
    %v2227 = vld [vmem:[#allocation9 + $0x60] sm:$0xff]
    %v2228 = vld [vmem:[#allocation9 + $0x68] sm:$0xff]
    %v2229 = vld [vmem:[#allocation9 + $0x70] sm:$0xff]
    %v2230 = vld [vmem:[#allocation9 + $0x78] sm:$0xff]
    %v2231 = vld [vmem:[#allocation9 + $0x80] sm:$0xff]
    %v2232 = vld [vmem:[#allocation9 + $0x88] sm:$0xff]
    %v2233 = vld [vmem:[#allocation9 + $0x90] sm:$0xff]
    %v2234 = vld [vmem:[#allocation9 + $0x98] sm:$0xff]
    %v2235 = vld [vmem:[#allocation9 + $0xa0] sm:$0xff]
    %v2236 = vld [vmem:[#allocation9 + $0xa8] sm:$0xff]
    %v2237 = vld [vmem:[#allocation9 + $0xb0] sm:$0xff]
    %v2238 = vld [vmem:[#allocation9 + $0xb8] sm:$0xff]
    %v2239 = vld [vmem:[#allocation9 + $0xc0] sm:$0xff]
    %v2240 = vld [vmem:[#allocation9 + $0xc8] sm:$0xff]
    %v2241 = vld [vmem:[#allocation9 + $0xd0] sm:$0xff]
    %v2242 = vld [vmem:[#allocation9 + $0xd8] sm:$0xff]
    %v2243 = vld [vmem:[#allocation9 + $0xe0] sm:$0xff]
    %v2244 = vld [vmem:[#allocation9 + $0xe8] sm:$0xff]
    %v2245 = vld [vmem:[#allocation9 + $0xf0] sm:$0xff]
    %v2246 = vld [vmem:[#allocation9 + $0xf8] sm:$0xff]
    %v2247 = vld [vmem:[#allocation9 + $0x100] sm:$0xff]
    %v2248 = vld [vmem:[#allocation9 + $0x108] sm:$0xff]
    %v2249 = vld [vmem:[#allocation9 + $0x110] sm:$0xff]
    %v2250 = vld [vmem:[#allocation9 + $0x118] sm:$0xff]
    %v2251 = vld [vmem:[#allocation9 + $0x120] sm:$0xff]
    %v2252 = vld [vmem:[#allocation9 + $0x128] sm:$0xff]
    %v2253 = vld [vmem:[#allocation9 + $0x130] sm:$0xff]
    %v2254 = vld [vmem:[#allocation9 + $0x138] sm:$0xff]
    %v2255 = vld [vmem:[#allocation9 + $0x140] sm:$0xff]
    %v2256 = vld [vmem:[#allocation9 + $0x148] sm:$0xff]
    %v2257 = vld [vmem:[#allocation9 + $0x150] sm:$0xff]
    %v2258 = vld [vmem:[#allocation9 + $0x158] sm:$0xff]
    %v2259 = vld [vmem:[#allocation9 + $0x160] sm:$0xff]
    %v2260 = vld [vmem:[#allocation9 + $0x168] sm:$0xff]
    %v2261 = vld [vmem:[#allocation9 + $0x170] sm:$0xff]
    %v2262 = vld [vmem:[#allocation9 + $0x178] sm:$0xff]
    %v2263 = vld [vmem:[%s9] sm:$0x1]
    %v2265 = vlaneseq
    %v2266 = vshrl.u32 %v2265, 7
    %v2267 = vsub.s32 0, %v2266
    %v2268 = vrot.slane %v2263, %v2267
    %2270 = vmatprep.subr.mxu0 %v2261
    %2271 = vmatpush1.msra.mxu0 %v2260
    %2272 = vmatprep.subr.mxu0 %v2258
    %2273 = vmatpush1.msra.mxu0 %v2257
    %2274 = vmatprep.subr.mxu0 %v2255
    %2275 = vmatpush1.msra.mxu0 %v2254
    %2276 = vmatprep.subr.mxu0 %v2252
    %2277 = vmatpush1.msra.mxu0 %v2251
    %2278 = vmatprep.subr.mxu0 %v2249
    %2279 = vmatpush1.msra.mxu0 %v2248
    %2280 = vmatprep.subr.mxu0 %v2246
    %2281 = vmatpush1.msra.mxu0 %v2245
    %2282 = vmatprep.subr.mxu0 %v2243
    %2283 = vmatpush1.msra.mxu0 %v2242
    %2284 = vmatprep.subr.mxu0 %v2240
    %2285 = vmatpush1.msra.mxu0 %v2239
    %2286 = vmatprep.subr.mxu0 %v2237
    %2287 = vmatpush1.msra.mxu0 %v2236
    %2288 = vmatprep.subr.mxu0 %v2234
    %2289 = vmatpush1.msra.mxu0 %v2233
    %2290 = vmatprep.subr.mxu0 %v2231
    %2291 = vmatpush1.msra.mxu0 %v2230
    %2292 = vmatprep.subr.mxu0 %v2228
    %2293 = vmatpush1.msra.mxu0 %v2227
    %2294 = vmatprep.subr.mxu0 %v2225
    %2295 = vmatpush1.msra.mxu0 %v2224
    %2296 = vmatprep.subr.mxu0 %v2222
    %2297 = vmatpush1.msra.mxu0 %v2221
    %2298 = vmatprep.subr.mxu0 %v2219
    %2299 = vmatpush1.msra.mxu0 %v2218
    %2300 = vmatprep.subr.mxu0 %v2216
    %2301 = vmatpush1.msra.mxu0 %v2215
    %2302 = vmatprep.subr.mxu0 0.0
    %2303 = vmatpush2.msra.mxu0 0.0
    %2304 = vmatprep.subr.mxu0 0.0
    %2305 = vmatpush2.msra.mxu0 0.0
    %2306 = vmatprep.subr.mxu0 0.0
    %2307 = vmatpush2.msra.mxu0 0.0
    %2308 = vmatprep.subr.mxu0 0.0
    %2309 = vmatpush2.msra.mxu0 0.0
    %2310 = vmatprep.subr.mxu0 0.0
    %2311 = vmatpush2.msra.mxu0 0.0
    %2312 = vmatprep.subr.mxu0 0.0
    %2313 = vmatpush2.msra.mxu0 0.0
    %2314 = vmatprep.subr.mxu0 0.0
    %2315 = vmatpush2.msra.mxu0 0.0
    %2316 = vmatprep.subr.mxu0 0.0
    %2317 = vmatpush2.msra.mxu0 0.0
    %2318 = vmatprep.subr.mxu0 0.0
    %2319 = vmatpush2.msra.mxu0 0.0
    %2320 = vmatprep.subr.mxu0 0.0
    %2321 = vmatpush2.msra.mxu0 0.0
    %2322 = vmatprep.subr.mxu0 0.0
    %2323 = vmatpush2.msra.mxu0 0.0
    %2324 = vmatprep.subr.mxu0 0.0
    %2325 = vmatpush2.msra.mxu0 0.0
    %2326 = vmatprep.subr.mxu0 0.0
    %2327 = vmatpush2.msra.mxu0 0.0
    %2328 = vmatprep.subr.mxu0 0.0
    %2329 = vmatpush2.msra.mxu0 0.0
    %2330 = vmatprep.subr.mxu0 0.0
    %2331 = vmatpush2.msra.mxu0 0.0
    %2332 = vmatprep.subr.mxu0 0.0
    %2333 = vmatpush2.msra.mxu0 0.0
    %2334 = vmatprep.mubr.f32.mxu0 0.0
    %2335 = vmatmul.mubr.f32.gmra.mxu0 0.0
    %v2336 = vpop.f32.mrf.mxu0
    %v2337 = vadd.f32 0.0, %v2336
    %v2338 = vpop.f32.mrf.mxu0
    %v2339 = vadd.f32 0.0, %v2338
    %2340 = vdwg.mxu0
    %2341 = vmatprep.subr.mxu0 0.0
    %2342 = vmatpush1.msra.mxu0 %v2262
    %2343 = vmatprep.subr.mxu0 0.0
    %2344 = vmatpush1.msra.mxu0 %v2259
    %2345 = vmatprep.subr.mxu0 0.0
    %2346 = vmatpush1.msra.mxu0 %v2256
    %2347 = vmatprep.subr.mxu0 0.0
    %2348 = vmatpush1.msra.mxu0 %v2253
    %2349 = vmatprep.subr.mxu0 0.0
    %2350 = vmatpush1.msra.mxu0 %v2250
    %2351 = vmatprep.subr.mxu0 0.0
    %2352 = vmatpush1.msra.mxu0 %v2247
    %2353 = vmatprep.subr.mxu0 0.0
    %2354 = vmatpush1.msra.mxu0 %v2244
    %2355 = vmatprep.subr.mxu0 0.0
    %2356 = vmatpush1.msra.mxu0 %v2241
    %2357 = vmatprep.subr.mxu0 0.0
    %2358 = vmatpush1.msra.mxu0 %v2238
    %2359 = vmatprep.subr.mxu0 0.0
    %2360 = vmatpush1.msra.mxu0 %v2235
    %2361 = vmatprep.subr.mxu0 0.0
    %2362 = vmatpush1.msra.mxu0 %v2232
    %2363 = vmatprep.subr.mxu0 0.0
    %2364 = vmatpush1.msra.mxu0 %v2229
    %2365 = vmatprep.subr.mxu0 0.0
    %2366 = vmatpush1.msra.mxu0 %v2226
    %2367 = vmatprep.subr.mxu0 0.0
    %2368 = vmatpush1.msra.mxu0 %v2223
    %2369 = vmatprep.subr.mxu0 0.0
    %2370 = vmatpush1.msra.mxu0 %v2220
    %2371 = vmatprep.subr.mxu0 0.0
    %2372 = vmatpush1.msra.mxu0 %v2217
    %2373 = vmatprep.subr.mxu0 0.0
    %2374 = vmatpush2.msra.mxu0 0.0
    %2375 = vmatprep.subr.mxu0 0.0
    %2376 = vmatpush2.msra.mxu0 0.0
    %2377 = vmatprep.subr.mxu0 0.0
    %2378 = vmatpush2.msra.mxu0 0.0
    %2379 = vmatprep.subr.mxu0 0.0
    %2380 = vmatpush2.msra.mxu0 0.0
    %2381 = vmatprep.subr.mxu0 0.0
    %2382 = vmatpush2.msra.mxu0 0.0
    %2383 = vmatprep.subr.mxu0 0.0
    %2384 = vmatpush2.msra.mxu0 0.0
    %2385 = vmatprep.subr.mxu0 0.0
    %2386 = vmatpush2.msra.mxu0 0.0
    %2387 = vmatprep.subr.mxu0 0.0
    %2388 = vmatpush2.msra.mxu0 0.0
    %2389 = vmatprep.subr.mxu0 0.0
    %2390 = vmatpush2.msra.mxu0 0.0
    %2391 = vmatprep.subr.mxu0 0.0
    %2392 = vmatpush2.msra.mxu0 0.0
    %2393 = vmatprep.subr.mxu0 0.0
    %2394 = vmatpush2.msra.mxu0 0.0
    %2395 = vmatprep.subr.mxu0 0.0
    %2396 = vmatpush2.msra.mxu0 0.0
    %2397 = vmatprep.subr.mxu0 0.0
    %2398 = vmatpush2.msra.mxu0 0.0
    %2399 = vmatprep.subr.mxu0 0.0
    %2400 = vmatpush2.msra.mxu0 0.0
    %2401 = vmatprep.subr.mxu0 0.0
    %2402 = vmatpush2.msra.mxu0 0.0
    %2403 = vmatprep.subr.mxu0 0.0
    %2404 = vmatpush2.msra.mxu0 0.0
    %2405 = vmatprep.mubr.f32.mxu0 0.0
    %2406 = vmatmul.mubr.f32.gmra.mxu0 0.0
    %v2407 = vpop.f32.mrf.mxu0
    %v2408 = vadd.f32 0.0, %v2407
    %v2409 = vpop.f32.mrf.mxu0
    %2410 = vdwg.mxu0
    %v2411 = vadd.f32 %v2168, %v2337
    %v2412 = vxor.u32 %v2411, 2147483648
    %v2413 = vmul.f32 %v2412, 1.442695
    %v2414 = vpow.pop %v2413
    %v2415 = vadd.f32 %v2414, 1.0
    %v2416 = vrcp.pop %v2415
    %v2417 = vmul.f32 1.0, %v2416
    %v2418 = vrot.slane %v2168, 2
    %v2420 = vadd.f32 %v2418, %v2339
    %v2421 = vxor.u32 %v2420, 2147483648
    %v2422 = vmul.f32 %v2421, 1.442695
    %v2423 = vpow.pop %v2422
    %v2424 = vadd.f32 %v2423, 1.0
    %v2425 = vrcp.pop %v2424
    %v2426 = vmul.f32 1.0, %v2425
    %v2427 = vadd.f32 %v2408, %v2268
    %v2428 = vmul.f32 %v2417, %v2427
    %v2429 = vrot.slane %v2168, 4
    %v2431 = vadd.f32 %v2429, %v2428
    %v2432 = vtanh.pop %v2431
    %v2433 = vsub.f32 1.0, %v2426
    %v2434 = vmul.f32 %v2433, %v2432
    %v2435 = vmul.f32 %v2426, 0.0
    %v2436 = vadd.f32 %v2434, %v2435
    %2437 = vmatprep.subr.mxu0 %v2261
    %2438 = vmatpush1.msra.mxu0 %v2260
    %2439 = vmatprep.subr.mxu0 %v2258
    %2440 = vmatpush1.msra.mxu0 %v2257
    %2441 = vmatprep.subr.mxu0 %v2255
    %2442 = vmatpush1.msra.mxu0 %v2254
    %2443 = vmatprep.subr.mxu0 %v2252
    %2444 = vmatpush1.msra.mxu0 %v2251
    %2445 = vmatprep.subr.mxu0 %v2249
    %2446 = vmatpush1.msra.mxu0 %v2248
    %2447 = vmatprep.subr.mxu0 %v2246
    %2448 = vmatpush1.msra.mxu0 %v2245
    %2449 = vmatprep.subr.mxu0 %v2243
    %2450 = vmatpush1.msra.mxu0 %v2242
    %2451 = vmatprep.subr.mxu0 %v2240
    %2452 = vmatpush1.msra.mxu0 %v2239
    %2453 = vmatprep.subr.mxu0 %v2237
    %2454 = vmatpush1.msra.mxu0 %v2236
    %2455 = vmatprep.subr.mxu0 %v2234
    %2456 = vmatpush1.msra.mxu0 %v2233
    %2457 = vmatprep.subr.mxu0 %v2231
    %2458 = vmatpush1.msra.mxu0 %v2230
    %2459 = vmatprep.subr.mxu0 %v2228
    %2460 = vmatpush1.msra.mxu0 %v2227
    %2461 = vmatprep.subr.mxu0 %v2225
    %2462 = vmatpush1.msra.mxu0 %v2224
    %2463 = vmatprep.subr.mxu0 %v2222
    %2464 = vmatpush1.msra.mxu0 %v2221
    %2465 = vmatprep.subr.mxu0 %v2219
    %2466 = vmatpush1.msra.mxu0 %v2218
    %2467 = vmatprep.subr.mxu0 %v2216
    %2468 = vmatpush1.msra.mxu0 %v2215
    %2469 = vmatprep.subr.mxu0 0.0
    %2470 = vmatpush2.msra.mxu0 0.0
    %2471 = vmatprep.subr.mxu0 0.0
    %2472 = vmatpush2.msra.mxu0 0.0
    %2473 = vmatprep.subr.mxu0 0.0
    %2474 = vmatpush2.msra.mxu0 0.0
    %2475 = vmatprep.subr.mxu0 0.0
    %2476 = vmatpush2.msra.mxu0 0.0
    %2477 = vmatprep.subr.mxu0 0.0
    %2478 = vmatpush2.msra.mxu0 0.0
    %2479 = vmatprep.subr.mxu0 0.0
    %2480 = vmatpush2.msra.mxu0 0.0
    %2481 = vmatprep.subr.mxu0 0.0
    %2482 = vmatpush2.msra.mxu0 0.0
    %2483 = vmatprep.subr.mxu0 0.0
    %2484 = vmatpush2.msra.mxu0 0.0
    %2485 = vmatprep.subr.mxu0 0.0
    %2486 = vmatpush2.msra.mxu0 0.0
    %2487 = vmatprep.subr.mxu0 0.0
    %2488 = vmatpush2.msra.mxu0 0.0
    %2489 = vmatprep.subr.mxu0 0.0
    %2490 = vmatpush2.msra.mxu0 0.0
    %2491 = vmatprep.subr.mxu0 0.0
    %2492 = vmatpush2.msra.mxu0 0.0
    %2493 = vmatprep.subr.mxu0 0.0
    %2494 = vmatpush2.msra.mxu0 0.0
    %2495 = vmatprep.subr.mxu0 0.0
    %2496 = vmatpush2.msra.mxu0 0.0
    %2497 = vmatprep.subr.mxu0 0.0
    %2498 = vmatpush2.msra.mxu0 0.0
    %2499 = vmatprep.subr.mxu0 0.0
    %2500 = vmatpush2.msra.mxu0 0.0
    %2501 = vmatprep.mubr.f32.mxu0 0.0
    %2502 = vmatmul.mubr.f32.gmra.mxu0 %v2436
    %v2503 = vpop.f32.mrf.mxu0
    %v2504 = vadd.f32 0.0, %v2503
    %v2505 = vpop.f32.mrf.mxu0
    %v2506 = vadd.f32 0.0, %v2505
    %2507 = vdwg.mxu0
    %2508 = vmatprep.subr.mxu0 0.0
    %2509 = vmatpush1.msra.mxu0 %v2262
    %2510 = vmatprep.subr.mxu0 0.0
    %2511 = vmatpush1.msra.mxu0 %v2259
    %2512 = vmatprep.subr.mxu0 0.0
    %2513 = vmatpush1.msra.mxu0 %v2256
    %2514 = vmatprep.subr.mxu0 0.0
    %2515 = vmatpush1.msra.mxu0 %v2253
    %2516 = vmatprep.subr.mxu0 0.0
    %2517 = vmatpush1.msra.mxu0 %v2250
    %2518 = vmatprep.subr.mxu0 0.0
    %2519 = vmatpush1.msra.mxu0 %v2247
    %2520 = vmatprep.subr.mxu0 0.0
    %2521 = vmatpush1.msra.mxu0 %v2244
    %2522 = vmatprep.subr.mxu0 0.0
    %2523 = vmatpush1.msra.mxu0 %v2241
    %2524 = vmatprep.subr.mxu0 0.0
    %2525 = vmatpush1.msra.mxu0 %v2238
    %2526 = vmatprep.subr.mxu0 0.0
    %2527 = vmatpush1.msra.mxu0 %v2235
    %2528 = vmatprep.subr.mxu0 0.0
    %2529 = vmatpush1.msra.mxu0 %v2232
    %2530 = vmatprep.subr.mxu0 0.0
    %2531 = vmatpush1.msra.mxu0 %v2229
    %2532 = vmatprep.subr.mxu0 0.0
    %2533 = vmatpush1.msra.mxu0 %v2226
    %2534 = vmatprep.subr.mxu0 0.0
    %2535 = vmatpush1.msra.mxu0 %v2223
    %2536 = vmatprep.subr.mxu0 0.0
    %2537 = vmatpush1.msra.mxu0 %v2220
    %2538 = vmatprep.subr.mxu0 0.0
    %2539 = vmatpush1.msra.mxu0 %v2217
    %2540 = vmatprep.subr.mxu0 0.0
    %2541 = vmatpush2.msra.mxu0 0.0
    %2542 = vmatprep.subr.mxu0 0.0
    %2543 = vmatpush2.msra.mxu0 0.0
    %2544 = vmatprep.subr.mxu0 0.0
    %2545 = vmatpush2.msra.mxu0 0.0
    %2546 = vmatprep.subr.mxu0 0.0
    %2547 = vmatpush2.msra.mxu0 0.0
    %2548 = vmatprep.subr.mxu0 0.0
    %2549 = vmatpush2.msra.mxu0 0.0
    %2550 = vmatprep.subr.mxu0 0.0
    %2551 = vmatpush2.msra.mxu0 0.0
    %2552 = vmatprep.subr.mxu0 0.0
    %2553 = vmatpush2.msra.mxu0 0.0
    %2554 = vmatprep.subr.mxu0 0.0
    %2555 = vmatpush2.msra.mxu0 0.0
    %2556 = vmatprep.subr.mxu0 0.0
    %2557 = vmatpush2.msra.mxu0 0.0
    %2558 = vmatprep.subr.mxu0 0.0
    %2559 = vmatpush2.msra.mxu0 0.0
    %2560 = vmatprep.subr.mxu0 0.0
    %2561 = vmatpush2.msra.mxu0 0.0
    %2562 = vmatprep.subr.mxu0 0.0
    %2563 = vmatpush2.msra.mxu0 0.0
    %2564 = vmatprep.subr.mxu0 0.0
    %2565 = vmatpush2.msra.mxu0 0.0
    %2566 = vmatprep.subr.mxu0 0.0
    %2567 = vmatpush2.msra.mxu0 0.0
    %2568 = vmatprep.subr.mxu0 0.0
    %2569 = vmatpush2.msra.mxu0 0.0
    %2570 = vmatprep.subr.mxu0 0.0
    %2571 = vmatpush2.msra.mxu0 0.0
    %2572 = vmatprep.mubr.f32.mxu0 0.0
    %2573 = vmatmul.mubr.f32.gmra.mxu0 %v2436
    %v2574 = vpop.f32.mrf.mxu0
    %v2575 = vadd.f32 0.0, %v2574
    %v2576 = vpop.f32.mrf.mxu0
    %2577 = vdwg.mxu0
    %v2578 = vadd.f32 %v2169, %v2504
    %v2579 = vxor.u32 %v2578, 2147483648
    %v2580 = vmul.f32 %v2579, 1.442695
    %v2581 = vpow.pop %v2580
    %v2582 = vadd.f32 %v2581, 1.0
    %v2583 = vrcp.pop %v2582
    %v2584 = vmul.f32 1.0, %v2583
    %v2585 = vrot.slane %v2169, 2
    %v2587 = vadd.f32 %v2585, %v2506
    %v2588 = vxor.u32 %v2587, 2147483648
    %v2589 = vmul.f32 %v2588, 1.442695
    %v2590 = vpow.pop %v2589
    %v2591 = vadd.f32 %v2590, 1.0
    %v2592 = vrcp.pop %v2591
    %v2593 = vmul.f32 1.0, %v2592
    %v2594 = vadd.f32 %v2575, %v2268
    %v2595 = vmul.f32 %v2584, %v2594
    %v2596 = vrot.slane %v2169, 4
    %v2598 = vadd.f32 %v2596, %v2595
    %v2599 = vtanh.pop %v2598
    %v2600 = vsub.f32 1.0, %v2593
    %v2601 = vmul.f32 %v2600, %v2599
    %v2602 = vmul.f32 %v2593, %v2436
    %v2603 = vadd.f32 %v2601, %v2602
    %2604 = vmatprep.subr.mxu0 %v2261
    %2605 = vmatpush1.msra.mxu0 %v2260
    %2606 = vmatprep.subr.mxu0 %v2258
    %2607 = vmatpush1.msra.mxu0 %v2257
    %2608 = vmatprep.subr.mxu0 %v2255
    %2609 = vmatpush1.msra.mxu0 %v2254
    %2610 = vmatprep.subr.mxu0 %v2252
    %2611 = vmatpush1.msra.mxu0 %v2251
    %2612 = vmatprep.subr.mxu0 %v2249
    %2613 = vmatpush1.msra.mxu0 %v2248
    %2614 = vmatprep.subr.mxu0 %v2246
    %2615 = vmatpush1.msra.mxu0 %v2245
    %2616 = vmatprep.subr.mxu0 %v2243
    %2617 = vmatpush1.msra.mxu0 %v2242
    %2618 = vmatprep.subr.mxu0 %v2240
    %2619 = vmatpush1.msra.mxu0 %v2239
    %2620 = vmatprep.subr.mxu0 %v2237
    %2621 = vmatpush1.msra.mxu0 %v2236
    %2622 = vmatprep.subr.mxu0 %v2234
    %2623 = vmatpush1.msra.mxu0 %v2233
    %2624 = vmatprep.subr.mxu0 %v2231
    %2625 = vmatpush1.msra.mxu0 %v2230
    %2626 = vmatprep.subr.mxu0 %v2228
    %2627 = vmatpush1.msra.mxu0 %v2227
    %2628 = vmatprep.subr.mxu0 %v2225
    %2629 = vmatpush1.msra.mxu0 %v2224
    %2630 = vmatprep.subr.mxu0 %v2222
    %2631 = vmatpush1.msra.mxu0 %v2221
    %2632 = vmatprep.subr.mxu0 %v2219
    %2633 = vmatpush1.msra.mxu0 %v2218
    %2634 = vmatprep.subr.mxu0 %v2216
    %2635 = vmatpush1.msra.mxu0 %v2215
    %2636 = vmatprep.subr.mxu0 0.0
    %2637 = vmatpush2.msra.mxu0 0.0
    %2638 = vmatprep.subr.mxu0 0.0
    %2639 = vmatpush2.msra.mxu0 0.0
    %2640 = vmatprep.subr.mxu0 0.0
    %2641 = vmatpush2.msra.mxu0 0.0
    %2642 = vmatprep.subr.mxu0 0.0
    %2643 = vmatpush2.msra.mxu0 0.0
    %2644 = vmatprep.subr.mxu0 0.0
    %2645 = vmatpush2.msra.mxu0 0.0
    %2646 = vmatprep.subr.mxu0 0.0
    %2647 = vmatpush2.msra.mxu0 0.0
    %2648 = vmatprep.subr.mxu0 0.0
    %2649 = vmatpush2.msra.mxu0 0.0
    %2650 = vmatprep.subr.mxu0 0.0
    %2651 = vmatpush2.msra.mxu0 0.0
    %2652 = vmatprep.subr.mxu0 0.0
    %2653 = vmatpush2.msra.mxu0 0.0
    %2654 = vmatprep.subr.mxu0 0.0
    %2655 = vmatpush2.msra.mxu0 0.0
    %2656 = vmatprep.subr.mxu0 0.0
    %2657 = vmatpush2.msra.mxu0 0.0
    %2658 = vmatprep.subr.mxu0 0.0
    %2659 = vmatpush2.msra.mxu0 0.0
    %2660 = vmatprep.subr.mxu0 0.0
    %2661 = vmatpush2.msra.mxu0 0.0
    %2662 = vmatprep.subr.mxu0 0.0
    %2663 = vmatpush2.msra.mxu0 0.0
    %2664 = vmatprep.subr.mxu0 0.0
    %2665 = vmatpush2.msra.mxu0 0.0
    %2666 = vmatprep.subr.mxu0 0.0
    %2667 = vmatpush2.msra.mxu0 0.0
    %2668 = vmatprep.mubr.f32.mxu0 0.0
    %2669 = vmatmul.mubr.f32.gmra.mxu0 %v2603
    %v2670 = vpop.f32.mrf.mxu0
    %v2671 = vadd.f32 0.0, %v2670
    %v2672 = vpop.f32.mrf.mxu0
    %v2673 = vadd.f32 0.0, %v2672
    %2674 = vdwg.mxu0
    %2675 = vmatprep.subr.mxu0 0.0
    %2676 = vmatpush1.msra.mxu0 %v2262
    %2677 = vmatprep.subr.mxu0 0.0
    %2678 = vmatpush1.msra.mxu0 %v2259
    %2679 = vmatprep.subr.mxu0 0.0
    %2680 = vmatpush1.msra.mxu0 %v2256
    %2681 = vmatprep.subr.mxu0 0.0
    %2682 = vmatpush1.msra.mxu0 %v2253
    %2683 = vmatprep.subr.mxu0 0.0
    %2684 = vmatpush1.msra.mxu0 %v2250
    %2685 = vmatprep.subr.mxu0 0.0
    %2686 = vmatpush1.msra.mxu0 %v2247
    %2687 = vmatprep.subr.mxu0 0.0
    %2688 = vmatpush1.msra.mxu0 %v2244
    %2689 = vmatprep.subr.mxu0 0.0
    %2690 = vmatpush1.msra.mxu0 %v2241
    %2691 = vmatprep.subr.mxu0 0.0
    %2692 = vmatpush1.msra.mxu0 %v2238
    %2693 = vmatprep.subr.mxu0 0.0
    %2694 = vmatpush1.msra.mxu0 %v2235
    %2695 = vmatprep.subr.mxu0 0.0
    %2696 = vmatpush1.msra.mxu0 %v2232
    %2697 = vmatprep.subr.mxu0 0.0
    %2698 = vmatpush1.msra.mxu0 %v2229
    %2699 = vmatprep.subr.mxu0 0.0
    %2700 = vmatpush1.msra.mxu0 %v2226
    %2701 = vmatprep.subr.mxu0 0.0
    %2702 = vmatpush1.msra.mxu0 %v2223
    %2703 = vmatprep.subr.mxu0 0.0
    %2704 = vmatpush1.msra.mxu0 %v2220
    %2705 = vmatprep.subr.mxu0 0.0
    %2706 = vmatpush1.msra.mxu0 %v2217
    %2707 = vmatprep.subr.mxu0 0.0
    %2708 = vmatpush2.msra.mxu0 0.0
    %2709 = vmatprep.subr.mxu0 0.0
    %2710 = vmatpush2.msra.mxu0 0.0
    %2711 = vmatprep.subr.mxu0 0.0
    %2712 = vmatpush2.msra.mxu0 0.0
    %2713 = vmatprep.subr.mxu0 0.0
    %2714 = vmatpush2.msra.mxu0 0.0
    %2715 = vmatprep.subr.mxu0 0.0
    %2716 = vmatpush2.msra.mxu0 0.0
    %2717 = vmatprep.subr.mxu0 0.0
    %2718 = vmatpush2.msra.mxu0 0.0
    %2719 = vmatprep.subr.mxu0 0.0
    %2720 = vmatpush2.msra.mxu0 0.0
    %2721 = vmatprep.subr.mxu0 0.0
    %2722 = vmatpush2.msra.mxu0 0.0
    %2723 = vmatprep.subr.mxu0 0.0
    %2724 = vmatpush2.msra.mxu0 0.0
    %2725 = vmatprep.subr.mxu0 0.0
    %2726 = vmatpush2.msra.mxu0 0.0
    %2727 = vmatprep.subr.mxu0 0.0
    %2728 = vmatpush2.msra.mxu0 0.0
    %2729 = vmatprep.subr.mxu0 0.0
    %2730 = vmatpush2.msra.mxu0 0.0
    %2731 = vmatprep.subr.mxu0 0.0
    %2732 = vmatpush2.msra.mxu0 0.0
    %2733 = vmatprep.subr.mxu0 0.0
    %2734 = vmatpush2.msra.mxu0 0.0
    %2735 = vmatprep.subr.mxu0 0.0
    %2736 = vmatpush2.msra.mxu0 0.0
    %2737 = vmatprep.subr.mxu0 0.0
    %2738 = vmatpush2.msra.mxu0 0.0
    %2739 = vmatprep.mubr.f32.mxu0 0.0
    %2740 = vmatmul.mubr.f32.gmra.mxu0 %v2603
    %v2741 = vpop.f32.mrf.mxu0
    %v2742 = vadd.f32 0.0, %v2741
    %v2743 = vpop.f32.mrf.mxu0
    %2744 = vdwg.mxu0
    %v2745 = vadd.f32 %v2170, %v2671
    %v2746 = vxor.u32 %v2745, 2147483648
    %v2747 = vmul.f32 %v2746, 1.442695
    %v2748 = vpow.pop %v2747
    %v2749 = vadd.f32 %v2748, 1.0
    %v2750 = vrcp.pop %v2749
    %v2751 = vmul.f32 1.0, %v2750
    %v2752 = vrot.slane %v2170, 2
    %v2754 = vadd.f32 %v2752, %v2673
    %v2755 = vxor.u32 %v2754, 2147483648
    %v2756 = vmul.f32 %v2755, 1.442695
    %v2757 = vpow.pop %v2756
    %v2758 = vadd.f32 %v2757, 1.0
    %v2759 = vrcp.pop %v2758
    %v2760 = vmul.f32 1.0, %v2759
    %v2761 = vadd.f32 %v2742, %v2268
    %v2762 = vmul.f32 %v2751, %v2761
    %v2763 = vrot.slane %v2170, 4
    %v2765 = vadd.f32 %v2763, %v2762
    %v2766 = vtanh.pop %v2765
    %v2767 = vsub.f32 1.0, %v2760
    %v2768 = vmul.f32 %v2767, %v2766
    %v2769 = vmul.f32 %v2760, %v2603
    %v2770 = vadd.f32 %v2768, %v2769
    %2771 = vmatprep.subr.mxu0 %v2261
    %2772 = vmatpush1.msra.mxu0 %v2260
    %2773 = vmatprep.subr.mxu0 %v2258
    %2774 = vmatpush1.msra.mxu0 %v2257
    %2775 = vmatprep.subr.mxu0 %v2255
    %2776 = vmatpush1.msra.mxu0 %v2254
    %2777 = vmatprep.subr.mxu0 %v2252
    %2778 = vmatpush1.msra.mxu0 %v2251
    %2779 = vmatprep.subr.mxu0 %v2249
    %2780 = vmatpush1.msra.mxu0 %v2248
    %2781 = vmatprep.subr.mxu0 %v2246
    %2782 = vmatpush1.msra.mxu0 %v2245
    %2783 = vmatprep.subr.mxu0 %v2243
    %2784 = vmatpush1.msra.mxu0 %v2242
    %2785 = vmatprep.subr.mxu0 %v2240
    %2786 = vmatpush1.msra.mxu0 %v2239
    %2787 = vmatprep.subr.mxu0 %v2237
    %2788 = vmatpush1.msra.mxu0 %v2236
    %2789 = vmatprep.subr.mxu0 %v2234
    %2790 = vmatpush1.msra.mxu0 %v2233
    %2791 = vmatprep.subr.mxu0 %v2231
    %2792 = vmatpush1.msra.mxu0 %v2230
    %2793 = vmatprep.subr.mxu0 %v2228
    %2794 = vmatpush1.msra.mxu0 %v2227
    %2795 = vmatprep.subr.mxu0 %v2225
    %2796 = vmatpush1.msra.mxu0 %v2224
    %2797 = vmatprep.subr.mxu0 %v2222
    %2798 = vmatpush1.msra.mxu0 %v2221
    %2799 = vmatprep.subr.mxu0 %v2219
    %2800 = vmatpush1.msra.mxu0 %v2218
    %2801 = vmatprep.subr.mxu0 %v2216
    %2802 = vmatpush1.msra.mxu0 %v2215
    %2803 = vmatprep.subr.mxu0 0.0
    %2804 = vmatpush2.msra.mxu0 0.0
    %2805 = vmatprep.subr.mxu0 0.0
    %2806 = vmatpush2.msra.mxu0 0.0
    %2807 = vmatprep.subr.mxu0 0.0
    %2808 = vmatpush2.msra.mxu0 0.0
    %2809 = vmatprep.subr.mxu0 0.0
    %2810 = vmatpush2.msra.mxu0 0.0
    %2811 = vmatprep.subr.mxu0 0.0
    %2812 = vmatpush2.msra.mxu0 0.0
    %2813 = vmatprep.subr.mxu0 0.0
    %2814 = vmatpush2.msra.mxu0 0.0
    %2815 = vmatprep.subr.mxu0 0.0
    %2816 = vmatpush2.msra.mxu0 0.0
    %2817 = vmatprep.subr.mxu0 0.0
    %2818 = vmatpush2.msra.mxu0 0.0
    %2819 = vmatprep.subr.mxu0 0.0
    %2820 = vmatpush2.msra.mxu0 0.0
    %2821 = vmatprep.subr.mxu0 0.0
    %2822 = vmatpush2.msra.mxu0 0.0
    %2823 = vmatprep.subr.mxu0 0.0
    %2824 = vmatpush2.msra.mxu0 0.0
    %2825 = vmatprep.subr.mxu0 0.0
    %2826 = vmatpush2.msra.mxu0 0.0
    %2827 = vmatprep.subr.mxu0 0.0
    %2828 = vmatpush2.msra.mxu0 0.0
    %2829 = vmatprep.subr.mxu0 0.0
    %2830 = vmatpush2.msra.mxu0 0.0
    %2831 = vmatprep.subr.mxu0 0.0
    %2832 = vmatpush2.msra.mxu0 0.0
    %2833 = vmatprep.subr.mxu0 0.0
    %2834 = vmatpush2.msra.mxu0 0.0
    %2835 = vmatprep.mubr.f32.mxu0 0.0
    %2836 = vmatmul.mubr.f32.gmra.mxu0 %v2770
    %v2837 = vpop.f32.mrf.mxu0
    %v2838 = vadd.f32 0.0, %v2837
    %v2839 = vpop.f32.mrf.mxu0
    %v2840 = vadd.f32 0.0, %v2839
    %2841 = vdwg.mxu0
    %2842 = vmatprep.subr.mxu0 0.0
    %2843 = vmatpush1.msra.mxu0 %v2262
    %2844 = vmatprep.subr.mxu0 0.0
    %2845 = vmatpush1.msra.mxu0 %v2259
    %2846 = vmatprep.subr.mxu0 0.0
    %2847 = vmatpush1.msra.mxu0 %v2256
    %2848 = vmatprep.subr.mxu0 0.0
    %2849 = vmatpush1.msra.mxu0 %v2253
    %2850 = vmatprep.subr.mxu0 0.0
    %2851 = vmatpush1.msra.mxu0 %v2250
    %2852 = vmatprep.subr.mxu0 0.0
    %2853 = vmatpush1.msra.mxu0 %v2247
    %2854 = vmatprep.subr.mxu0 0.0
    %2855 = vmatpush1.msra.mxu0 %v2244
    %2856 = vmatprep.subr.mxu0 0.0
    %2857 = vmatpush1.msra.mxu0 %v2241
    %2858 = vmatprep.subr.mxu0 0.0
    %2859 = vmatpush1.msra.mxu0 %v2238
    %2860 = vmatprep.subr.mxu0 0.0
    %2861 = vmatpush1.msra.mxu0 %v2235
    %2862 = vmatprep.subr.mxu0 0.0
    %2863 = vmatpush1.msra.mxu0 %v2232
    %2864 = vmatprep.subr.mxu0 0.0
    %2865 = vmatpush1.msra.mxu0 %v2229
    %2866 = vmatprep.subr.mxu0 0.0
    %2867 = vmatpush1.msra.mxu0 %v2226
    %2868 = vmatprep.subr.mxu0 0.0
    %2869 = vmatpush1.msra.mxu0 %v2223
    %2870 = vmatprep.subr.mxu0 0.0
    %2871 = vmatpush1.msra.mxu0 %v2220
    %2872 = vmatprep.subr.mxu0 0.0
    %2873 = vmatpush1.msra.mxu0 %v2217
    %2874 = vmatprep.subr.mxu0 0.0
    %2875 = vmatpush2.msra.mxu0 0.0
    %2876 = vmatprep.subr.mxu0 0.0
    %2877 = vmatpush2.msra.mxu0 0.0
    %2878 = vmatprep.subr.mxu0 0.0
    %2879 = vmatpush2.msra.mxu0 0.0
    %2880 = vmatprep.subr.mxu0 0.0
    %2881 = vmatpush2.msra.mxu0 0.0
    %2882 = vmatprep.subr.mxu0 0.0
    %2883 = vmatpush2.msra.mxu0 0.0
    %2884 = vmatprep.subr.mxu0 0.0
    %2885 = vmatpush2.msra.mxu0 0.0
    %2886 = vmatprep.subr.mxu0 0.0
    %2887 = vmatpush2.msra.mxu0 0.0
    %2888 = vmatprep.subr.mxu0 0.0
    %2889 = vmatpush2.msra.mxu0 0.0
    %2890 = vmatprep.subr.mxu0 0.0
    %2891 = vmatpush2.msra.mxu0 0.0
    %2892 = vmatprep.subr.mxu0 0.0
    %2893 = vmatpush2.msra.mxu0 0.0
    %2894 = vmatprep.subr.mxu0 0.0
    %2895 = vmatpush2.msra.mxu0 0.0
    %2896 = vmatprep.subr.mxu0 0.0
    %2897 = vmatpush2.msra.mxu0 0.0
    %2898 = vmatprep.subr.mxu0 0.0
    %2899 = vmatpush2.msra.mxu0 0.0
    %2900 = vmatprep.subr.mxu0 0.0
    %2901 = vmatpush2.msra.mxu0 0.0
    %2902 = vmatprep.subr.mxu0 0.0
    %2903 = vmatpush2.msra.mxu0 0.0
    %2904 = vmatprep.subr.mxu0 0.0
    %2905 = vmatpush2.msra.mxu0 0.0
    %2906 = vmatprep.mubr.f32.mxu0 0.0
    %2907 = vmatmul.mubr.f32.gmra.mxu0 %v2770
    %v2908 = vpop.f32.mrf.mxu0
    %v2909 = vadd.f32 0.0, %v2908
    %v2910 = vpop.f32.mrf.mxu0
    %2911 = vdwg.mxu0
    %v2912 = vadd.f32 %v2171, %v2838
    %v2913 = vxor.u32 %v2912, 2147483648
    %v2914 = vmul.f32 %v2913, 1.442695
    %v2915 = vpow.pop %v2914
    %v2916 = vadd.f32 %v2915, 1.0
    %v2917 = vrcp.pop %v2916
    %v2918 = vmul.f32 1.0, %v2917
    %v2919 = vrot.slane %v2171, 2
    %v2921 = vadd.f32 %v2919, %v2840
    %v2922 = vxor.u32 %v2921, 2147483648
    %v2923 = vmul.f32 %v2922, 1.442695
    %v2924 = vpow.pop %v2923
    %v2925 = vadd.f32 %v2924, 1.0
    %v2926 = vrcp.pop %v2925
    %v2927 = vmul.f32 1.0, %v2926
    %v2928 = vadd.f32 %v2909, %v2268
    %v2929 = vmul.f32 %v2918, %v2928
    %v2930 = vrot.slane %v2171, 4
    %v2932 = vadd.f32 %v2930, %v2929
    %v2933 = vtanh.pop %v2932
    %v2934 = vsub.f32 1.0, %v2927
    %v2935 = vmul.f32 %v2934, %v2933
    %v2936 = vmul.f32 %v2927, %v2770
    %v2937 = vadd.f32 %v2935, %v2936
    %2938 = vmatprep.subr.mxu0 %v2261
    %2939 = vmatpush1.msra.mxu0 %v2260
    %2940 = vmatprep.subr.mxu0 %v2258
    %2941 = vmatpush1.msra.mxu0 %v2257
    %2942 = vmatprep.subr.mxu0 %v2255
    %2943 = vmatpush1.msra.mxu0 %v2254
    %2944 = vmatprep.subr.mxu0 %v2252
    %2945 = vmatpush1.msra.mxu0 %v2251
    %2946 = vmatprep.subr.mxu0 %v2249
    %2947 = vmatpush1.msra.mxu0 %v2248
    %2948 = vmatprep.subr.mxu0 %v2246
    %2949 = vmatpush1.msra.mxu0 %v2245
    %2950 = vmatprep.subr.mxu0 %v2243
    %2951 = vmatpush1.msra.mxu0 %v2242
    %2952 = vmatprep.subr.mxu0 %v2240
    %2953 = vmatpush1.msra.mxu0 %v2239
    %2954 = vmatprep.subr.mxu0 %v2237
    %2955 = vmatpush1.msra.mxu0 %v2236
    %2956 = vmatprep.subr.mxu0 %v2234
    %2957 = vmatpush1.msra.mxu0 %v2233
    %2958 = vmatprep.subr.mxu0 %v2231
    %2959 = vmatpush1.msra.mxu0 %v2230
    %2960 = vmatprep.subr.mxu0 %v2228
    %2961 = vmatpush1.msra.mxu0 %v2227
    %2962 = vmatprep.subr.mxu0 %v2225
    %2963 = vmatpush1.msra.mxu0 %v2224
    %2964 = vmatprep.subr.mxu0 %v2222
    %2965 = vmatpush1.msra.mxu0 %v2221
    %2966 = vmatprep.subr.mxu0 %v2219
    %2967 = vmatpush1.msra.mxu0 %v2218
    %2968 = vmatprep.subr.mxu0 %v2216
    %2969 = vmatpush1.msra.mxu0 %v2215
    %2970 = vmatprep.subr.mxu0 0.0
    %2971 = vmatpush2.msra.mxu0 0.0
    %2972 = vmatprep.subr.mxu0 0.0
    %2973 = vmatpush2.msra.mxu0 0.0
    %2974 = vmatprep.subr.mxu0 0.0
    %2975 = vmatpush2.msra.mxu0 0.0
    %2976 = vmatprep.subr.mxu0 0.0
    %2977 = vmatpush2.msra.mxu0 0.0
    %2978 = vmatprep.subr.mxu0 0.0
    %2979 = vmatpush2.msra.mxu0 0.0
    %2980 = vmatprep.subr.mxu0 0.0
    %2981 = vmatpush2.msra.mxu0 0.0
    %2982 = vmatprep.subr.mxu0 0.0
    %2983 = vmatpush2.msra.mxu0 0.0
    %2984 = vmatprep.subr.mxu0 0.0
    %2985 = vmatpush2.msra.mxu0 0.0
    %2986 = vmatprep.subr.mxu0 0.0
    %2987 = vmatpush2.msra.mxu0 0.0
    %2988 = vmatprep.subr.mxu0 0.0
    %2989 = vmatpush2.msra.mxu0 0.0
    %2990 = vmatprep.subr.mxu0 0.0
    %2991 = vmatpush2.msra.mxu0 0.0
    %2992 = vmatprep.subr.mxu0 0.0
    %2993 = vmatpush2.msra.mxu0 0.0
    %2994 = vmatprep.subr.mxu0 0.0
    %2995 = vmatpush2.msra.mxu0 0.0
    %2996 = vmatprep.subr.mxu0 0.0
    %2997 = vmatpush2.msra.mxu0 0.0
    %2998 = vmatprep.subr.mxu0 0.0
    %2999 = vmatpush2.msra.mxu0 0.0
    %3000 = vmatprep.subr.mxu0 0.0
    %3001 = vmatpush2.msra.mxu0 0.0
    %3002 = vmatprep.mubr.f32.mxu0 0.0
    %3003 = vmatmul.mubr.f32.gmra.mxu0 %v2937
    %v3004 = vpop.f32.mrf.mxu0
    %v3005 = vadd.f32 0.0, %v3004
    %v3006 = vpop.f32.mrf.mxu0
    %v3007 = vadd.f32 0.0, %v3006
    %3008 = vdwg.mxu0
    %3009 = vmatprep.subr.mxu0 0.0
    %3010 = vmatpush1.msra.mxu0 %v2262
    %3011 = vmatprep.subr.mxu0 0.0
    %3012 = vmatpush1.msra.mxu0 %v2259
    %3013 = vmatprep.subr.mxu0 0.0
    %3014 = vmatpush1.msra.mxu0 %v2256
    %3015 = vmatprep.subr.mxu0 0.0
    %3016 = vmatpush1.msra.mxu0 %v2253
    %3017 = vmatprep.subr.mxu0 0.0
    %3018 = vmatpush1.msra.mxu0 %v2250
    %3019 = vmatprep.subr.mxu0 0.0
    %3020 = vmatpush1.msra.mxu0 %v2247
    %3021 = vmatprep.subr.mxu0 0.0
    %3022 = vmatpush1.msra.mxu0 %v2244
    %3023 = vmatprep.subr.mxu0 0.0
    %3024 = vmatpush1.msra.mxu0 %v2241
    %3025 = vmatprep.subr.mxu0 0.0
    %3026 = vmatpush1.msra.mxu0 %v2238
    %3027 = vmatprep.subr.mxu0 0.0
    %3028 = vmatpush1.msra.mxu0 %v2235
    %3029 = vmatprep.subr.mxu0 0.0
    %3030 = vmatpush1.msra.mxu0 %v2232
    %3031 = vmatprep.subr.mxu0 0.0
    %3032 = vmatpush1.msra.mxu0 %v2229
    %3033 = vmatprep.subr.mxu0 0.0
    %3034 = vmatpush1.msra.mxu0 %v2226
    %3035 = vmatprep.subr.mxu0 0.0
    %3036 = vmatpush1.msra.mxu0 %v2223
    %3037 = vmatprep.subr.mxu0 0.0
    %3038 = vmatpush1.msra.mxu0 %v2220
    %3039 = vmatprep.subr.mxu0 0.0
    %3040 = vmatpush1.msra.mxu0 %v2217
    %3041 = vmatprep.subr.mxu0 0.0
    %3042 = vmatpush2.msra.mxu0 0.0
    %3043 = vmatprep.subr.mxu0 0.0
    %3044 = vmatpush2.msra.mxu0 0.0
    %3045 = vmatprep.subr.mxu0 0.0
    %3046 = vmatpush2.msra.mxu0 0.0
    %3047 = vmatprep.subr.mxu0 0.0
    %3048 = vmatpush2.msra.mxu0 0.0
    %3049 = vmatprep.subr.mxu0 0.0
    %3050 = vmatpush2.msra.mxu0 0.0
    %3051 = vmatprep.subr.mxu0 0.0
    %3052 = vmatpush2.msra.mxu0 0.0
    %3053 = vmatprep.subr.mxu0 0.0
    %3054 = vmatpush2.msra.mxu0 0.0
    %3055 = vmatprep.subr.mxu0 0.0
    %3056 = vmatpush2.msra.mxu0 0.0
    %3057 = vmatprep.subr.mxu0 0.0
    %3058 = vmatpush2.msra.mxu0 0.0
    %3059 = vmatprep.subr.mxu0 0.0
    %3060 = vmatpush2.msra.mxu0 0.0
    %3061 = vmatprep.subr.mxu0 0.0
    %3062 = vmatpush2.msra.mxu0 0.0
    %3063 = vmatprep.subr.mxu0 0.0
    %3064 = vmatpush2.msra.mxu0 0.0
    %3065 = vmatprep.subr.mxu0 0.0
    %3066 = vmatpush2.msra.mxu0 0.0
    %3067 = vmatprep.subr.mxu0 0.0
    %3068 = vmatpush2.msra.mxu0 0.0
    %3069 = vmatprep.subr.mxu0 0.0
    %3070 = vmatpush2.msra.mxu0 0.0
    %3071 = vmatprep.subr.mxu0 0.0
    %3072 = vmatpush2.msra.mxu0 0.0
    %3073 = vmatprep.mubr.f32.mxu0 0.0
    %3074 = vmatmul.mubr.f32.gmra.mxu0 %v2937
    %v3075 = vpop.f32.mrf.mxu0
    %v3076 = vadd.f32 0.0, %v3075
    %v3077 = vpop.f32.mrf.mxu0
    %3078 = vdwg.mxu0
    %v3079 = vadd.f32 %v2203, %v3005
    %v3080 = vxor.u32 %v3079, 2147483648
    %v3081 = vmul.f32 %v3080, 1.442695
    %v3082 = vpow.pop %v3081
    %v3083 = vadd.f32 %v3082, 1.0
    %v3084 = vrcp.pop %v3083
    %v3085 = vmul.f32 1.0, %v3084
    %v3086 = vrot.slane %v2203, 2
    %v3088 = vadd.f32 %v3086, %v3007
    %v3089 = vxor.u32 %v3088, 2147483648
    %v3090 = vmul.f32 %v3089, 1.442695
    %v3091 = vpow.pop %v3090
    %v3092 = vadd.f32 %v3091, 1.0
    %v3093 = vrcp.pop %v3092
    %v3094 = vmul.f32 1.0, %v3093
    %v3095 = vadd.f32 %v3076, %v2268
    %v3096 = vmul.f32 %v3085, %v3095
    %v3097 = vrot.slane %v2203, 4
    %v3099 = vadd.f32 %v3097, %v3096
    %v3100 = vtanh.pop %v3099
    %v3101 = vsub.f32 1.0, %v3094
    %v3102 = vmul.f32 %v3101, %v3100
    %v3103 = vmul.f32 %v3094, %v2937
    %v3104 = vadd.f32 %v3102, %v3103
    %3105 = vmatprep.subr.mxu0 %v2261
    %3106 = vmatpush1.msra.mxu0 %v2260
    %3107 = vmatprep.subr.mxu0 %v2258
    %3108 = vmatpush1.msra.mxu0 %v2257
    %3109 = vmatprep.subr.mxu0 %v2255
    %3110 = vmatpush1.msra.mxu0 %v2254
    %3111 = vmatprep.subr.mxu0 %v2252
    %3112 = vmatpush1.msra.mxu0 %v2251
    %3113 = vmatprep.subr.mxu0 %v2249
    %3114 = vmatpush1.msra.mxu0 %v2248
    %3115 = vmatprep.subr.mxu0 %v2246
    %3116 = vmatpush1.msra.mxu0 %v2245
    %3117 = vmatprep.subr.mxu0 %v2243
    %3118 = vmatpush1.msra.mxu0 %v2242
    %3119 = vmatprep.subr.mxu0 %v2240
    %3120 = vmatpush1.msra.mxu0 %v2239
    %3121 = vmatprep.subr.mxu0 %v2237
    %3122 = vmatpush1.msra.mxu0 %v2236
    %3123 = vmatprep.subr.mxu0 %v2234
    %3124 = vmatpush1.msra.mxu0 %v2233
    %3125 = vmatprep.subr.mxu0 %v2231
    %3126 = vmatpush1.msra.mxu0 %v2230
    %3127 = vmatprep.subr.mxu0 %v2228
    %3128 = vmatpush1.msra.mxu0 %v2227
    %3129 = vmatprep.subr.mxu0 %v2225
    %3130 = vmatpush1.msra.mxu0 %v2224
    %3131 = vmatprep.subr.mxu0 %v2222
    %3132 = vmatpush1.msra.mxu0 %v2221
    %3133 = vmatprep.subr.mxu0 %v2219
    %3134 = vmatpush1.msra.mxu0 %v2218
    %3135 = vmatprep.subr.mxu0 %v2216
    %3136 = vmatpush1.msra.mxu0 %v2215
    %3137 = vmatprep.subr.mxu0 0.0
    %3138 = vmatpush2.msra.mxu0 0.0
    %3139 = vmatprep.subr.mxu0 0.0
    %3140 = vmatpush2.msra.mxu0 0.0
    %3141 = vmatprep.subr.mxu0 0.0
    %3142 = vmatpush2.msra.mxu0 0.0
    %3143 = vmatprep.subr.mxu0 0.0
    %3144 = vmatpush2.msra.mxu0 0.0
    %3145 = vmatprep.subr.mxu0 0.0
    %3146 = vmatpush2.msra.mxu0 0.0
    %3147 = vmatprep.subr.mxu0 0.0
    %3148 = vmatpush2.msra.mxu0 0.0
    %3149 = vmatprep.subr.mxu0 0.0
    %3150 = vmatpush2.msra.mxu0 0.0
    %3151 = vmatprep.subr.mxu0 0.0
    %3152 = vmatpush2.msra.mxu0 0.0
    %3153 = vmatprep.subr.mxu0 0.0
    %3154 = vmatpush2.msra.mxu0 0.0
    %3155 = vmatprep.subr.mxu0 0.0
    %3156 = vmatpush2.msra.mxu0 0.0
    %3157 = vmatprep.subr.mxu0 0.0
    %3158 = vmatpush2.msra.mxu0 0.0
    %3159 = vmatprep.subr.mxu0 0.0
    %3160 = vmatpush2.msra.mxu0 0.0
    %3161 = vmatprep.subr.mxu0 0.0
    %3162 = vmatpush2.msra.mxu0 0.0
    %3163 = vmatprep.subr.mxu0 0.0
    %3164 = vmatpush2.msra.mxu0 0.0
    %3165 = vmatprep.subr.mxu0 0.0
    %3166 = vmatpush2.msra.mxu0 0.0
    %3167 = vmatprep.subr.mxu0 0.0
    %3168 = vmatpush2.msra.mxu0 0.0
    %3169 = vmatprep.mubr.f32.mxu0 0.0
    %3170 = vmatmul.mubr.f32.gmra.mxu0 %v3104
    %v3171 = vpop.f32.mrf.mxu0
    %v3172 = vadd.f32 0.0, %v3171
    %v3173 = vpop.f32.mrf.mxu0
    %v3174 = vadd.f32 0.0, %v3173
    %3175 = vdwg.mxu0
    %3176 = vmatprep.subr.mxu0 0.0
    %3177 = vmatpush1.msra.mxu0 %v2262
    %3178 = vmatprep.subr.mxu0 0.0
    %3179 = vmatpush1.msra.mxu0 %v2259
    %3180 = vmatprep.subr.mxu0 0.0
    %3181 = vmatpush1.msra.mxu0 %v2256
    %3182 = vmatprep.subr.mxu0 0.0
    %3183 = vmatpush1.msra.mxu0 %v2253
    %3184 = vmatprep.subr.mxu0 0.0
    %3185 = vmatpush1.msra.mxu0 %v2250
    %3186 = vmatprep.subr.mxu0 0.0
    %3187 = vmatpush1.msra.mxu0 %v2247
    %3188 = vmatprep.subr.mxu0 0.0
    %3189 = vmatpush1.msra.mxu0 %v2244
    %3190 = vmatprep.subr.mxu0 0.0
    %3191 = vmatpush1.msra.mxu0 %v2241
    %3192 = vmatprep.subr.mxu0 0.0
    %3193 = vmatpush1.msra.mxu0 %v2238
    %3194 = vmatprep.subr.mxu0 0.0
    %3195 = vmatpush1.msra.mxu0 %v2235
    %3196 = vmatprep.subr.mxu0 0.0
    %3197 = vmatpush1.msra.mxu0 %v2232
    %3198 = vmatprep.subr.mxu0 0.0
    %3199 = vmatpush1.msra.mxu0 %v2229
    %3200 = vmatprep.subr.mxu0 0.0
    %3201 = vmatpush1.msra.mxu0 %v2226
    %3202 = vmatprep.subr.mxu0 0.0
    %3203 = vmatpush1.msra.mxu0 %v2223
    %3204 = vmatprep.subr.mxu0 0.0
    %3205 = vmatpush1.msra.mxu0 %v2220
    %3206 = vmatprep.subr.mxu0 0.0
    %3207 = vmatpush1.msra.mxu0 %v2217
    %3208 = vmatprep.subr.mxu0 0.0
    %3209 = vmatpush2.msra.mxu0 0.0
    %3210 = vmatprep.subr.mxu0 0.0
    %3211 = vmatpush2.msra.mxu0 0.0
    %3212 = vmatprep.subr.mxu0 0.0
    %3213 = vmatpush2.msra.mxu0 0.0
    %3214 = vmatprep.subr.mxu0 0.0
    %3215 = vmatpush2.msra.mxu0 0.0
    %3216 = vmatprep.subr.mxu0 0.0
    %3217 = vmatpush2.msra.mxu0 0.0
    %3218 = vmatprep.subr.mxu0 0.0
    %3219 = vmatpush2.msra.mxu0 0.0
    %3220 = vmatprep.subr.mxu0 0.0
    %3221 = vmatpush2.msra.mxu0 0.0
    %3222 = vmatprep.subr.mxu0 0.0
    %3223 = vmatpush2.msra.mxu0 0.0
    %3224 = vmatprep.subr.mxu0 0.0
    %3225 = vmatpush2.msra.mxu0 0.0
    %3226 = vmatprep.subr.mxu0 0.0
    %3227 = vmatpush2.msra.mxu0 0.0
    %3228 = vmatprep.subr.mxu0 0.0
    %3229 = vmatpush2.msra.mxu0 0.0
    %3230 = vmatprep.subr.mxu0 0.0
    %3231 = vmatpush2.msra.mxu0 0.0
    %3232 = vmatprep.subr.mxu0 0.0
    %3233 = vmatpush2.msra.mxu0 0.0
    %3234 = vmatprep.subr.mxu0 0.0
    %3235 = vmatpush2.msra.mxu0 0.0
    %3236 = vmatprep.subr.mxu0 0.0
    %3237 = vmatpush2.msra.mxu0 0.0
    %3238 = vmatprep.subr.mxu0 0.0
    %3239 = vmatpush2.msra.mxu0 0.0
    %3240 = vmatprep.mubr.f32.mxu0 0.0
    %3241 = vmatmul.mubr.f32.gmra.mxu0 %v3104
    %v3242 = vpop.f32.mrf.mxu0
    %v3243 = vadd.f32 0.0, %v3242
    %v3244 = vpop.f32.mrf.mxu0
    %3245 = vdwg.mxu0
    %v3246 = vadd.f32 %v2204, %v3172
    %v3247 = vxor.u32 %v3246, 2147483648
    %v3248 = vmul.f32 %v3247, 1.442695
    %v3249 = vpow.pop %v3248
    %v3250 = vadd.f32 %v3249, 1.0
    %v3251 = vrcp.pop %v3250
    %v3252 = vmul.f32 1.0, %v3251
    %v3253 = vrot.slane %v2204, 2
    %v3255 = vadd.f32 %v3253, %v3174
    %v3256 = vxor.u32 %v3255, 2147483648
    %v3257 = vmul.f32 %v3256, 1.442695
    %v3258 = vpow.pop %v3257
    %v3259 = vadd.f32 %v3258, 1.0
    %v3260 = vrcp.pop %v3259
    %v3261 = vmul.f32 1.0, %v3260
    %v3262 = vadd.f32 %v3243, %v2268
    %v3263 = vmul.f32 %v3252, %v3262
    %v3264 = vrot.slane %v2204, 4
    %v3266 = vadd.f32 %v3264, %v3263
    %v3267 = vtanh.pop %v3266
    %v3268 = vsub.f32 1.0, %v3261
    %v3269 = vmul.f32 %v3268, %v3267
    %v3270 = vmul.f32 %v3261, %v3104
    %v3271 = vadd.f32 %v3269, %v3270
    %3272 = vmatprep.subr.mxu0 %v2261
    %3273 = vmatpush1.msra.mxu0 %v2260
    %3274 = vmatprep.subr.mxu0 %v2258
    %3275 = vmatpush1.msra.mxu0 %v2257
    %3276 = vmatprep.subr.mxu0 %v2255
    %3277 = vmatpush1.msra.mxu0 %v2254
    %3278 = vmatprep.subr.mxu0 %v2252
    %3279 = vmatpush1.msra.mxu0 %v2251
    %3280 = vmatprep.subr.mxu0 %v2249
    %3281 = vmatpush1.msra.mxu0 %v2248
    %3282 = vmatprep.subr.mxu0 %v2246
    %3283 = vmatpush1.msra.mxu0 %v2245
    %3284 = vmatprep.subr.mxu0 %v2243
    %3285 = vmatpush1.msra.mxu0 %v2242
    %3286 = vmatprep.subr.mxu0 %v2240
    %3287 = vmatpush1.msra.mxu0 %v2239
    %3288 = vmatprep.subr.mxu0 %v2237
    %3289 = vmatpush1.msra.mxu0 %v2236
    %3290 = vmatprep.subr.mxu0 %v2234
    %3291 = vmatpush1.msra.mxu0 %v2233
    %3292 = vmatprep.subr.mxu0 %v2231
    %3293 = vmatpush1.msra.mxu0 %v2230
    %3294 = vmatprep.subr.mxu0 %v2228
    %3295 = vmatpush1.msra.mxu0 %v2227
    %3296 = vmatprep.subr.mxu0 %v2225
    %3297 = vmatpush1.msra.mxu0 %v2224
    %3298 = vmatprep.subr.mxu0 %v2222
    %3299 = vmatpush1.msra.mxu0 %v2221
    %3300 = vmatprep.subr.mxu0 %v2219
    %3301 = vmatpush1.msra.mxu0 %v2218
    %3302 = vmatprep.subr.mxu0 %v2216
    %3303 = vmatpush1.msra.mxu0 %v2215
    %3304 = vmatprep.subr.mxu0 0.0
    %3305 = vmatpush2.msra.mxu0 0.0
    %3306 = vmatprep.subr.mxu0 0.0
    %3307 = vmatpush2.msra.mxu0 0.0
    %3308 = vmatprep.subr.mxu0 0.0
    %3309 = vmatpush2.msra.mxu0 0.0
    %3310 = vmatprep.subr.mxu0 0.0
    %3311 = vmatpush2.msra.mxu0 0.0
    %3312 = vmatprep.subr.mxu0 0.0
    %3313 = vmatpush2.msra.mxu0 0.0
    %3314 = vmatprep.subr.mxu0 0.0
    %3315 = vmatpush2.msra.mxu0 0.0
    %3316 = vmatprep.subr.mxu0 0.0
    %3317 = vmatpush2.msra.mxu0 0.0
    %3318 = vmatprep.subr.mxu0 0.0
    %3319 = vmatpush2.msra.mxu0 0.0
    %3320 = vmatprep.subr.mxu0 0.0
    %3321 = vmatpush2.msra.mxu0 0.0
    %3322 = vmatprep.subr.mxu0 0.0
    %3323 = vmatpush2.msra.mxu0 0.0
    %3324 = vmatprep.subr.mxu0 0.0
    %3325 = vmatpush2.msra.mxu0 0.0
    %3326 = vmatprep.subr.mxu0 0.0
    %3327 = vmatpush2.msra.mxu0 0.0
    %3328 = vmatprep.subr.mxu0 0.0
    %3329 = vmatpush2.msra.mxu0 0.0
    %3330 = vmatprep.subr.mxu0 0.0
    %3331 = vmatpush2.msra.mxu0 0.0
    %3332 = vmatprep.subr.mxu0 0.0
    %3333 = vmatpush2.msra.mxu0 0.0
    %3334 = vmatprep.subr.mxu0 0.0
    %3335 = vmatpush2.msra.mxu0 0.0
    %3336 = vmatprep.mubr.f32.mxu0 0.0
    %3337 = vmatmul.mubr.f32.gmra.mxu0 %v3271
    %v3338 = vpop.f32.mrf.mxu0
    %v3339 = vadd.f32 0.0, %v3338
    %v3340 = vpop.f32.mrf.mxu0
    %v3341 = vadd.f32 0.0, %v3340
    %3342 = vdwg.mxu0
    %3343 = vmatprep.subr.mxu0 0.0
    %3344 = vmatpush1.msra.mxu0 %v2262
    %3345 = vmatprep.subr.mxu0 0.0
    %3346 = vmatpush1.msra.mxu0 %v2259
    %3347 = vmatprep.subr.mxu0 0.0
    %3348 = vmatpush1.msra.mxu0 %v2256
    %3349 = vmatprep.subr.mxu0 0.0
    %3350 = vmatpush1.msra.mxu0 %v2253
    %3351 = vmatprep.subr.mxu0 0.0
    %3352 = vmatpush1.msra.mxu0 %v2250
    %3353 = vmatprep.subr.mxu0 0.0
    %3354 = vmatpush1.msra.mxu0 %v2247
    %3355 = vmatprep.subr.mxu0 0.0
    %3356 = vmatpush1.msra.mxu0 %v2244
    %3357 = vmatprep.subr.mxu0 0.0
    %3358 = vmatpush1.msra.mxu0 %v2241
    %3359 = vmatprep.subr.mxu0 0.0
    %3360 = vmatpush1.msra.mxu0 %v2238
    %3361 = vmatprep.subr.mxu0 0.0
    %3362 = vmatpush1.msra.mxu0 %v2235
    %3363 = vmatprep.subr.mxu0 0.0
    %3364 = vmatpush1.msra.mxu0 %v2232
    %3365 = vmatprep.subr.mxu0 0.0
    %3366 = vmatpush1.msra.mxu0 %v2229
    %3367 = vmatprep.subr.mxu0 0.0
    %3368 = vmatpush1.msra.mxu0 %v2226
    %3369 = vmatprep.subr.mxu0 0.0
    %3370 = vmatpush1.msra.mxu0 %v2223
    %3371 = vmatprep.subr.mxu0 0.0
    %3372 = vmatpush1.msra.mxu0 %v2220
    %3373 = vmatprep.subr.mxu0 0.0
    %3374 = vmatpush1.msra.mxu0 %v2217
    %3375 = vmatprep.subr.mxu0 0.0
    %3376 = vmatpush2.msra.mxu0 0.0
    %3377 = vmatprep.subr.mxu0 0.0
    %3378 = vmatpush2.msra.mxu0 0.0
    %3379 = vmatprep.subr.mxu0 0.0
    %3380 = vmatpush2.msra.mxu0 0.0
    %3381 = vmatprep.subr.mxu0 0.0
    %3382 = vmatpush2.msra.mxu0 0.0
    %3383 = vmatprep.subr.mxu0 0.0
    %3384 = vmatpush2.msra.mxu0 0.0
    %3385 = vmatprep.subr.mxu0 0.0
    %3386 = vmatpush2.msra.mxu0 0.0
    %3387 = vmatprep.subr.mxu0 0.0
    %3388 = vmatpush2.msra.mxu0 0.0
    %3389 = vmatprep.subr.mxu0 0.0
    %3390 = vmatpush2.msra.mxu0 0.0
    %3391 = vmatprep.subr.mxu0 0.0
    %3392 = vmatpush2.msra.mxu0 0.0
    %3393 = vmatprep.subr.mxu0 0.0
    %3394 = vmatpush2.msra.mxu0 0.0
    %3395 = vmatprep.subr.mxu0 0.0
    %3396 = vmatpush2.msra.mxu0 0.0
    %3397 = vmatprep.subr.mxu0 0.0
    %3398 = vmatpush2.msra.mxu0 0.0
    %3399 = vmatprep.subr.mxu0 0.0
    %3400 = vmatpush2.msra.mxu0 0.0
    %3401 = vmatprep.subr.mxu0 0.0
    %3402 = vmatpush2.msra.mxu0 0.0
    %3403 = vmatprep.subr.mxu0 0.0
    %3404 = vmatpush2.msra.mxu0 0.0
    %3405 = vmatprep.subr.mxu0 0.0
    %3406 = vmatpush2.msra.mxu0 0.0
    %3407 = vmatprep.mubr.f32.mxu0 0.0
    %3408 = vmatmul.mubr.f32.gmra.mxu0 %v3271
    %v3409 = vpop.f32.mrf.mxu0
    %v3410 = vadd.f32 0.0, %v3409
    %v3411 = vpop.f32.mrf.mxu0
    %3412 = vdwg.mxu0
    %v3413 = vadd.f32 %v2205, %v3339
    %v3414 = vxor.u32 %v3413, 2147483648
    %v3415 = vmul.f32 %v3414, 1.442695
    %v3416 = vpow.pop %v3415
    %v3417 = vadd.f32 %v3416, 1.0
    %v3418 = vrcp.pop %v3417
    %v3419 = vmul.f32 1.0, %v3418
    %v3420 = vrot.slane %v2205, 2
    %v3422 = vadd.f32 %v3420, %v3341
    %v3423 = vxor.u32 %v3422, 2147483648
    %v3424 = vmul.f32 %v3423, 1.442695
    %v3425 = vpow.pop %v3424
    %v3426 = vadd.f32 %v3425, 1.0
    %v3427 = vrcp.pop %v3426
    %v3428 = vmul.f32 1.0, %v3427
    %v3429 = vadd.f32 %v3410, %v2268
    %v3430 = vmul.f32 %v3419, %v3429
    %v3431 = vrot.slane %v2205, 4
    %v3433 = vadd.f32 %v3431, %v3430
    %v3434 = vtanh.pop %v3433
    %v3435 = vsub.f32 1.0, %v3428
    %v3436 = vmul.f32 %v3435, %v3434
    %v3437 = vmul.f32 %v3428, %v3271
    %v3438 = vadd.f32 %v3436, %v3437
    %3439 = vmatprep.subr.mxu0 %v2261
    %3440 = vmatpush1.msra.mxu0 %v2260
    %3441 = vmatprep.subr.mxu0 %v2258
    %3442 = vmatpush1.msra.mxu0 %v2257
    %3443 = vmatprep.subr.mxu0 %v2255
    %3444 = vmatpush1.msra.mxu0 %v2254
    %3445 = vmatprep.subr.mxu0 %v2252
    %3446 = vmatpush1.msra.mxu0 %v2251
    %3447 = vmatprep.subr.mxu0 %v2249
    %3448 = vmatpush1.msra.mxu0 %v2248
    %3449 = vmatprep.subr.mxu0 %v2246
    %3450 = vmatpush1.msra.mxu0 %v2245
    %3451 = vmatprep.subr.mxu0 %v2243
    %3452 = vmatpush1.msra.mxu0 %v2242
    %3453 = vmatprep.subr.mxu0 %v2240
    %3454 = vmatpush1.msra.mxu0 %v2239
    %3455 = vmatprep.subr.mxu0 %v2237
    %3456 = vmatpush1.msra.mxu0 %v2236
    %3457 = vmatprep.subr.mxu0 %v2234
    %3458 = vmatpush1.msra.mxu0 %v2233
    %3459 = vmatprep.subr.mxu0 %v2231
    %3460 = vmatpush1.msra.mxu0 %v2230
    %3461 = vmatprep.subr.mxu0 %v2228
    %3462 = vmatpush1.msra.mxu0 %v2227
    %3463 = vmatprep.subr.mxu0 %v2225
    %3464 = vmatpush1.msra.mxu0 %v2224
    %3465 = vmatprep.subr.mxu0 %v2222
    %3466 = vmatpush1.msra.mxu0 %v2221
    %3467 = vmatprep.subr.mxu0 %v2219
    %3468 = vmatpush1.msra.mxu0 %v2218
    %3469 = vmatprep.subr.mxu0 %v2216
    %3470 = vmatpush1.msra.mxu0 %v2215
    %3471 = vmatprep.subr.mxu0 0.0
    %3472 = vmatpush2.msra.mxu0 0.0
    %3473 = vmatprep.subr.mxu0 0.0
    %3474 = vmatpush2.msra.mxu0 0.0
    %3475 = vmatprep.subr.mxu0 0.0
    %3476 = vmatpush2.msra.mxu0 0.0
    %3477 = vmatprep.subr.mxu0 0.0
    %3478 = vmatpush2.msra.mxu0 0.0
    %3479 = vmatprep.subr.mxu0 0.0
    %3480 = vmatpush2.msra.mxu0 0.0
    %3481 = vmatprep.subr.mxu0 0.0
    %3482 = vmatpush2.msra.mxu0 0.0
    %3483 = vmatprep.subr.mxu0 0.0
    %3484 = vmatpush2.msra.mxu0 0.0
    %3485 = vmatprep.subr.mxu0 0.0
    %3486 = vmatpush2.msra.mxu0 0.0
    %3487 = vmatprep.subr.mxu0 0.0
    %3488 = vmatpush2.msra.mxu0 0.0
    %3489 = vmatprep.subr.mxu0 0.0
    %3490 = vmatpush2.msra.mxu0 0.0
    %3491 = vmatprep.subr.mxu0 0.0
    %3492 = vmatpush2.msra.mxu0 0.0
    %3493 = vmatprep.subr.mxu0 0.0
    %3494 = vmatpush2.msra.mxu0 0.0
    %3495 = vmatprep.subr.mxu0 0.0
    %3496 = vmatpush2.msra.mxu0 0.0
    %3497 = vmatprep.subr.mxu0 0.0
    %3498 = vmatpush2.msra.mxu0 0.0
    %3499 = vmatprep.subr.mxu0 0.0
    %3500 = vmatpush2.msra.mxu0 0.0
    %3501 = vmatprep.subr.mxu0 0.0
    %3502 = vmatpush2.msra.mxu0 0.0
    %3503 = vmatprep.mubr.f32.mxu0 0.0
    %3504 = vmatmul.mubr.f32.gmra.mxu0 %v3438
    %v3505 = vpop.f32.mrf.mxu0
    %v3506 = vadd.f32 0.0, %v3505
    %v3507 = vpop.f32.mrf.mxu0
    %v3508 = vadd.f32 0.0, %v3507
    %3509 = vdwg.mxu0
    %3510 = vmatprep.subr.mxu0 0.0
    %3511 = vmatpush1.msra.mxu0 %v2262
    %3512 = vmatprep.subr.mxu0 0.0
    %3513 = vmatpush1.msra.mxu0 %v2259
    %3514 = vmatprep.subr.mxu0 0.0
    %3515 = vmatpush1.msra.mxu0 %v2256
    %3516 = vmatprep.subr.mxu0 0.0
    %3517 = vmatpush1.msra.mxu0 %v2253
    %3518 = vmatprep.subr.mxu0 0.0
    %3519 = vmatpush1.msra.mxu0 %v2250
    %3520 = vmatprep.subr.mxu0 0.0
    %3521 = vmatpush1.msra.mxu0 %v2247
    %3522 = vmatprep.subr.mxu0 0.0
    %3523 = vmatpush1.msra.mxu0 %v2244
    %3524 = vmatprep.subr.mxu0 0.0
    %3525 = vmatpush1.msra.mxu0 %v2241
    %3526 = vmatprep.subr.mxu0 0.0
    %3527 = vmatpush1.msra.mxu0 %v2238
    %3528 = vmatprep.subr.mxu0 0.0
    %3529 = vmatpush1.msra.mxu0 %v2235
    %3530 = vmatprep.subr.mxu0 0.0
    %3531 = vmatpush1.msra.mxu0 %v2232
    %3532 = vmatprep.subr.mxu0 0.0
    %3533 = vmatpush1.msra.mxu0 %v2229
    %3534 = vmatprep.subr.mxu0 0.0
    %3535 = vmatpush1.msra.mxu0 %v2226
    %3536 = vmatprep.subr.mxu0 0.0
    %3537 = vmatpush1.msra.mxu0 %v2223
    %3538 = vmatprep.subr.mxu0 0.0
    %3539 = vmatpush1.msra.mxu0 %v2220
    %3540 = vmatprep.subr.mxu0 0.0
    %3541 = vmatpush1.msra.mxu0 %v2217
    %3542 = vmatprep.subr.mxu0 0.0
    %3543 = vmatpush2.msra.mxu0 0.0
    %3544 = vmatprep.subr.mxu0 0.0
    %3545 = vmatpush2.msra.mxu0 0.0
    %3546 = vmatprep.subr.mxu0 0.0
    %3547 = vmatpush2.msra.mxu0 0.0
    %3548 = vmatprep.subr.mxu0 0.0
    %3549 = vmatpush2.msra.mxu0 0.0
    %3550 = vmatprep.subr.mxu0 0.0
    %3551 = vmatpush2.msra.mxu0 0.0
    %3552 = vmatprep.subr.mxu0 0.0
    %3553 = vmatpush2.msra.mxu0 0.0
    %3554 = vmatprep.subr.mxu0 0.0
    %3555 = vmatpush2.msra.mxu0 0.0
    %3556 = vmatprep.subr.mxu0 0.0
    %3557 = vmatpush2.msra.mxu0 0.0
    %3558 = vmatprep.subr.mxu0 0.0
    %3559 = vmatpush2.msra.mxu0 0.0
    %3560 = vmatprep.subr.mxu0 0.0
    %3561 = vmatpush2.msra.mxu0 0.0
    %3562 = vmatprep.subr.mxu0 0.0
    %3563 = vmatpush2.msra.mxu0 0.0
    %3564 = vmatprep.subr.mxu0 0.0
    %3565 = vmatpush2.msra.mxu0 0.0
    %3566 = vmatprep.subr.mxu0 0.0
    %3567 = vmatpush2.msra.mxu0 0.0
    %3568 = vmatprep.subr.mxu0 0.0
    %3569 = vmatpush2.msra.mxu0 0.0
    %3570 = vmatprep.subr.mxu0 0.0
    %3571 = vmatpush2.msra.mxu0 0.0
    %3572 = vmatprep.subr.mxu0 0.0
    %3573 = vmatpush2.msra.mxu0 0.0
    %3574 = vmatprep.mubr.f32.mxu0 0.0
    %3575 = vmatmul.mubr.f32.gmra.mxu0 %v3438
    %v3576 = vpop.f32.mrf.mxu0
    %v3577 = vadd.f32 0.0, %v3576
    %v3578 = vpop.f32.mrf.mxu0
    %3579 = vdwg.mxu0
    %v3580 = vadd.f32 %v2206, %v3506
    %v3581 = vxor.u32 %v3580, 2147483648
    %v3582 = vmul.f32 %v3581, 1.442695
    %v3583 = vpow.pop %v3582
    %v3584 = vadd.f32 %v3583, 1.0
    %v3585 = vrcp.pop %v3584
    %v3586 = vmul.f32 1.0, %v3585
    %v3587 = vrot.slane %v2206, 2
    %v3589 = vadd.f32 %v3587, %v3508
    %v3590 = vxor.u32 %v3589, 2147483648
    %v3591 = vmul.f32 %v3590, 1.442695
    %v3592 = vpow.pop %v3591
    %v3593 = vadd.f32 %v3592, 1.0
    %v3594 = vrcp.pop %v3593
    %v3595 = vmul.f32 1.0, %v3594
    %v3596 = vadd.f32 %v3577, %v2268
    %v3597 = vmul.f32 %v3586, %v3596
    %v3598 = vrot.slane %v2206, 4
    %v3600 = vadd.f32 %v3598, %v3597
    %v3601 = vtanh.pop %v3600
    %v3602 = vsub.f32 1.0, %v3595
    %v3603 = vmul.f32 %v3602, %v3601
    %v3604 = vmul.f32 %v3595, %v3438
    %v3605 = vadd.f32 %v3603, %v3604
    %v3606 = vld [vmem:[%s10] sm:$0xff]
    %v3607 = vld [vmem:[%s10 + $0x8] sm:$0xff]
    %v3608 = vld [vmem:[%s10 + $0x10] sm:$0xff]
    %v3609 = vld [vmem:[%s10 + $0x18] sm:$0xff]
    %v3610 = vld [vmem:[%s10 + $0x20] sm:$0xff]
    %v3611 = vld [vmem:[%s10 + $0x28] sm:$0xff]
    %v3612 = vld [vmem:[%s10 + $0x30] sm:$0xff]
    %v3613 = vld [vmem:[%s10 + $0x38] sm:$0xff]
    %v3614 = vld [vmem:[%s10 + $0x40] sm:$0xff]
    %v3615 = vld [vmem:[%s10 + $0x48] sm:$0xff]
    %v3616 = vld [vmem:[%s10 + $0x50] sm:$0xff]
    %v3617 = vld [vmem:[%s10 + $0x58] sm:$0xff]
    %v3618 = vld [vmem:[%s10 + $0x60] sm:$0xff]
    %v3619 = vld [vmem:[%s10 + $0x68] sm:$0xff]
    %v3620 = vld [vmem:[%s10 + $0x70] sm:$0xff]
    %v3621 = vld [vmem:[%s10 + $0x78] sm:$0xff]
    %v3622 = vld [vmem:[%s11] sm:$0x1]
    %v3624 = vlaneseq
    %v3625 = vshrl.u32 %v3624, 7
    %v3626 = vsub.s32 0, %v3625
    %v3627 = vrot.slane %v3622, %v3626
    %3629 = vmatprep.subr.mxu0 0.0
    %3630 = vmatpush1.msra.mxu0 %v3621
    %3631 = vmatprep.subr.mxu0 0.0
    %3632 = vmatpush1.msra.mxu0 %v3620
    %3633 = vmatprep.subr.mxu0 0.0
    %3634 = vmatpush1.msra.mxu0 %v3619
    %3635 = vmatprep.subr.mxu0 0.0
    %3636 = vmatpush1.msra.mxu0 %v3618
    %3637 = vmatprep.subr.mxu0 0.0
    %3638 = vmatpush1.msra.mxu0 %v3617
    %3639 = vmatprep.subr.mxu0 0.0
    %3640 = vmatpush1.msra.mxu0 %v3616
    %3641 = vmatprep.subr.mxu0 0.0
    %3642 = vmatpush1.msra.mxu0 %v3615
    %3643 = vmatprep.subr.mxu0 0.0
    %3644 = vmatpush1.msra.mxu0 %v3614
    %3645 = vmatprep.subr.mxu0 0.0
    %3646 = vmatpush1.msra.mxu0 %v3613
    %3647 = vmatprep.subr.mxu0 0.0
    %3648 = vmatpush1.msra.mxu0 %v3612
    %3649 = vmatprep.subr.mxu0 0.0
    %3650 = vmatpush1.msra.mxu0 %v3611
    %3651 = vmatprep.subr.mxu0 0.0
    %3652 = vmatpush1.msra.mxu0 %v3610
    %3653 = vmatprep.subr.mxu0 0.0
    %3654 = vmatpush1.msra.mxu0 %v3609
    %3655 = vmatprep.subr.mxu0 0.0
    %3656 = vmatpush1.msra.mxu0 %v3608
    %3657 = vmatprep.subr.mxu0 0.0
    %3658 = vmatpush1.msra.mxu0 %v3607
    %3659 = vmatprep.subr.mxu0 0.0
    %3660 = vmatpush1.msra.mxu0 %v3606
    %3661 = vmatprep.subr.mxu0 0.0
    %3662 = vmatpush2.msra.mxu0 0.0
    %3663 = vmatprep.subr.mxu0 0.0
    %3664 = vmatpush2.msra.mxu0 0.0
    %3665 = vmatprep.subr.mxu0 0.0
    %3666 = vmatpush2.msra.mxu0 0.0
    %3667 = vmatprep.subr.mxu0 0.0
    %3668 = vmatpush2.msra.mxu0 0.0
    %3669 = vmatprep.subr.mxu0 0.0
    %3670 = vmatpush2.msra.mxu0 0.0
    %3671 = vmatprep.subr.mxu0 0.0
    %3672 = vmatpush2.msra.mxu0 0.0
    %3673 = vmatprep.subr.mxu0 0.0
    %3674 = vmatpush2.msra.mxu0 0.0
    %3675 = vmatprep.subr.mxu0 0.0
    %3676 = vmatpush2.msra.mxu0 0.0
    %3677 = vmatprep.subr.mxu0 0.0
    %3678 = vmatpush2.msra.mxu0 0.0
    %3679 = vmatprep.subr.mxu0 0.0
    %3680 = vmatpush2.msra.mxu0 0.0
    %3681 = vmatprep.subr.mxu0 0.0
    %3682 = vmatpush2.msra.mxu0 0.0
    %3683 = vmatprep.subr.mxu0 0.0
    %3684 = vmatpush2.msra.mxu0 0.0
    %3685 = vmatprep.subr.mxu0 0.0
    %3686 = vmatpush2.msra.mxu0 0.0
    %3687 = vmatprep.subr.mxu0 0.0
    %3688 = vmatpush2.msra.mxu0 0.0
    %3689 = vmatprep.subr.mxu0 0.0
    %3690 = vmatpush2.msra.mxu0 0.0
    %3691 = vmatprep.subr.mxu0 0.0
    %3692 = vmatpush2.msra.mxu0 0.0
    %3693 = vmatprep.mubr.f32.mxu0 0.0
    %3694 = vmatmul.mubr.f32.gmra.mxu0 %v3605
    %v3695 = vpop.f32.mrf.mxu0
    %v3696 = vadd.f32 %v3627, %v3695
    %v3697 = vpop.f32.mrf.mxu0
    %3698 = vdwg.mxu0
    %vm3699 = vcmask 9216
    %3700 = vst.msk [vmem:[#allocation10] sm:$0x3] %vm3699, %v3696
    // Predicated region
    $region66: #{gru_forward.1} parent=1 // pred_check
      _
    $region67: #{gru_forward.1} parent=1 // pred_check_branch
      %3702 = sbr.rel (0) target = $region69
    $region68: #{gru_forward.1} parent=1 // pred_region
      %s3704 = ssub.s32 32, 32
      %3705 = vsyncadd [#allocation4], %s3704
      %s3707 = sshll.u32 [#allocation10], 4
      %s3708 = int_to_ptr.vmem [resolvable:$true] %s3707
      %3710 = dma.vmem_to_hbm [thread:$0]  %s3708, 32, %s12, [#allocation4]
    $region69: #{gru_forward.1} parent=1 // pred_fallthru
      _
    // Predicated region
    $region70: #{gru_forward.1} parent=1 // pred_check
      _
    $region71: #{gru_forward.1} parent=1 // pred_check_branch
      %3712 = sbr.rel (0) target = $region73
    $region72: #{gru_forward.1} parent=1 // pred_region
      %3713 = dma.done [#allocation4], 32
    $region73: #{gru_forward.1} parent=1 // pred_fallthru
      _
    %3714 = vsyncpa [#allocation3], 1
    %3715 = vsyncpa [#allocation8], 1
    %3716 = vsyncpa [#allocation4], 1
    %3717 = vsyncpa [#allocation5], 1

</llo_original>
